<compile_context>
chip_gen: v7x
topology: tpu7x:2x2x1
jax: 0.10.0
libtpu: 0.0.40
codegen_flags: <defaults>
</compile_context>

<pallas_src>
import functools
import math

import numpy as np

import jax
import jax.numpy as jnp
from jax import lax
from jax.experimental import pallas as pl
from jax.experimental.pallas import tpu as pltpu


def _round_up(x, m):
    return (x + m - 1) // m * m


def _nbytes(shape, dtype):
    return math.prod(shape) * np.dtype(dtype).itemsize


# -----------------------------------------------------------------------------
# Fused kernel: all LSTM layers + dense projection in one pallas_call.
# -----------------------------------------------------------------------------
def make_fused_rnn_kernel(num_layers, S, Bp, Hp):
    """Build the fused kernel body.

    Ref order:
      inputs : x (S,Bp,Ep) bf16, h0 (L,Bp,Hp) f32, c0 (L,Bp,Hp) f32,
               [w_ih_t (in_p,4Hp) bf16, w_hh_t (Hp,4Hp) bf16, bias (1,4Hp) f32] * L,
               dense_w_t (Hp,Vp) bf16, dense_b (1,Vp) f32
      outputs: logits (S,Bp,Vp) f32, hN (L,Bp,Hp) f32, cN (L,Bp,Hp) f32
      scratch: y_scr  (S,Bp,Hp)  bf16 -- inter-layer activations (VMEM resident)
               gx_scr (S,Bp,4Hp) f32  -- hoisted input-projection gates
    """

    def kernel(*refs):
        it = iter(refs)
        x_ref, h0_ref, c0_ref = next(it), next(it), next(it)
        layer_w = [(next(it), next(it), next(it)) for _ in range(num_layers)]
        wd_ref, bd_ref = next(it), next(it)
        logits_ref, hN_ref, cN_ref = next(it), next(it), next(it)
        y_scr, gx_scr = next(it), next(it)

        for layer, (w_ih_ref, w_hh_ref, b_ref) in enumerate(layer_w):
            # ---- Phase 1 (hoisted out of the recurrence): input projection
            # for the whole sequence as one big bf16 MXU matmul, f32 accum.
            #   gx = X @ W_ih^T + (b_ih + b_hh)
            seq_in = x_ref[...] if layer == 0 else y_scr[...]     # bf16
            in_dim = seq_in.shape[-1]
            gx = jnp.dot(seq_in.reshape(S * Bp, in_dim), w_ih_ref[...],
                         preferred_element_type=jnp.float32) + b_ref[...]
            gx_scr[...] = gx.reshape(S, Bp, 4 * Hp)

            # ---- Phase 2: serial time recurrence. Only h_prev @ W_hh plus
            # VPU/EUP gate math is on the critical path; W_hh stays resident
            # in VMEM across all timesteps; h/c carried as f32 fori_loop
            # values (vregs). Fully unrolled so the LLO scheduler can
            # software-pipeline consecutive timesteps.
            w_hh = w_hh_ref[...]                       # bf16 (Hp, 4Hp)

            def step(t, carry):
                h_prev, c_prev = carry                 # f32
                gates = gx_scr[t] + jnp.dot(
                    h_prev.astype(w_hh.dtype), w_hh,
                    preferred_element_type=jnp.float32)
                # Gate layout [i|f|g|o]; each block is Hp wide -> every slice
                # is 128-lane aligned (no masked/partial-lane work).
                i_g = jax.nn.sigmoid(gates[:, 0 * Hp:1 * Hp])
                f_g = jax.nn.sigmoid(gates[:, 1 * Hp:2 * Hp])
                g_g = jnp.tanh(gates[:, 2 * Hp:3 * Hp])
                o_g = jax.nn.sigmoid(gates[:, 3 * Hp:4 * Hp])
                c_new = f_g * c_prev + i_g * g_g       # f32 elementwise (v5e-safe)
                h_new = o_g * jnp.tanh(c_new)
                y_scr[t] = h_new.astype(y_scr.dtype)   # bf16 activation
                return h_new, c_new

            h_fin, c_fin = lax.fori_loop(
                0, S, step, (h0_ref[layer], c0_ref[layer]), unroll=True)
            hN_ref[layer] = h_fin
            cN_ref[layer] = c_fin

        # ---- Dense projection: one matmul over the full final-layer sequence
        # (lane-dense output: Vp is a multiple of 128).
        y = y_scr[...].reshape(S * Bp, Hp)             # bf16
        logits = jnp.dot(y, wd_ref[...],
                         preferred_element_type=jnp.float32) + bd_ref[...]
        logits_ref[...] = logits.reshape(S, Bp, logits_ref.shape[-1])

    return kernel


# -----------------------------------------------------------------------------
# Padding helpers (gate-aware: keeps the [i|f|g|o] blocks 128-lane aligned).
# -----------------------------------------------------------------------------
def _pad_gate_matrix(w_t, in_pad, H, Hp, dtype):
    """(in, 4H) with columns grouped [i|f|g|o] -> (in_pad, 4*Hp), cast."""
    in_dim = w_t.shape[0]
    w4 = w_t.reshape(in_dim, 4, H)
    w4 = jnp.pad(w4, ((0, in_pad - in_dim), (0, 0), (0, Hp - H)))
    return w4.reshape(in_pad, 4 * Hp).astype(dtype)


def _pad_gate_bias(b, H, Hp):
    b4 = b.reshape(4, H)
    b4 = jnp.pad(b4, ((0, 0), (0, Hp - H)))
    return b4.reshape(1, 4 * Hp)


def fused_rnn_apply(embed, h0, c0, lstm_params, dense_w_t, dense_b,
                    *, matmul_dtype=jnp.bfloat16):
    """embed: (S,B,E) f32; h0/c0: (L,B,H); returns (logits (S,B,V), hN, cN)."""
    S, B, E = embed.shape
    L, _, H = h0.shape
    V = dense_w_t.shape[-1]

    Bp = _round_up(B, 8)       # sublane alignment
    Ep = _round_up(E, 128)     # lane alignment
    Hp = _round_up(H, 128)
    Vp = _round_up(V, 128)

    x_p = jnp.pad(embed, ((0, 0), (0, Bp - B), (0, Ep - E))).astype(matmul_dtype)
    h0_p = jnp.pad(h0, ((0, 0), (0, Bp - B), (0, Hp - H)))
    c0_p = jnp.pad(c0, ((0, 0), (0, Bp - B), (0, Hp - H)))

    args = [x_p, h0_p, c0_p]
    for layer, p in enumerate(lstm_params):
        in_pad = Ep if layer == 0 else Hp
        args.append(_pad_gate_matrix(p["w_ih_t"], in_pad, H, Hp, matmul_dtype))
        args.append(_pad_gate_matrix(p["w_hh_t"], Hp, H, Hp, matmul_dtype))
        args.append(_pad_gate_bias(p["bias"], H, Hp))
    args.append(jnp.pad(dense_w_t, ((0, Hp - H), (0, Vp - V))).astype(matmul_dtype))
    args.append(jnp.pad(dense_b, ((0, 0), (0, Vp - V))))

    out_shapes = (jax.ShapeDtypeStruct((S, Bp, Vp), jnp.float32),
                  jax.ShapeDtypeStruct((L, Bp, Hp), jnp.float32),
                  jax.ShapeDtypeStruct((L, Bp, Hp), jnp.float32))
    scratch_shapes = [pltpu.VMEM((S, Bp, Hp), matmul_dtype),       # y_scr
                      pltpu.VMEM((S, Bp, 4 * Hp), jnp.float32)]    # gx_scr

    # --- VMEM footprint (everything is resident; no grid => no double buffer)
    footprint = sum(_nbytes(a.shape, a.dtype) for a in args)
    footprint += sum(_nbytes(o.shape, o.dtype) for o in out_shapes)
    footprint += _nbytes((S, Bp, Hp), matmul_dtype)
    footprint += _nbytes((S, Bp, 4 * Hp), jnp.float32)
    vmem_limit = int(min(96 * 2 ** 20, max(2 * footprint, 32 * 2 ** 20)))

    # --- Cost estimate (MXU flops dominate; EUP sigmoid/tanh counted too).
    flops = 0
    for layer in range(L):
        in_dim = Ep if layer == 0 else Hp
        flops += 2 * S * Bp * in_dim * 4 * Hp   # hoisted input projection
        flops += 2 * S * Bp * Hp * 4 * Hp       # recurrence h @ W_hh
    flops += 2 * S * Bp * Hp * Vp               # dense projection
    transcendentals = L * S * Bp * 5 * Hp       # 3 sigmoid + 2 tanh per elem

    vmem = pl.BlockSpec(memory_space=pltpu.MemorySpace.VMEM)
    kernel = make_fused_rnn_kernel(L, S, Bp, Hp)

    logits_p, hN_p, cN_p = pl.pallas_call(
        kernel,
        out_shape=out_shapes,
        in_specs=[vmem] * len(args),
        out_specs=(vmem, vmem, vmem),
        scratch_shapes=scratch_shapes,
        # h0 -> hN, c0 -> cN share HBM (state is read before overwritten).
        input_output_aliases={1: 1, 2: 2},
        compiler_params=pltpu.CompilerParams(vmem_limit_bytes=vmem_limit),
        cost_estimate=pl.CostEstimate(flops=int(flops),
                                      transcendentals=int(transcendentals),
                                      bytes_accessed=int(footprint)),
    )(*args)

    return logits_p[:, :B, :V], hN_p[:, :B, :H], cN_p[:, :B, :H]


# -----------------------------------------------------------------------------
# Parameter init (GloVe table replaced by a random table of the same shape).
# -----------------------------------------------------------------------------
def init_params(key, vocab_size, embedding_size, lstm_size, num_layers):
    keys = jax.random.split(key, 4 + 4 * num_layers)
    k = iter(keys)
    params = {}
    emb = jax.random.normal(next(k), (vocab_size, embedding_size),
                            dtype=jnp.float32) * 0.1
    params["embedding1"] = emb          # frozen copy (epoch < 3)
    params["embedding2"] = emb          # fine-tuned copy (epoch >= 3)

    params["lstm"] = []
    scale = 1.0 / jnp.sqrt(jnp.float32(lstm_size))
    for layer in range(num_layers):
        in_size = embedding_size if layer == 0 else lstm_size
        w_ih = jax.random.uniform(next(k), (4 * lstm_size, in_size),
                                  minval=-scale, maxval=scale,
                                  dtype=jnp.float32)
        w_hh = jax.random.uniform(next(k), (4 * lstm_size, lstm_size),
                                  minval=-scale, maxval=scale,
                                  dtype=jnp.float32)
        b_ih = jax.random.uniform(next(k), (4 * lstm_size,),
                                  minval=-scale, maxval=scale,
                                  dtype=jnp.float32)
        b_hh = jax.random.uniform(next(k), (4 * lstm_size,),
                                  minval=-scale, maxval=scale,
                                  dtype=jnp.float32)
        params["lstm"].append({
            "w_ih_t": w_ih.T,                              # (in, 4H)
            "w_hh_t": w_hh.T,                              # (H, 4H)
            "bias": (b_ih + b_hh).reshape(1, 4 * lstm_size),
        })

    dscale = 1.0 / jnp.sqrt(jnp.float32(lstm_size))
    w_dense = jax.random.uniform(next(k), (vocab_size, lstm_size),
                                 minval=-dscale, maxval=dscale,
                                 dtype=jnp.float32)
    b_dense = jax.random.uniform(next(k), (vocab_size,),
                                 minval=-dscale, maxval=dscale,
                                 dtype=jnp.float32)
    params["dense_w_t"] = w_dense.T                        # (H, V)
    params["dense_b"] = b_dense.reshape(1, vocab_size)
    return params


# -----------------------------------------------------------------------------
# RNNModule forward (Pallas-backed)
# -----------------------------------------------------------------------------
@functools.partial(jax.jit, static_argnames=("epoch",))
def rnn_forward(params, x, prev_state, *, epoch):
    """x: (seq, batch) int32 token ids; prev_state: (h, c), each
    (num_layers, batch, lstm_size). Returns (logits (seq,batch,vocab),
    (h_n, c_n))."""
    h_prev, c_prev = prev_state
    table = params["embedding1"] if epoch < 3 else params["embedding2"]
    embed = jnp.take(table, x, axis=0)                     # (S, B, E)
    # TODO(synk): nn.LSTM inter-layer dropout (drop_prob) applies only in
    # training mode; this forward implements inference (no dropout).
    logits, h_n, c_n = fused_rnn_apply(embed, h_prev, c_prev,
                                       params["lstm"],
                                       params["dense_w_t"],
                                       params["dense_b"])
    return logits, (h_n, c_n)


# -----------------------------------------------------------------------------
# Pure-JAX f32 reference for validation
# -----------------------------------------------------------------------------
def rnn_forward_ref(params, x, prev_state, *, epoch):
    h_prev, c_prev = prev_state
    table = params["embedding1"] if epoch < 3 else params["embedding2"]
    layer_in = jnp.take(table, x, axis=0)
    h_out, c_out = [], []
    H = h_prev.shape[-1]
    for layer, p in enumerate(params["lstm"]):
        h, c = h_prev[layer], c_prev[layer]
        ys = []
        for t in range(layer_in.shape[0]):
            g = layer_in[t] @ p["w_ih_t"] + h @ p["w_hh_t"] + p["bias"][0]
            i = jax.nn.sigmoid(g[:, 0 * H:1 * H])
            f = jax.nn.sigmoid(g[:, 1 * H:2 * H])
            gg = jnp.tanh(g[:, 2 * H:3 * H])
            o = jax.nn.sigmoid(g[:, 3 * H:4 * H])
            c = f * c + i * gg
            h = o * jnp.tanh(c)
            ys.append(h)
        layer_in = jnp.stack(ys)
        h_out.append(h)
        c_out.append(c)
    logits = layer_in @ params["dense_w_t"] + params["dense_b"][0]
    return logits, (jnp.stack(h_out), jnp.stack(c_out))


if __name__ == "__main__":
    # Small, deterministic config consistent with the module's __init__.
    seq_len = 8
    batch = 2
    vocab_size = 50        # len(token_to_num)
    embedding_size = 32
    lstm_size = 32
    num_layers = 2

    key = jax.random.PRNGKey(0)
    k_params, k_tokens = jax.random.split(key)
    params = init_params(k_params, vocab_size, embedding_size, lstm_size,
                         num_layers)

    x = jax.random.randint(k_tokens, (seq_len, batch), 0, vocab_size,
                           dtype=jnp.int32)
    # zero_state(batch_size)
    prev_state = (jnp.zeros((num_layers, batch, lstm_size), jnp.float32),
                  jnp.zeros((num_layers, batch, lstm_size), jnp.float32))

    logits, (h_n, c_n) = rnn_forward(params, x, prev_state, epoch=1)
    jax.block_until_ready((logits, h_n, c_n))

    ref_logits, (ref_h, ref_c) = rnn_forward_ref(params, x, prev_state,
                                                 epoch=1)
    assert logits.shape == (seq_len, batch, vocab_size)
    assert h_n.shape == (num_layers, batch, lstm_size)
    assert c_n.shape == (num_layers, batch, lstm_size)
    # Tolerance accounts for bf16 MXU operands (accumulation is f32).
    assert jnp.allclose(logits, ref_logits, atol=2e-2, rtol=2e-2)
    assert jnp.allclose(h_n, ref_h, atol=2e-2, rtol=2e-2)
    assert jnp.allclose(c_n, ref_c, atol=2e-2, rtol=2e-2)

    print("KERNEL_OK")
</pallas_src>

<mosaic_0001>
module attributes {stable_mosaic.version = 11 : i64} {
  func.func @kernel(%arg0: memref<8x8x128xbf16, #tpu.memory_space<vmem>>, %arg1: memref<2x8x128xf32, #tpu.memory_space<vmem>>, %arg2: memref<2x8x128xf32, #tpu.memory_space<vmem>>, %arg3: memref<128x512xbf16, #tpu.memory_space<vmem>>, %arg4: memref<128x512xbf16, #tpu.memory_space<vmem>>, %arg5: memref<1x512xf32, #tpu.memory_space<vmem>>, %arg6: memref<128x512xbf16, #tpu.memory_space<vmem>>, %arg7: memref<128x512xbf16, #tpu.memory_space<vmem>>, %arg8: memref<1x512xf32, #tpu.memory_space<vmem>>, %arg9: memref<128x128xbf16, #tpu.memory_space<vmem>>, %arg10: memref<1x128xf32, #tpu.memory_space<vmem>>, %arg11: memref<8x8x128xf32, #tpu.memory_space<vmem>>, %arg12: memref<2x8x128xf32, #tpu.memory_space<vmem>>, %arg13: memref<2x8x128xf32, #tpu.memory_space<vmem>>, %arg14: memref<8x8x128xbf16, #tpu.memory_space<vmem>>, %arg15: memref<8x8x512xf32, #tpu.memory_space<vmem>>) attributes {dimension_semantics = [], scalar_prefetch = 0 : i64, scratch_operands = 2 : i64, tpu.core_type = #tpu.core_type<tc>} {
    %c0 = arith.constant 0 : index
    %c0_0 = arith.constant 0 : index
    %c0_1 = arith.constant 0 : index
    %0 = vector.load %arg0[%c0, %c0_0, %c0_1] : memref<8x8x128xbf16, #tpu.memory_space<vmem>>, vector<8x8x128xbf16>
    %1 = vector.shape_cast %0 : vector<8x8x128xbf16> to vector<64x128xbf16>
    %c0_2 = arith.constant 0 : index
    %c0_3 = arith.constant 0 : index
    %2 = vector.load %arg3[%c0_2, %c0_3] : memref<128x512xbf16, #tpu.memory_space<vmem>>, vector<128x512xbf16>
    %cst = arith.constant dense<0.000000e+00> : vector<64x512xf32>
    %3 = tpu.matmul %1, %2, %cst {dimension_numbers = #tpu.dot_dimension_numbers<[1], [0], [0], [1], [0, 0, 1, 1], [], []>} : vector<64x128xbf16>, vector<128x512xbf16>, vector<64x512xf32> -> vector<64x512xf32>
    %c0_4 = arith.constant 0 : index
    %c0_5 = arith.constant 0 : index
    %4 = vector.load %arg5[%c0_4, %c0_5] : memref<1x512xf32, #tpu.memory_space<vmem>>, vector<1x512xf32>
    %5 = vector.broadcast %4 : vector<1x512xf32> to vector<64x512xf32>
    %6 = arith.addf %3, %5 : vector<64x512xf32>
    %7 = vector.shape_cast %6 : vector<64x512xf32> to vector<8x8x512xf32>
    %c0_6 = arith.constant 0 : index
    %c0_7 = arith.constant 0 : index
    %c0_8 = arith.constant 0 : index
    %8 = vector.load %arg15[%c0_6, %c0_7, %c0_8] : memref<8x8x512xf32, #tpu.memory_space<vmem>>, vector<8x8x512xf32>
    tpu.vector_store %arg15[%c0_6, %c0_7, %c0_8], %7 {strides = array<i32>} : memref<8x8x512xf32, #tpu.memory_space<vmem>>, vector<8x8x512xf32>,
    %c0_9 = arith.constant 0 : index
    %c0_10 = arith.constant 0 : index
    %9 = vector.load %arg4[%c0_9, %c0_10] : memref<128x512xbf16, #tpu.memory_space<vmem>>, vector<128x512xbf16>
    %c0_11 = arith.constant 0 : index
    %c0_12 = arith.constant 0 : index
    %c0_13 = arith.constant 0 : index
    %10 = vector.load %arg1[%c0_11, %c0_12, %c0_13] : memref<2x8x128xf32, #tpu.memory_space<vmem>>, vector<1x8x128xf32>
    %11 = vector.shape_cast %10 : vector<1x8x128xf32> to vector<8x128xf32>
    %c0_14 = arith.constant 0 : index
    %c0_15 = arith.constant 0 : index
    %c0_16 = arith.constant 0 : index
    %12 = vector.load %arg2[%c0_14, %c0_15, %c0_16] : memref<2x8x128xf32, #tpu.memory_space<vmem>>, vector<1x8x128xf32>
    %13 = vector.shape_cast %12 : vector<1x8x128xf32> to vector<8x128xf32>
    %c0_i32 = arith.constant 0 : i32
    %14 = arith.index_cast %c0_i32 : i32 to index
    %c0_17 = arith.constant 0 : index
    %c0_18 = arith.constant 0 : index
    %15 = vector.load %arg15[%14, %c0_17, %c0_18] : memref<8x8x512xf32, #tpu.memory_space<vmem>>, vector<1x8x512xf32>
    %16 = vector.shape_cast %15 : vector<1x8x512xf32> to vector<8x512xf32>
    %17 = arith.truncf %11 : vector<8x128xf32> to vector<8x128xbf16>
    %cst_19 = arith.constant dense<0.000000e+00> : vector<8x512xf32>
    %18 = tpu.matmul %17, %9, %cst_19 {dimension_numbers = #tpu.dot_dimension_numbers<[1], [0], [0], [1], [0, 0, 1, 1], [], []>} : vector<8x128xbf16>, vector<128x512xbf16>, vector<8x512xf32> -> vector<8x512xf32>
    %19 = arith.addf %16, %18 : vector<8x512xf32>
    %20 = vector.extract_strided_slice %19 {offsets = [0, 0], sizes = [8, 128], strides = [1, 1]} : vector<8x512xf32> to vector<8x128xf32>
    %21 = arith.negf %20 : vector<8x128xf32>
    %22 = math.exp %21 : vector<8x128xf32>
    %cst_20 = arith.constant 1.000000e+00 : f32
    %23 = vector.broadcast %cst_20 : f32 to vector<8x128xf32>
    %24 = arith.addf %23, %22 : vector<8x128xf32>
    %25 = arith.divf %23, %24 : vector<8x128xf32>
    %26 = vector.extract_strided_slice %19 {offsets = [0, 128], sizes = [8, 128], strides = [1, 1]} : vector<8x512xf32> to vector<8x128xf32>
    %27 = arith.negf %26 : vector<8x128xf32>
    %28 = math.exp %27 : vector<8x128xf32>
    %cst_21 = arith.constant 1.000000e+00 : f32
    %29 = vector.broadcast %cst_21 : f32 to vector<8x128xf32>
    %30 = arith.addf %29, %28 : vector<8x128xf32>
    %31 = arith.divf %29, %30 : vector<8x128xf32>
    %32 = vector.extract_strided_slice %19 {offsets = [0, 256], sizes = [8, 128], strides = [1, 1]} : vector<8x512xf32> to vector<8x128xf32>
    %33 = math.tanh %32 : vector<8x128xf32>
    %34 = vector.extract_strided_slice %19 {offsets = [0, 384], sizes = [8, 128], strides = [1, 1]} : vector<8x512xf32> to vector<8x128xf32>
    %35 = arith.negf %34 : vector<8x128xf32>
    %36 = math.exp %35 : vector<8x128xf32>
    %cst_22 = arith.constant 1.000000e+00 : f32
    %37 = vector.broadcast %cst_22 : f32 to vector<8x128xf32>
    %38 = arith.addf %37, %36 : vector<8x128xf32>
    %39 = arith.divf %37, %38 : vector<8x128xf32>
    %40 = arith.mulf %31, %13 : vector<8x128xf32>
    %41 = arith.mulf %25, %33 : vector<8x128xf32>
    %42 = arith.addf %40, %41 : vector<8x128xf32>
    %43 = math.tanh %42 : vector<8x128xf32>
    %44 = arith.mulf %39, %43 : vector<8x128xf32>
    %45 = arith.truncf %44 : vector<8x128xf32> to vector<8x128xbf16>
    %46 = arith.index_cast %c0_i32 : i32 to index
    %c0_23 = arith.constant 0 : index
    %c0_24 = arith.constant 0 : index
    %47 = vector.load %arg14[%46, %c0_23, %c0_24] : memref<8x8x128xbf16, #tpu.memory_space<vmem>>, vector<1x8x128xbf16>
    %48 = vector.shape_cast %47 : vector<1x8x128xbf16> to vector<8x128xbf16>
    %49 = vector.shape_cast %45 : vector<8x128xbf16> to vector<1x8x128xbf16>
    tpu.vector_store %arg14[%46, %c0_23, %c0_24], %49 {strides = array<i32>} : memref<8x8x128xbf16, #tpu.memory_space<vmem>>, vector<1x8x128xbf16>,
    %c1_i32 = arith.constant 1 : i32
    %50 = arith.index_cast %c1_i32 : i32 to index
    %c0_25 = arith.constant 0 : index
    %c0_26 = arith.constant 0 : index
    %51 = vector.load %arg15[%50, %c0_25, %c0_26] : memref<8x8x512xf32, #tpu.memory_space<vmem>>, vector<1x8x512xf32>
    %52 = vector.shape_cast %51 : vector<1x8x512xf32> to vector<8x512xf32>
    %53 = arith.truncf %44 : vector<8x128xf32> to vector<8x128xbf16>
    %cst_27 = arith.constant dense<0.000000e+00> : vector<8x512xf32>
    %54 = tpu.matmul %53, %9, %cst_27 {dimension_numbers = #tpu.dot_dimension_numbers<[1], [0], [0], [1], [0, 0, 1, 1], [], []>} : vector<8x128xbf16>, vector<128x512xbf16>, vector<8x512xf32> -> vector<8x512xf32>
    %55 = arith.addf %52, %54 : vector<8x512xf32>
    %56 = vector.extract_strided_slice %55 {offsets = [0, 0], sizes = [8, 128], strides = [1, 1]} : vector<8x512xf32> to vector<8x128xf32>
    %57 = arith.negf %56 : vector<8x128xf32>
    %58 = math.exp %57 : vector<8x128xf32>
    %cst_28 = arith.constant 1.000000e+00 : f32
    %59 = vector.broadcast %cst_28 : f32 to vector<8x128xf32>
    %60 = arith.addf %59, %58 : vector<8x128xf32>
    %61 = arith.divf %59, %60 : vector<8x128xf32>
    %62 = vector.extract_strided_slice %55 {offsets = [0, 128], sizes = [8, 128], strides = [1, 1]} : vector<8x512xf32> to vector<8x128xf32>
    %63 = arith.negf %62 : vector<8x128xf32>
    %64 = math.exp %63 : vector<8x128xf32>
    %cst_29 = arith.constant 1.000000e+00 : f32
    %65 = vector.broadcast %cst_29 : f32 to vector<8x128xf32>
    %66 = arith.addf %65, %64 : vector<8x128xf32>
    %67 = arith.divf %65, %66 : vector<8x128xf32>
    %68 = vector.extract_strided_slice %55 {offsets = [0, 256], sizes = [8, 128], strides = [1, 1]} : vector<8x512xf32> to vector<8x128xf32>
    %69 = math.tanh %68 : vector<8x128xf32>
    %70 = vector.extract_strided_slice %55 {offsets = [0, 384], sizes = [8, 128], strides = [1, 1]} : vector<8x512xf32> to vector<8x128xf32>
    %71 = arith.negf %70 : vector<8x128xf32>
    %72 = math.exp %71 : vector<8x128xf32>
    %cst_30 = arith.constant 1.000000e+00 : f32
    %73 = vector.broadcast %cst_30 : f32 to vector<8x128xf32>
    %74 = arith.addf %73, %72 : vector<8x128xf32>
    %75 = arith.divf %73, %74 : vector<8x128xf32>
    %76 = arith.mulf %67, %42 : vector<8x128xf32>
    %77 = arith.mulf %61, %69 : vector<8x128xf32>
    %78 = arith.addf %76, %77 : vector<8x128xf32>
    %79 = math.tanh %78 : vector<8x128xf32>
    %80 = arith.mulf %75, %79 : vector<8x128xf32>
    %81 = arith.truncf %80 : vector<8x128xf32> to vector<8x128xbf16>
    %82 = arith.index_cast %c1_i32 : i32 to index
    %c0_31 = arith.constant 0 : index
    %c0_32 = arith.constant 0 : index
    %83 = vector.load %arg14[%82, %c0_31, %c0_32] : memref<8x8x128xbf16, #tpu.memory_space<vmem>>, vector<1x8x128xbf16>
    %84 = vector.shape_cast %83 : vector<1x8x128xbf16> to vector<8x128xbf16>
    %85 = vector.shape_cast %81 : vector<8x128xbf16> to vector<1x8x128xbf16>
    tpu.vector_store %arg14[%82, %c0_31, %c0_32], %85 {strides = array<i32>} : memref<8x8x128xbf16, #tpu.memory_space<vmem>>, vector<1x8x128xbf16>,
    %c2_i32 = arith.constant 2 : i32
    %86 = arith.index_cast %c2_i32 : i32 to index
    %c0_33 = arith.constant 0 : index
    %c0_34 = arith.constant 0 : index
    %87 = vector.load %arg15[%86, %c0_33, %c0_34] : memref<8x8x512xf32, #tpu.memory_space<vmem>>, vector<1x8x512xf32>
    %88 = vector.shape_cast %87 : vector<1x8x512xf32> to vector<8x512xf32>
    %89 = arith.truncf %80 : vector<8x128xf32> to vector<8x128xbf16>
    %cst_35 = arith.constant dense<0.000000e+00> : vector<8x512xf32>
    %90 = tpu.matmul %89, %9, %cst_35 {dimension_numbers = #tpu.dot_dimension_numbers<[1], [0], [0], [1], [0, 0, 1, 1], [], []>} : vector<8x128xbf16>, vector<128x512xbf16>, vector<8x512xf32> -> vector<8x512xf32>
    %91 = arith.addf %88, %90 : vector<8x512xf32>
    %92 = vector.extract_strided_slice %91 {offsets = [0, 0], sizes = [8, 128], strides = [1, 1]} : vector<8x512xf32> to vector<8x128xf32>
    %93 = arith.negf %92 : vector<8x128xf32>
    %94 = math.exp %93 : vector<8x128xf32>
    %cst_36 = arith.constant 1.000000e+00 : f32
    %95 = vector.broadcast %cst_36 : f32 to vector<8x128xf32>
    %96 = arith.addf %95, %94 : vector<8x128xf32>
    %97 = arith.divf %95, %96 : vector<8x128xf32>
    %98 = vector.extract_strided_slice %91 {offsets = [0, 128], sizes = [8, 128], strides = [1, 1]} : vector<8x512xf32> to vector<8x128xf32>
    %99 = arith.negf %98 : vector<8x128xf32>
    %100 = math.exp %99 : vector<8x128xf32>
    %cst_37 = arith.constant 1.000000e+00 : f32
    %101 = vector.broadcast %cst_37 : f32 to vector<8x128xf32>
    %102 = arith.addf %101, %100 : vector<8x128xf32>
    %103 = arith.divf %101, %102 : vector<8x128xf32>
    %104 = vector.extract_strided_slice %91 {offsets = [0, 256], sizes = [8, 128], strides = [1, 1]} : vector<8x512xf32> to vector<8x128xf32>
    %105 = math.tanh %104 : vector<8x128xf32>
    %106 = vector.extract_strided_slice %91 {offsets = [0, 384], sizes = [8, 128], strides = [1, 1]} : vector<8x512xf32> to vector<8x128xf32>
    %107 = arith.negf %106 : vector<8x128xf32>
    %108 = math.exp %107 : vector<8x128xf32>
    %cst_38 = arith.constant 1.000000e+00 : f32
    %109 = vector.broadcast %cst_38 : f32 to vector<8x128xf32>
    %110 = arith.addf %109, %108 : vector<8x128xf32>
    %111 = arith.divf %109, %110 : vector<8x128xf32>
    %112 = arith.mulf %103, %78 : vector<8x128xf32>
    %113 = arith.mulf %97, %105 : vector<8x128xf32>
    %114 = arith.addf %112, %113 : vector<8x128xf32>
    %115 = math.tanh %114 : vector<8x128xf32>
    %116 = arith.mulf %111, %115 : vector<8x128xf32>
    %117 = arith.truncf %116 : vector<8x128xf32> to vector<8x128xbf16>
    %118 = arith.index_cast %c2_i32 : i32 to index
    %c0_39 = arith.constant 0 : index
    %c0_40 = arith.constant 0 : index
    %119 = vector.load %arg14[%118, %c0_39, %c0_40] : memref<8x8x128xbf16, #tpu.memory_space<vmem>>, vector<1x8x128xbf16>
    %120 = vector.shape_cast %119 : vector<1x8x128xbf16> to vector<8x128xbf16>
    %121 = vector.shape_cast %117 : vector<8x128xbf16> to vector<1x8x128xbf16>
    tpu.vector_store %arg14[%118, %c0_39, %c0_40], %121 {strides = array<i32>} : memref<8x8x128xbf16, #tpu.memory_space<vmem>>, vector<1x8x128xbf16>,
    %c3_i32 = arith.constant 3 : i32
    %122 = arith.index_cast %c3_i32 : i32 to index
    %c0_41 = arith.constant 0 : index
    %c0_42 = arith.constant 0 : index
    %123 = vector.load %arg15[%122, %c0_41, %c0_42] : memref<8x8x512xf32, #tpu.memory_space<vmem>>, vector<1x8x512xf32>
    %124 = vector.shape_cast %123 : vector<1x8x512xf32> to vector<8x512xf32>
    %125 = arith.truncf %116 : vector<8x128xf32> to vector<8x128xbf16>
    %cst_43 = arith.constant dense<0.000000e+00> : vector<8x512xf32>
    %126 = tpu.matmul %125, %9, %cst_43 {dimension_numbers = #tpu.dot_dimension_numbers<[1], [0], [0], [1], [0, 0, 1, 1], [], []>} : vector<8x128xbf16>, vector<128x512xbf16>, vector<8x512xf32> -> vector<8x512xf32>
    %127 = arith.addf %124, %126 : vector<8x512xf32>
    %128 = vector.extract_strided_slice %127 {offsets = [0, 0], sizes = [8, 128], strides = [1, 1]} : vector<8x512xf32> to vector<8x128xf32>
    %129 = arith.negf %128 : vector<8x128xf32>
    %130 = math.exp %129 : vector<8x128xf32>
    %cst_44 = arith.constant 1.000000e+00 : f32
    %131 = vector.broadcast %cst_44 : f32 to vector<8x128xf32>
    %132 = arith.addf %131, %130 : vector<8x128xf32>
    %133 = arith.divf %131, %132 : vector<8x128xf32>
    %134 = vector.extract_strided_slice %127 {offsets = [0, 128], sizes = [8, 128], strides = [1, 1]} : vector<8x512xf32> to vector<8x128xf32>
    %135 = arith.negf %134 : vector<8x128xf32>
    %136 = math.exp %135 : vector<8x128xf32>
    %cst_45 = arith.constant 1.000000e+00 : f32
    %137 = vector.broadcast %cst_45 : f32 to vector<8x128xf32>
    %138 = arith.addf %137, %136 : vector<8x128xf32>
    %139 = arith.divf %137, %138 : vector<8x128xf32>
    %140 = vector.extract_strided_slice %127 {offsets = [0, 256], sizes = [8, 128], strides = [1, 1]} : vector<8x512xf32> to vector<8x128xf32>
    %141 = math.tanh %140 : vector<8x128xf32>
    %142 = vector.extract_strided_slice %127 {offsets = [0, 384], sizes = [8, 128], strides = [1, 1]} : vector<8x512xf32> to vector<8x128xf32>
    %143 = arith.negf %142 : vector<8x128xf32>
    %144 = math.exp %143 : vector<8x128xf32>
    %cst_46 = arith.constant 1.000000e+00 : f32
    %145 = vector.broadcast %cst_46 : f32 to vector<8x128xf32>
    %146 = arith.addf %145, %144 : vector<8x128xf32>
    %147 = arith.divf %145, %146 : vector<8x128xf32>
    %148 = arith.mulf %139, %114 : vector<8x128xf32>
    %149 = arith.mulf %133, %141 : vector<8x128xf32>
    %150 = arith.addf %148, %149 : vector<8x128xf32>
    %151 = math.tanh %150 : vector<8x128xf32>
    %152 = arith.mulf %147, %151 : vector<8x128xf32>
    %153 = arith.truncf %152 : vector<8x128xf32> to vector<8x128xbf16>
    %154 = arith.index_cast %c3_i32 : i32 to index
    %c0_47 = arith.constant 0 : index
    %c0_48 = arith.constant 0 : index
    %155 = vector.load %arg14[%154, %c0_47, %c0_48] : memref<8x8x128xbf16, #tpu.memory_space<vmem>>, vector<1x8x128xbf16>
    %156 = vector.shape_cast %155 : vector<1x8x128xbf16> to vector<8x128xbf16>
    %157 = vector.shape_cast %153 : vector<8x128xbf16> to vector<1x8x128xbf16>
    tpu.vector_store %arg14[%154, %c0_47, %c0_48], %157 {strides = array<i32>} : memref<8x8x128xbf16, #tpu.memory_space<vmem>>, vector<1x8x128xbf16>,
    %c4_i32 = arith.constant 4 : i32
    %158 = arith.index_cast %c4_i32 : i32 to index
    %c0_49 = arith.constant 0 : index
    %c0_50 = arith.constant 0 : index
    %159 = vector.load %arg15[%158, %c0_49, %c0_50] : memref<8x8x512xf32, #tpu.memory_space<vmem>>, vector<1x8x512xf32>
    %160 = vector.shape_cast %159 : vector<1x8x512xf32> to vector<8x512xf32>
    %161 = arith.truncf %152 : vector<8x128xf32> to vector<8x128xbf16>
    %cst_51 = arith.constant dense<0.000000e+00> : vector<8x512xf32>
    %162 = tpu.matmul %161, %9, %cst_51 {dimension_numbers = #tpu.dot_dimension_numbers<[1], [0], [0], [1], [0, 0, 1, 1], [], []>} : vector<8x128xbf16>, vector<128x512xbf16>, vector<8x512xf32> -> vector<8x512xf32>
    %163 = arith.addf %160, %162 : vector<8x512xf32>
    %164 = vector.extract_strided_slice %163 {offsets = [0, 0], sizes = [8, 128], strides = [1, 1]} : vector<8x512xf32> to vector<8x128xf32>
    %165 = arith.negf %164 : vector<8x128xf32>
    %166 = math.exp %165 : vector<8x128xf32>
    %cst_52 = arith.constant 1.000000e+00 : f32
    %167 = vector.broadcast %cst_52 : f32 to vector<8x128xf32>
    %168 = arith.addf %167, %166 : vector<8x128xf32>
    %169 = arith.divf %167, %168 : vector<8x128xf32>
    %170 = vector.extract_strided_slice %163 {offsets = [0, 128], sizes = [8, 128], strides = [1, 1]} : vector<8x512xf32> to vector<8x128xf32>
    %171 = arith.negf %170 : vector<8x128xf32>
    %172 = math.exp %171 : vector<8x128xf32>
    %cst_53 = arith.constant 1.000000e+00 : f32
    %173 = vector.broadcast %cst_53 : f32 to vector<8x128xf32>
    %174 = arith.addf %173, %172 : vector<8x128xf32>
    %175 = arith.divf %173, %174 : vector<8x128xf32>
    %176 = vector.extract_strided_slice %163 {offsets = [0, 256], sizes = [8, 128], strides = [1, 1]} : vector<8x512xf32> to vector<8x128xf32>
    %177 = math.tanh %176 : vector<8x128xf32>
    %178 = vector.extract_strided_slice %163 {offsets = [0, 384], sizes = [8, 128], strides = [1, 1]} : vector<8x512xf32> to vector<8x128xf32>
    %179 = arith.negf %178 : vector<8x128xf32>
    %180 = math.exp %179 : vector<8x128xf32>
    %cst_54 = arith.constant 1.000000e+00 : f32
    %181 = vector.broadcast %cst_54 : f32 to vector<8x128xf32>
    %182 = arith.addf %181, %180 : vector<8x128xf32>
    %183 = arith.divf %181, %182 : vector<8x128xf32>
    %184 = arith.mulf %175, %150 : vector<8x128xf32>
    %185 = arith.mulf %169, %177 : vector<8x128xf32>
    %186 = arith.addf %184, %185 : vector<8x128xf32>
    %187 = math.tanh %186 : vector<8x128xf32>
    %188 = arith.mulf %183, %187 : vector<8x128xf32>
    %189 = arith.truncf %188 : vector<8x128xf32> to vector<8x128xbf16>
    %190 = arith.index_cast %c4_i32 : i32 to index
    %c0_55 = arith.constant 0 : index
    %c0_56 = arith.constant 0 : index
    %191 = vector.load %arg14[%190, %c0_55, %c0_56] : memref<8x8x128xbf16, #tpu.memory_space<vmem>>, vector<1x8x128xbf16>
    %192 = vector.shape_cast %191 : vector<1x8x128xbf16> to vector<8x128xbf16>
    %193 = vector.shape_cast %189 : vector<8x128xbf16> to vector<1x8x128xbf16>
    tpu.vector_store %arg14[%190, %c0_55, %c0_56], %193 {strides = array<i32>} : memref<8x8x128xbf16, #tpu.memory_space<vmem>>, vector<1x8x128xbf16>,
    %c5_i32 = arith.constant 5 : i32
    %194 = arith.index_cast %c5_i32 : i32 to index
    %c0_57 = arith.constant 0 : index
    %c0_58 = arith.constant 0 : index
    %195 = vector.load %arg15[%194, %c0_57, %c0_58] : memref<8x8x512xf32, #tpu.memory_space<vmem>>, vector<1x8x512xf32>
    %196 = vector.shape_cast %195 : vector<1x8x512xf32> to vector<8x512xf32>
    %197 = arith.truncf %188 : vector<8x128xf32> to vector<8x128xbf16>
    %cst_59 = arith.constant dense<0.000000e+00> : vector<8x512xf32>
    %198 = tpu.matmul %197, %9, %cst_59 {dimension_numbers = #tpu.dot_dimension_numbers<[1], [0], [0], [1], [0, 0, 1, 1], [], []>} : vector<8x128xbf16>, vector<128x512xbf16>, vector<8x512xf32> -> vector<8x512xf32>
    %199 = arith.addf %196, %198 : vector<8x512xf32>
    %200 = vector.extract_strided_slice %199 {offsets = [0, 0], sizes = [8, 128], strides = [1, 1]} : vector<8x512xf32> to vector<8x128xf32>
    %201 = arith.negf %200 : vector<8x128xf32>
    %202 = math.exp %201 : vector<8x128xf32>
    %cst_60 = arith.constant 1.000000e+00 : f32
    %203 = vector.broadcast %cst_60 : f32 to vector<8x128xf32>
    %204 = arith.addf %203, %202 : vector<8x128xf32>
    %205 = arith.divf %203, %204 : vector<8x128xf32>
    %206 = vector.extract_strided_slice %199 {offsets = [0, 128], sizes = [8, 128], strides = [1, 1]} : vector<8x512xf32> to vector<8x128xf32>
    %207 = arith.negf %206 : vector<8x128xf32>
    %208 = math.exp %207 : vector<8x128xf32>
    %cst_61 = arith.constant 1.000000e+00 : f32
    %209 = vector.broadcast %cst_61 : f32 to vector<8x128xf32>
    %210 = arith.addf %209, %208 : vector<8x128xf32>
    %211 = arith.divf %209, %210 : vector<8x128xf32>
    %212 = vector.extract_strided_slice %199 {offsets = [0, 256], sizes = [8, 128], strides = [1, 1]} : vector<8x512xf32> to vector<8x128xf32>
    %213 = math.tanh %212 : vector<8x128xf32>
    %214 = vector.extract_strided_slice %199 {offsets = [0, 384], sizes = [8, 128], strides = [1, 1]} : vector<8x512xf32> to vector<8x128xf32>
    %215 = arith.negf %214 : vector<8x128xf32>
    %216 = math.exp %215 : vector<8x128xf32>
    %cst_62 = arith.constant 1.000000e+00 : f32
    %217 = vector.broadcast %cst_62 : f32 to vector<8x128xf32>
    %218 = arith.addf %217, %216 : vector<8x128xf32>
    %219 = arith.divf %217, %218 : vector<8x128xf32>
    %220 = arith.mulf %211, %186 : vector<8x128xf32>
    %221 = arith.mulf %205, %213 : vector<8x128xf32>
    %222 = arith.addf %220, %221 : vector<8x128xf32>
    %223 = math.tanh %222 : vector<8x128xf32>
    %224 = arith.mulf %219, %223 : vector<8x128xf32>
    %225 = arith.truncf %224 : vector<8x128xf32> to vector<8x128xbf16>
    %226 = arith.index_cast %c5_i32 : i32 to index
    %c0_63 = arith.constant 0 : index
    %c0_64 = arith.constant 0 : index
    %227 = vector.load %arg14[%226, %c0_63, %c0_64] : memref<8x8x128xbf16, #tpu.memory_space<vmem>>, vector<1x8x128xbf16>
    %228 = vector.shape_cast %227 : vector<1x8x128xbf16> to vector<8x128xbf16>
    %229 = vector.shape_cast %225 : vector<8x128xbf16> to vector<1x8x128xbf16>
    tpu.vector_store %arg14[%226, %c0_63, %c0_64], %229 {strides = array<i32>} : memref<8x8x128xbf16, #tpu.memory_space<vmem>>, vector<1x8x128xbf16>,
    %c6_i32 = arith.constant 6 : i32
    %230 = arith.index_cast %c6_i32 : i32 to index
    %c0_65 = arith.constant 0 : index
    %c0_66 = arith.constant 0 : index
    %231 = vector.load %arg15[%230, %c0_65, %c0_66] : memref<8x8x512xf32, #tpu.memory_space<vmem>>, vector<1x8x512xf32>
    %232 = vector.shape_cast %231 : vector<1x8x512xf32> to vector<8x512xf32>
    %233 = arith.truncf %224 : vector<8x128xf32> to vector<8x128xbf16>
    %cst_67 = arith.constant dense<0.000000e+00> : vector<8x512xf32>
    %234 = tpu.matmul %233, %9, %cst_67 {dimension_numbers = #tpu.dot_dimension_numbers<[1], [0], [0], [1], [0, 0, 1, 1], [], []>} : vector<8x128xbf16>, vector<128x512xbf16>, vector<8x512xf32> -> vector<8x512xf32>
    %235 = arith.addf %232, %234 : vector<8x512xf32>
    %236 = vector.extract_strided_slice %235 {offsets = [0, 0], sizes = [8, 128], strides = [1, 1]} : vector<8x512xf32> to vector<8x128xf32>
    %237 = arith.negf %236 : vector<8x128xf32>
    %238 = math.exp %237 : vector<8x128xf32>
    %cst_68 = arith.constant 1.000000e+00 : f32
    %239 = vector.broadcast %cst_68 : f32 to vector<8x128xf32>
    %240 = arith.addf %239, %238 : vector<8x128xf32>
    %241 = arith.divf %239, %240 : vector<8x128xf32>
    %242 = vector.extract_strided_slice %235 {offsets = [0, 128], sizes = [8, 128], strides = [1, 1]} : vector<8x512xf32> to vector<8x128xf32>
    %243 = arith.negf %242 : vector<8x128xf32>
    %244 = math.exp %243 : vector<8x128xf32>
    %cst_69 = arith.constant 1.000000e+00 : f32
    %245 = vector.broadcast %cst_69 : f32 to vector<8x128xf32>
    %246 = arith.addf %245, %244 : vector<8x128xf32>
    %247 = arith.divf %245, %246 : vector<8x128xf32>
    %248 = vector.extract_strided_slice %235 {offsets = [0, 256], sizes = [8, 128], strides = [1, 1]} : vector<8x512xf32> to vector<8x128xf32>
    %249 = math.tanh %248 : vector<8x128xf32>
    %250 = vector.extract_strided_slice %235 {offsets = [0, 384], sizes = [8, 128], strides = [1, 1]} : vector<8x512xf32> to vector<8x128xf32>
    %251 = arith.negf %250 : vector<8x128xf32>
    %252 = math.exp %251 : vector<8x128xf32>
    %cst_70 = arith.constant 1.000000e+00 : f32
    %253 = vector.broadcast %cst_70 : f32 to vector<8x128xf32>
    %254 = arith.addf %253, %252 : vector<8x128xf32>
    %255 = arith.divf %253, %254 : vector<8x128xf32>
    %256 = arith.mulf %247, %222 : vector<8x128xf32>
    %257 = arith.mulf %241, %249 : vector<8x128xf32>
    %258 = arith.addf %256, %257 : vector<8x128xf32>
    %259 = math.tanh %258 : vector<8x128xf32>
    %260 = arith.mulf %255, %259 : vector<8x128xf32>
    %261 = arith.truncf %260 : vector<8x128xf32> to vector<8x128xbf16>
    %262 = arith.index_cast %c6_i32 : i32 to index
    %c0_71 = arith.constant 0 : index
    %c0_72 = arith.constant 0 : index
    %263 = vector.load %arg14[%262, %c0_71, %c0_72] : memref<8x8x128xbf16, #tpu.memory_space<vmem>>, vector<1x8x128xbf16>
    %264 = vector.shape_cast %263 : vector<1x8x128xbf16> to vector<8x128xbf16>
    %265 = vector.shape_cast %261 : vector<8x128xbf16> to vector<1x8x128xbf16>
    tpu.vector_store %arg14[%262, %c0_71, %c0_72], %265 {strides = array<i32>} : memref<8x8x128xbf16, #tpu.memory_space<vmem>>, vector<1x8x128xbf16>,
    %c7_i32 = arith.constant 7 : i32
    %266 = arith.index_cast %c7_i32 : i32 to index
    %c0_73 = arith.constant 0 : index
    %c0_74 = arith.constant 0 : index
    %267 = vector.load %arg15[%266, %c0_73, %c0_74] : memref<8x8x512xf32, #tpu.memory_space<vmem>>, vector<1x8x512xf32>
    %268 = vector.shape_cast %267 : vector<1x8x512xf32> to vector<8x512xf32>
    %269 = arith.truncf %260 : vector<8x128xf32> to vector<8x128xbf16>
    %cst_75 = arith.constant dense<0.000000e+00> : vector<8x512xf32>
    %270 = tpu.matmul %269, %9, %cst_75 {dimension_numbers = #tpu.dot_dimension_numbers<[1], [0], [0], [1], [0, 0, 1, 1], [], []>} : vector<8x128xbf16>, vector<128x512xbf16>, vector<8x512xf32> -> vector<8x512xf32>
    %271 = arith.addf %268, %270 : vector<8x512xf32>
    %272 = vector.extract_strided_slice %271 {offsets = [0, 0], sizes = [8, 128], strides = [1, 1]} : vector<8x512xf32> to vector<8x128xf32>
    %273 = arith.negf %272 : vector<8x128xf32>
    %274 = math.exp %273 : vector<8x128xf32>
    %cst_76 = arith.constant 1.000000e+00 : f32
    %275 = vector.broadcast %cst_76 : f32 to vector<8x128xf32>
    %276 = arith.addf %275, %274 : vector<8x128xf32>
    %277 = arith.divf %275, %276 : vector<8x128xf32>
    %278 = vector.extract_strided_slice %271 {offsets = [0, 128], sizes = [8, 128], strides = [1, 1]} : vector<8x512xf32> to vector<8x128xf32>
    %279 = arith.negf %278 : vector<8x128xf32>
    %280 = math.exp %279 : vector<8x128xf32>
    %cst_77 = arith.constant 1.000000e+00 : f32
    %281 = vector.broadcast %cst_77 : f32 to vector<8x128xf32>
    %282 = arith.addf %281, %280 : vector<8x128xf32>
    %283 = arith.divf %281, %282 : vector<8x128xf32>
    %284 = vector.extract_strided_slice %271 {offsets = [0, 256], sizes = [8, 128], strides = [1, 1]} : vector<8x512xf32> to vector<8x128xf32>
    %285 = math.tanh %284 : vector<8x128xf32>
    %286 = vector.extract_strided_slice %271 {offsets = [0, 384], sizes = [8, 128], strides = [1, 1]} : vector<8x512xf32> to vector<8x128xf32>
    %287 = arith.negf %286 : vector<8x128xf32>
    %288 = math.exp %287 : vector<8x128xf32>
    %cst_78 = arith.constant 1.000000e+00 : f32
    %289 = vector.broadcast %cst_78 : f32 to vector<8x128xf32>
    %290 = arith.addf %289, %288 : vector<8x128xf32>
    %291 = arith.divf %289, %290 : vector<8x128xf32>
    %292 = arith.mulf %283, %258 : vector<8x128xf32>
    %293 = arith.mulf %277, %285 : vector<8x128xf32>
    %294 = arith.addf %292, %293 : vector<8x128xf32>
    %295 = math.tanh %294 : vector<8x128xf32>
    %296 = arith.mulf %291, %295 : vector<8x128xf32>
    %297 = arith.truncf %296 : vector<8x128xf32> to vector<8x128xbf16>
    %298 = arith.index_cast %c7_i32 : i32 to index
    %c0_79 = arith.constant 0 : index
    %c0_80 = arith.constant 0 : index
    %299 = vector.load %arg14[%298, %c0_79, %c0_80] : memref<8x8x128xbf16, #tpu.memory_space<vmem>>, vector<1x8x128xbf16>
    %300 = vector.shape_cast %299 : vector<1x8x128xbf16> to vector<8x128xbf16>
    %301 = vector.shape_cast %297 : vector<8x128xbf16> to vector<1x8x128xbf16>
    tpu.vector_store %arg14[%298, %c0_79, %c0_80], %301 {strides = array<i32>} : memref<8x8x128xbf16, #tpu.memory_space<vmem>>, vector<1x8x128xbf16>,
    %c8_i32 = arith.constant 8 : i32
    %c0_81 = arith.constant 0 : index
    %c0_82 = arith.constant 0 : index
    %c0_83 = arith.constant 0 : index
    %302 = vector.load %arg12[%c0_81, %c0_82, %c0_83] : memref<2x8x128xf32, #tpu.memory_space<vmem>>, vector<1x8x128xf32>
    %303 = vector.shape_cast %302 : vector<1x8x128xf32> to vector<8x128xf32>
    %304 = vector.shape_cast %296 : vector<8x128xf32> to vector<1x8x128xf32>
    tpu.vector_store %arg12[%c0_81, %c0_82, %c0_83], %304 {strides = array<i32>} : memref<2x8x128xf32, #tpu.memory_space<vmem>>, vector<1x8x128xf32>,
    %c0_84 = arith.constant 0 : index
    %c0_85 = arith.constant 0 : index
    %c0_86 = arith.constant 0 : index
    %305 = vector.load %arg13[%c0_84, %c0_85, %c0_86] : memref<2x8x128xf32, #tpu.memory_space<vmem>>, vector<1x8x128xf32>
    %306 = vector.shape_cast %305 : vector<1x8x128xf32> to vector<8x128xf32>
    %307 = vector.shape_cast %294 : vector<8x128xf32> to vector<1x8x128xf32>
    tpu.vector_store %arg13[%c0_84, %c0_85, %c0_86], %307 {strides = array<i32>} : memref<2x8x128xf32, #tpu.memory_space<vmem>>, vector<1x8x128xf32>,
    %c0_87 = arith.constant 0 : index
    %c0_88 = arith.constant 0 : index
    %c0_89 = arith.constant 0 : index
    %308 = vector.load %arg14[%c0_87, %c0_88, %c0_89] : memref<8x8x128xbf16, #tpu.memory_space<vmem>>, vector<8x8x128xbf16>
    %309 = vector.shape_cast %308 : vector<8x8x128xbf16> to vector<64x128xbf16>
    %c0_90 = arith.constant 0 : index
    %c0_91 = arith.constant 0 : index
    %310 = vector.load %arg6[%c0_90, %c0_91] : memref<128x512xbf16, #tpu.memory_space<vmem>>, vector<128x512xbf16>
    %cst_92 = arith.constant dense<0.000000e+00> : vector<64x512xf32>
    %311 = tpu.matmul %309, %310, %cst_92 {dimension_numbers = #tpu.dot_dimension_numbers<[1], [0], [0], [1], [0, 0, 1, 1], [], []>} : vector<64x128xbf16>, vector<128x512xbf16>, vector<64x512xf32> -> vector<64x512xf32>
    %c0_93 = arith.constant 0 : index
    %c0_94 = arith.constant 0 : index
    %312 = vector.load %arg8[%c0_93, %c0_94] : memref<1x512xf32, #tpu.memory_space<vmem>>, vector<1x512xf32>
    %313 = vector.broadcast %312 : vector<1x512xf32> to vector<64x512xf32>
    %314 = arith.addf %311, %313 : vector<64x512xf32>
    %315 = vector.shape_cast %314 : vector<64x512xf32> to vector<8x8x512xf32>
    %c0_95 = arith.constant 0 : index
    %c0_96 = arith.constant 0 : index
    %c0_97 = arith.constant 0 : index
    %316 = vector.load %arg15[%c0_95, %c0_96, %c0_97] : memref<8x8x512xf32, #tpu.memory_space<vmem>>, vector<8x8x512xf32>
    tpu.vector_store %arg15[%c0_95, %c0_96, %c0_97], %315 {strides = array<i32>} : memref<8x8x512xf32, #tpu.memory_space<vmem>>, vector<8x8x512xf32>,
    %c0_98 = arith.constant 0 : index
    %c0_99 = arith.constant 0 : index
    %317 = vector.load %arg7[%c0_98, %c0_99] : memref<128x512xbf16, #tpu.memory_space<vmem>>, vector<128x512xbf16>
    %c1 = arith.constant 1 : index
    %c0_100 = arith.constant 0 : index
    %c0_101 = arith.constant 0 : index
    %318 = vector.load %arg1[%c1, %c0_100, %c0_101] : memref<2x8x128xf32, #tpu.memory_space<vmem>>, vector<1x8x128xf32>
    %319 = vector.shape_cast %318 : vector<1x8x128xf32> to vector<8x128xf32>
    %c1_102 = arith.constant 1 : index
    %c0_103 = arith.constant 0 : index
    %c0_104 = arith.constant 0 : index
    %320 = vector.load %arg2[%c1_102, %c0_103, %c0_104] : memref<2x8x128xf32, #tpu.memory_space<vmem>>, vector<1x8x128xf32>
    %321 = vector.shape_cast %320 : vector<1x8x128xf32> to vector<8x128xf32>
    %c0_i32_105 = arith.constant 0 : i32
    %322 = arith.index_cast %c0_i32_105 : i32 to index
    %c0_106 = arith.constant 0 : index
    %c0_107 = arith.constant 0 : index
    %323 = vector.load %arg15[%322, %c0_106, %c0_107] : memref<8x8x512xf32, #tpu.memory_space<vmem>>, vector<1x8x512xf32>
    %324 = vector.shape_cast %323 : vector<1x8x512xf32> to vector<8x512xf32>
    %325 = arith.truncf %319 : vector<8x128xf32> to vector<8x128xbf16>
    %cst_108 = arith.constant dense<0.000000e+00> : vector<8x512xf32>
    %326 = tpu.matmul %325, %317, %cst_108 {dimension_numbers = #tpu.dot_dimension_numbers<[1], [0], [0], [1], [0, 0, 1, 1], [], []>} : vector<8x128xbf16>, vector<128x512xbf16>, vector<8x512xf32> -> vector<8x512xf32>
    %327 = arith.addf %324, %326 : vector<8x512xf32>
    %328 = vector.extract_strided_slice %327 {offsets = [0, 0], sizes = [8, 128], strides = [1, 1]} : vector<8x512xf32> to vector<8x128xf32>
    %329 = arith.negf %328 : vector<8x128xf32>
    %330 = math.exp %329 : vector<8x128xf32>
    %cst_109 = arith.constant 1.000000e+00 : f32
    %331 = vector.broadcast %cst_109 : f32 to vector<8x128xf32>
    %332 = arith.addf %331, %330 : vector<8x128xf32>
    %333 = arith.divf %331, %332 : vector<8x128xf32>
    %334 = vector.extract_strided_slice %327 {offsets = [0, 128], sizes = [8, 128], strides = [1, 1]} : vector<8x512xf32> to vector<8x128xf32>
    %335 = arith.negf %334 : vector<8x128xf32>
    %336 = math.exp %335 : vector<8x128xf32>
    %cst_110 = arith.constant 1.000000e+00 : f32
    %337 = vector.broadcast %cst_110 : f32 to vector<8x128xf32>
    %338 = arith.addf %337, %336 : vector<8x128xf32>
    %339 = arith.divf %337, %338 : vector<8x128xf32>
    %340 = vector.extract_strided_slice %327 {offsets = [0, 256], sizes = [8, 128], strides = [1, 1]} : vector<8x512xf32> to vector<8x128xf32>
    %341 = math.tanh %340 : vector<8x128xf32>
    %342 = vector.extract_strided_slice %327 {offsets = [0, 384], sizes = [8, 128], strides = [1, 1]} : vector<8x512xf32> to vector<8x128xf32>
    %343 = arith.negf %342 : vector<8x128xf32>
    %344 = math.exp %343 : vector<8x128xf32>
    %cst_111 = arith.constant 1.000000e+00 : f32
    %345 = vector.broadcast %cst_111 : f32 to vector<8x128xf32>
    %346 = arith.addf %345, %344 : vector<8x128xf32>
    %347 = arith.divf %345, %346 : vector<8x128xf32>
    %348 = arith.mulf %339, %321 : vector<8x128xf32>
    %349 = arith.mulf %333, %341 : vector<8x128xf32>
    %350 = arith.addf %348, %349 : vector<8x128xf32>
    %351 = math.tanh %350 : vector<8x128xf32>
    %352 = arith.mulf %347, %351 : vector<8x128xf32>
    %353 = arith.truncf %352 : vector<8x128xf32> to vector<8x128xbf16>
    %354 = arith.index_cast %c0_i32_105 : i32 to index
    %c0_112 = arith.constant 0 : index
    %c0_113 = arith.constant 0 : index
    %355 = vector.load %arg14[%354, %c0_112, %c0_113] : memref<8x8x128xbf16, #tpu.memory_space<vmem>>, vector<1x8x128xbf16>
    %356 = vector.shape_cast %355 : vector<1x8x128xbf16> to vector<8x128xbf16>
    %357 = vector.shape_cast %353 : vector<8x128xbf16> to vector<1x8x128xbf16>
    tpu.vector_store %arg14[%354, %c0_112, %c0_113], %357 {strides = array<i32>} : memref<8x8x128xbf16, #tpu.memory_space<vmem>>, vector<1x8x128xbf16>,
    %c1_i32_114 = arith.constant 1 : i32
    %358 = arith.index_cast %c1_i32_114 : i32 to index
    %c0_115 = arith.constant 0 : index
    %c0_116 = arith.constant 0 : index
    %359 = vector.load %arg15[%358, %c0_115, %c0_116] : memref<8x8x512xf32, #tpu.memory_space<vmem>>, vector<1x8x512xf32>
    %360 = vector.shape_cast %359 : vector<1x8x512xf32> to vector<8x512xf32>
    %361 = arith.truncf %352 : vector<8x128xf32> to vector<8x128xbf16>
    %cst_117 = arith.constant dense<0.000000e+00> : vector<8x512xf32>
    %362 = tpu.matmul %361, %317, %cst_117 {dimension_numbers = #tpu.dot_dimension_numbers<[1], [0], [0], [1], [0, 0, 1, 1], [], []>} : vector<8x128xbf16>, vector<128x512xbf16>, vector<8x512xf32> -> vector<8x512xf32>
    %363 = arith.addf %360, %362 : vector<8x512xf32>
    %364 = vector.extract_strided_slice %363 {offsets = [0, 0], sizes = [8, 128], strides = [1, 1]} : vector<8x512xf32> to vector<8x128xf32>
    %365 = arith.negf %364 : vector<8x128xf32>
    %366 = math.exp %365 : vector<8x128xf32>
    %cst_118 = arith.constant 1.000000e+00 : f32
    %367 = vector.broadcast %cst_118 : f32 to vector<8x128xf32>
    %368 = arith.addf %367, %366 : vector<8x128xf32>
    %369 = arith.divf %367, %368 : vector<8x128xf32>
    %370 = vector.extract_strided_slice %363 {offsets = [0, 128], sizes = [8, 128], strides = [1, 1]} : vector<8x512xf32> to vector<8x128xf32>
    %371 = arith.negf %370 : vector<8x128xf32>
    %372 = math.exp %371 : vector<8x128xf32>
    %cst_119 = arith.constant 1.000000e+00 : f32
    %373 = vector.broadcast %cst_119 : f32 to vector<8x128xf32>
    %374 = arith.addf %373, %372 : vector<8x128xf32>
    %375 = arith.divf %373, %374 : vector<8x128xf32>
    %376 = vector.extract_strided_slice %363 {offsets = [0, 256], sizes = [8, 128], strides = [1, 1]} : vector<8x512xf32> to vector<8x128xf32>
    %377 = math.tanh %376 : vector<8x128xf32>
    %378 = vector.extract_strided_slice %363 {offsets = [0, 384], sizes = [8, 128], strides = [1, 1]} : vector<8x512xf32> to vector<8x128xf32>
    %379 = arith.negf %378 : vector<8x128xf32>
    %380 = math.exp %379 : vector<8x128xf32>
    %cst_120 = arith.constant 1.000000e+00 : f32
    %381 = vector.broadcast %cst_120 : f32 to vector<8x128xf32>
    %382 = arith.addf %381, %380 : vector<8x128xf32>
    %383 = arith.divf %381, %382 : vector<8x128xf32>
    %384 = arith.mulf %375, %350 : vector<8x128xf32>
    %385 = arith.mulf %369, %377 : vector<8x128xf32>
    %386 = arith.addf %384, %385 : vector<8x128xf32>
    %387 = math.tanh %386 : vector<8x128xf32>
    %388 = arith.mulf %383, %387 : vector<8x128xf32>
    %389 = arith.truncf %388 : vector<8x128xf32> to vector<8x128xbf16>
    %390 = arith.index_cast %c1_i32_114 : i32 to index
    %c0_121 = arith.constant 0 : index
    %c0_122 = arith.constant 0 : index
    %391 = vector.load %arg14[%390, %c0_121, %c0_122] : memref<8x8x128xbf16, #tpu.memory_space<vmem>>, vector<1x8x128xbf16>
    %392 = vector.shape_cast %391 : vector<1x8x128xbf16> to vector<8x128xbf16>
    %393 = vector.shape_cast %389 : vector<8x128xbf16> to vector<1x8x128xbf16>
    tpu.vector_store %arg14[%390, %c0_121, %c0_122], %393 {strides = array<i32>} : memref<8x8x128xbf16, #tpu.memory_space<vmem>>, vector<1x8x128xbf16>,
    %c2_i32_123 = arith.constant 2 : i32
    %394 = arith.index_cast %c2_i32_123 : i32 to index
    %c0_124 = arith.constant 0 : index
    %c0_125 = arith.constant 0 : index
    %395 = vector.load %arg15[%394, %c0_124, %c0_125] : memref<8x8x512xf32, #tpu.memory_space<vmem>>, vector<1x8x512xf32>
    %396 = vector.shape_cast %395 : vector<1x8x512xf32> to vector<8x512xf32>
    %397 = arith.truncf %388 : vector<8x128xf32> to vector<8x128xbf16>
    %cst_126 = arith.constant dense<0.000000e+00> : vector<8x512xf32>
    %398 = tpu.matmul %397, %317, %cst_126 {dimension_numbers = #tpu.dot_dimension_numbers<[1], [0], [0], [1], [0, 0, 1, 1], [], []>} : vector<8x128xbf16>, vector<128x512xbf16>, vector<8x512xf32> -> vector<8x512xf32>
    %399 = arith.addf %396, %398 : vector<8x512xf32>
    %400 = vector.extract_strided_slice %399 {offsets = [0, 0], sizes = [8, 128], strides = [1, 1]} : vector<8x512xf32> to vector<8x128xf32>
    %401 = arith.negf %400 : vector<8x128xf32>
    %402 = math.exp %401 : vector<8x128xf32>
    %cst_127 = arith.constant 1.000000e+00 : f32
    %403 = vector.broadcast %cst_127 : f32 to vector<8x128xf32>
    %404 = arith.addf %403, %402 : vector<8x128xf32>
    %405 = arith.divf %403, %404 : vector<8x128xf32>
    %406 = vector.extract_strided_slice %399 {offsets = [0, 128], sizes = [8, 128], strides = [1, 1]} : vector<8x512xf32> to vector<8x128xf32>
    %407 = arith.negf %406 : vector<8x128xf32>
    %408 = math.exp %407 : vector<8x128xf32>
    %cst_128 = arith.constant 1.000000e+00 : f32
    %409 = vector.broadcast %cst_128 : f32 to vector<8x128xf32>
    %410 = arith.addf %409, %408 : vector<8x128xf32>
    %411 = arith.divf %409, %410 : vector<8x128xf32>
    %412 = vector.extract_strided_slice %399 {offsets = [0, 256], sizes = [8, 128], strides = [1, 1]} : vector<8x512xf32> to vector<8x128xf32>
    %413 = math.tanh %412 : vector<8x128xf32>
    %414 = vector.extract_strided_slice %399 {offsets = [0, 384], sizes = [8, 128], strides = [1, 1]} : vector<8x512xf32> to vector<8x128xf32>
    %415 = arith.negf %414 : vector<8x128xf32>
    %416 = math.exp %415 : vector<8x128xf32>
    %cst_129 = arith.constant 1.000000e+00 : f32
    %417 = vector.broadcast %cst_129 : f32 to vector<8x128xf32>
    %418 = arith.addf %417, %416 : vector<8x128xf32>
    %419 = arith.divf %417, %418 : vector<8x128xf32>
    %420 = arith.mulf %411, %386 : vector<8x128xf32>
    %421 = arith.mulf %405, %413 : vector<8x128xf32>
    %422 = arith.addf %420, %421 : vector<8x128xf32>
    %423 = math.tanh %422 : vector<8x128xf32>
    %424 = arith.mulf %419, %423 : vector<8x128xf32>
    %425 = arith.truncf %424 : vector<8x128xf32> to vector<8x128xbf16>
    %426 = arith.index_cast %c2_i32_123 : i32 to index
    %c0_130 = arith.constant 0 : index
    %c0_131 = arith.constant 0 : index
    %427 = vector.load %arg14[%426, %c0_130, %c0_131] : memref<8x8x128xbf16, #tpu.memory_space<vmem>>, vector<1x8x128xbf16>
    %428 = vector.shape_cast %427 : vector<1x8x128xbf16> to vector<8x128xbf16>
    %429 = vector.shape_cast %425 : vector<8x128xbf16> to vector<1x8x128xbf16>
    tpu.vector_store %arg14[%426, %c0_130, %c0_131], %429 {strides = array<i32>} : memref<8x8x128xbf16, #tpu.memory_space<vmem>>, vector<1x8x128xbf16>,
    %c3_i32_132 = arith.constant 3 : i32
    %430 = arith.index_cast %c3_i32_132 : i32 to index
    %c0_133 = arith.constant 0 : index
    %c0_134 = arith.constant 0 : index
    %431 = vector.load %arg15[%430, %c0_133, %c0_134] : memref<8x8x512xf32, #tpu.memory_space<vmem>>, vector<1x8x512xf32>
    %432 = vector.shape_cast %431 : vector<1x8x512xf32> to vector<8x512xf32>
    %433 = arith.truncf %424 : vector<8x128xf32> to vector<8x128xbf16>
    %cst_135 = arith.constant dense<0.000000e+00> : vector<8x512xf32>
    %434 = tpu.matmul %433, %317, %cst_135 {dimension_numbers = #tpu.dot_dimension_numbers<[1], [0], [0], [1], [0, 0, 1, 1], [], []>} : vector<8x128xbf16>, vector<128x512xbf16>, vector<8x512xf32> -> vector<8x512xf32>
    %435 = arith.addf %432, %434 : vector<8x512xf32>
    %436 = vector.extract_strided_slice %435 {offsets = [0, 0], sizes = [8, 128], strides = [1, 1]} : vector<8x512xf32> to vector<8x128xf32>
    %437 = arith.negf %436 : vector<8x128xf32>
    %438 = math.exp %437 : vector<8x128xf32>
    %cst_136 = arith.constant 1.000000e+00 : f32
    %439 = vector.broadcast %cst_136 : f32 to vector<8x128xf32>
    %440 = arith.addf %439, %438 : vector<8x128xf32>
    %441 = arith.divf %439, %440 : vector<8x128xf32>
    %442 = vector.extract_strided_slice %435 {offsets = [0, 128], sizes = [8, 128], strides = [1, 1]} : vector<8x512xf32> to vector<8x128xf32>
    %443 = arith.negf %442 : vector<8x128xf32>
    %444 = math.exp %443 : vector<8x128xf32>
    %cst_137 = arith.constant 1.000000e+00 : f32
    %445 = vector.broadcast %cst_137 : f32 to vector<8x128xf32>
    %446 = arith.addf %445, %444 : vector<8x128xf32>
    %447 = arith.divf %445, %446 : vector<8x128xf32>
    %448 = vector.extract_strided_slice %435 {offsets = [0, 256], sizes = [8, 128], strides = [1, 1]} : vector<8x512xf32> to vector<8x128xf32>
    %449 = math.tanh %448 : vector<8x128xf32>
    %450 = vector.extract_strided_slice %435 {offsets = [0, 384], sizes = [8, 128], strides = [1, 1]} : vector<8x512xf32> to vector<8x128xf32>
    %451 = arith.negf %450 : vector<8x128xf32>
    %452 = math.exp %451 : vector<8x128xf32>
    %cst_138 = arith.constant 1.000000e+00 : f32
    %453 = vector.broadcast %cst_138 : f32 to vector<8x128xf32>
    %454 = arith.addf %453, %452 : vector<8x128xf32>
    %455 = arith.divf %453, %454 : vector<8x128xf32>
    %456 = arith.mulf %447, %422 : vector<8x128xf32>
    %457 = arith.mulf %441, %449 : vector<8x128xf32>
    %458 = arith.addf %456, %457 : vector<8x128xf32>
    %459 = math.tanh %458 : vector<8x128xf32>
    %460 = arith.mulf %455, %459 : vector<8x128xf32>
    %461 = arith.truncf %460 : vector<8x128xf32> to vector<8x128xbf16>
    %462 = arith.index_cast %c3_i32_132 : i32 to index
    %c0_139 = arith.constant 0 : index
    %c0_140 = arith.constant 0 : index
    %463 = vector.load %arg14[%462, %c0_139, %c0_140] : memref<8x8x128xbf16, #tpu.memory_space<vmem>>, vector<1x8x128xbf16>
    %464 = vector.shape_cast %463 : vector<1x8x128xbf16> to vector<8x128xbf16>
    %465 = vector.shape_cast %461 : vector<8x128xbf16> to vector<1x8x128xbf16>
    tpu.vector_store %arg14[%462, %c0_139, %c0_140], %465 {strides = array<i32>} : memref<8x8x128xbf16, #tpu.memory_space<vmem>>, vector<1x8x128xbf16>,
    %c4_i32_141 = arith.constant 4 : i32
    %466 = arith.index_cast %c4_i32_141 : i32 to index
    %c0_142 = arith.constant 0 : index
    %c0_143 = arith.constant 0 : index
    %467 = vector.load %arg15[%466, %c0_142, %c0_143] : memref<8x8x512xf32, #tpu.memory_space<vmem>>, vector<1x8x512xf32>
    %468 = vector.shape_cast %467 : vector<1x8x512xf32> to vector<8x512xf32>
    %469 = arith.truncf %460 : vector<8x128xf32> to vector<8x128xbf16>
    %cst_144 = arith.constant dense<0.000000e+00> : vector<8x512xf32>
    %470 = tpu.matmul %469, %317, %cst_144 {dimension_numbers = #tpu.dot_dimension_numbers<[1], [0], [0], [1], [0, 0, 1, 1], [], []>} : vector<8x128xbf16>, vector<128x512xbf16>, vector<8x512xf32> -> vector<8x512xf32>
    %471 = arith.addf %468, %470 : vector<8x512xf32>
    %472 = vector.extract_strided_slice %471 {offsets = [0, 0], sizes = [8, 128], strides = [1, 1]} : vector<8x512xf32> to vector<8x128xf32>
    %473 = arith.negf %472 : vector<8x128xf32>
    %474 = math.exp %473 : vector<8x128xf32>
    %cst_145 = arith.constant 1.000000e+00 : f32
    %475 = vector.broadcast %cst_145 : f32 to vector<8x128xf32>
    %476 = arith.addf %475, %474 : vector<8x128xf32>
    %477 = arith.divf %475, %476 : vector<8x128xf32>
    %478 = vector.extract_strided_slice %471 {offsets = [0, 128], sizes = [8, 128], strides = [1, 1]} : vector<8x512xf32> to vector<8x128xf32>
    %479 = arith.negf %478 : vector<8x128xf32>
    %480 = math.exp %479 : vector<8x128xf32>
    %cst_146 = arith.constant 1.000000e+00 : f32
    %481 = vector.broadcast %cst_146 : f32 to vector<8x128xf32>
    %482 = arith.addf %481, %480 : vector<8x128xf32>
    %483 = arith.divf %481, %482 : vector<8x128xf32>
    %484 = vector.extract_strided_slice %471 {offsets = [0, 256], sizes = [8, 128], strides = [1, 1]} : vector<8x512xf32> to vector<8x128xf32>
    %485 = math.tanh %484 : vector<8x128xf32>
    %486 = vector.extract_strided_slice %471 {offsets = [0, 384], sizes = [8, 128], strides = [1, 1]} : vector<8x512xf32> to vector<8x128xf32>
    %487 = arith.negf %486 : vector<8x128xf32>
    %488 = math.exp %487 : vector<8x128xf32>
    %cst_147 = arith.constant 1.000000e+00 : f32
    %489 = vector.broadcast %cst_147 : f32 to vector<8x128xf32>
    %490 = arith.addf %489, %488 : vector<8x128xf32>
    %491 = arith.divf %489, %490 : vector<8x128xf32>
    %492 = arith.mulf %483, %458 : vector<8x128xf32>
    %493 = arith.mulf %477, %485 : vector<8x128xf32>
    %494 = arith.addf %492, %493 : vector<8x128xf32>
    %495 = math.tanh %494 : vector<8x128xf32>
    %496 = arith.mulf %491, %495 : vector<8x128xf32>
    %497 = arith.truncf %496 : vector<8x128xf32> to vector<8x128xbf16>
    %498 = arith.index_cast %c4_i32_141 : i32 to index
    %c0_148 = arith.constant 0 : index
    %c0_149 = arith.constant 0 : index
    %499 = vector.load %arg14[%498, %c0_148, %c0_149] : memref<8x8x128xbf16, #tpu.memory_space<vmem>>, vector<1x8x128xbf16>
    %500 = vector.shape_cast %499 : vector<1x8x128xbf16> to vector<8x128xbf16>
    %501 = vector.shape_cast %497 : vector<8x128xbf16> to vector<1x8x128xbf16>
    tpu.vector_store %arg14[%498, %c0_148, %c0_149], %501 {strides = array<i32>} : memref<8x8x128xbf16, #tpu.memory_space<vmem>>, vector<1x8x128xbf16>,
    %c5_i32_150 = arith.constant 5 : i32
    %502 = arith.index_cast %c5_i32_150 : i32 to index
    %c0_151 = arith.constant 0 : index
    %c0_152 = arith.constant 0 : index
    %503 = vector.load %arg15[%502, %c0_151, %c0_152] : memref<8x8x512xf32, #tpu.memory_space<vmem>>, vector<1x8x512xf32>
    %504 = vector.shape_cast %503 : vector<1x8x512xf32> to vector<8x512xf32>
    %505 = arith.truncf %496 : vector<8x128xf32> to vector<8x128xbf16>
    %cst_153 = arith.constant dense<0.000000e+00> : vector<8x512xf32>
    %506 = tpu.matmul %505, %317, %cst_153 {dimension_numbers = #tpu.dot_dimension_numbers<[1], [0], [0], [1], [0, 0, 1, 1], [], []>} : vector<8x128xbf16>, vector<128x512xbf16>, vector<8x512xf32> -> vector<8x512xf32>
    %507 = arith.addf %504, %506 : vector<8x512xf32>
    %508 = vector.extract_strided_slice %507 {offsets = [0, 0], sizes = [8, 128], strides = [1, 1]} : vector<8x512xf32> to vector<8x128xf32>
    %509 = arith.negf %508 : vector<8x128xf32>
    %510 = math.exp %509 : vector<8x128xf32>
    %cst_154 = arith.constant 1.000000e+00 : f32
    %511 = vector.broadcast %cst_154 : f32 to vector<8x128xf32>
    %512 = arith.addf %511, %510 : vector<8x128xf32>
    %513 = arith.divf %511, %512 : vector<8x128xf32>
    %514 = vector.extract_strided_slice %507 {offsets = [0, 128], sizes = [8, 128], strides = [1, 1]} : vector<8x512xf32> to vector<8x128xf32>
    %515 = arith.negf %514 : vector<8x128xf32>
    %516 = math.exp %515 : vector<8x128xf32>
    %cst_155 = arith.constant 1.000000e+00 : f32
    %517 = vector.broadcast %cst_155 : f32 to vector<8x128xf32>
    %518 = arith.addf %517, %516 : vector<8x128xf32>
    %519 = arith.divf %517, %518 : vector<8x128xf32>
    %520 = vector.extract_strided_slice %507 {offsets = [0, 256], sizes = [8, 128], strides = [1, 1]} : vector<8x512xf32> to vector<8x128xf32>
    %521 = math.tanh %520 : vector<8x128xf32>
    %522 = vector.extract_strided_slice %507 {offsets = [0, 384], sizes = [8, 128], strides = [1, 1]} : vector<8x512xf32> to vector<8x128xf32>
    %523 = arith.negf %522 : vector<8x128xf32>
    %524 = math.exp %523 : vector<8x128xf32>
    %cst_156 = arith.constant 1.000000e+00 : f32
    %525 = vector.broadcast %cst_156 : f32 to vector<8x128xf32>
    %526 = arith.addf %525, %524 : vector<8x128xf32>
    %527 = arith.divf %525, %526 : vector<8x128xf32>
    %528 = arith.mulf %519, %494 : vector<8x128xf32>
    %529 = arith.mulf %513, %521 : vector<8x128xf32>
    %530 = arith.addf %528, %529 : vector<8x128xf32>
    %531 = math.tanh %530 : vector<8x128xf32>
    %532 = arith.mulf %527, %531 : vector<8x128xf32>
    %533 = arith.truncf %532 : vector<8x128xf32> to vector<8x128xbf16>
    %534 = arith.index_cast %c5_i32_150 : i32 to index
    %c0_157 = arith.constant 0 : index
    %c0_158 = arith.constant 0 : index
    %535 = vector.load %arg14[%534, %c0_157, %c0_158] : memref<8x8x128xbf16, #tpu.memory_space<vmem>>, vector<1x8x128xbf16>
    %536 = vector.shape_cast %535 : vector<1x8x128xbf16> to vector<8x128xbf16>
    %537 = vector.shape_cast %533 : vector<8x128xbf16> to vector<1x8x128xbf16>
    tpu.vector_store %arg14[%534, %c0_157, %c0_158], %537 {strides = array<i32>} : memref<8x8x128xbf16, #tpu.memory_space<vmem>>, vector<1x8x128xbf16>,
    %c6_i32_159 = arith.constant 6 : i32
    %538 = arith.index_cast %c6_i32_159 : i32 to index
    %c0_160 = arith.constant 0 : index
    %c0_161 = arith.constant 0 : index
    %539 = vector.load %arg15[%538, %c0_160, %c0_161] : memref<8x8x512xf32, #tpu.memory_space<vmem>>, vector<1x8x512xf32>
    %540 = vector.shape_cast %539 : vector<1x8x512xf32> to vector<8x512xf32>
    %541 = arith.truncf %532 : vector<8x128xf32> to vector<8x128xbf16>
    %cst_162 = arith.constant dense<0.000000e+00> : vector<8x512xf32>
    %542 = tpu.matmul %541, %317, %cst_162 {dimension_numbers = #tpu.dot_dimension_numbers<[1], [0], [0], [1], [0, 0, 1, 1], [], []>} : vector<8x128xbf16>, vector<128x512xbf16>, vector<8x512xf32> -> vector<8x512xf32>
    %543 = arith.addf %540, %542 : vector<8x512xf32>
    %544 = vector.extract_strided_slice %543 {offsets = [0, 0], sizes = [8, 128], strides = [1, 1]} : vector<8x512xf32> to vector<8x128xf32>
    %545 = arith.negf %544 : vector<8x128xf32>
    %546 = math.exp %545 : vector<8x128xf32>
    %cst_163 = arith.constant 1.000000e+00 : f32
    %547 = vector.broadcast %cst_163 : f32 to vector<8x128xf32>
    %548 = arith.addf %547, %546 : vector<8x128xf32>
    %549 = arith.divf %547, %548 : vector<8x128xf32>
    %550 = vector.extract_strided_slice %543 {offsets = [0, 128], sizes = [8, 128], strides = [1, 1]} : vector<8x512xf32> to vector<8x128xf32>
    %551 = arith.negf %550 : vector<8x128xf32>
    %552 = math.exp %551 : vector<8x128xf32>
    %cst_164 = arith.constant 1.000000e+00 : f32
    %553 = vector.broadcast %cst_164 : f32 to vector<8x128xf32>
    %554 = arith.addf %553, %552 : vector<8x128xf32>
    %555 = arith.divf %553, %554 : vector<8x128xf32>
    %556 = vector.extract_strided_slice %543 {offsets = [0, 256], sizes = [8, 128], strides = [1, 1]} : vector<8x512xf32> to vector<8x128xf32>
    %557 = math.tanh %556 : vector<8x128xf32>
    %558 = vector.extract_strided_slice %543 {offsets = [0, 384], sizes = [8, 128], strides = [1, 1]} : vector<8x512xf32> to vector<8x128xf32>
    %559 = arith.negf %558 : vector<8x128xf32>
    %560 = math.exp %559 : vector<8x128xf32>
    %cst_165 = arith.constant 1.000000e+00 : f32
    %561 = vector.broadcast %cst_165 : f32 to vector<8x128xf32>
    %562 = arith.addf %561, %560 : vector<8x128xf32>
    %563 = arith.divf %561, %562 : vector<8x128xf32>
    %564 = arith.mulf %555, %530 : vector<8x128xf32>
    %565 = arith.mulf %549, %557 : vector<8x128xf32>
    %566 = arith.addf %564, %565 : vector<8x128xf32>
    %567 = math.tanh %566 : vector<8x128xf32>
    %568 = arith.mulf %563, %567 : vector<8x128xf32>
    %569 = arith.truncf %568 : vector<8x128xf32> to vector<8x128xbf16>
    %570 = arith.index_cast %c6_i32_159 : i32 to index
    %c0_166 = arith.constant 0 : index
    %c0_167 = arith.constant 0 : index
    %571 = vector.load %arg14[%570, %c0_166, %c0_167] : memref<8x8x128xbf16, #tpu.memory_space<vmem>>, vector<1x8x128xbf16>
    %572 = vector.shape_cast %571 : vector<1x8x128xbf16> to vector<8x128xbf16>
    %573 = vector.shape_cast %569 : vector<8x128xbf16> to vector<1x8x128xbf16>
    tpu.vector_store %arg14[%570, %c0_166, %c0_167], %573 {strides = array<i32>} : memref<8x8x128xbf16, #tpu.memory_space<vmem>>, vector<1x8x128xbf16>,
    %c7_i32_168 = arith.constant 7 : i32
    %574 = arith.index_cast %c7_i32_168 : i32 to index
    %c0_169 = arith.constant 0 : index
    %c0_170 = arith.constant 0 : index
    %575 = vector.load %arg15[%574, %c0_169, %c0_170] : memref<8x8x512xf32, #tpu.memory_space<vmem>>, vector<1x8x512xf32>
    %576 = vector.shape_cast %575 : vector<1x8x512xf32> to vector<8x512xf32>
    %577 = arith.truncf %568 : vector<8x128xf32> to vector<8x128xbf16>
    %cst_171 = arith.constant dense<0.000000e+00> : vector<8x512xf32>
    %578 = tpu.matmul %577, %317, %cst_171 {dimension_numbers = #tpu.dot_dimension_numbers<[1], [0], [0], [1], [0, 0, 1, 1], [], []>} : vector<8x128xbf16>, vector<128x512xbf16>, vector<8x512xf32> -> vector<8x512xf32>
    %579 = arith.addf %576, %578 : vector<8x512xf32>
    %580 = vector.extract_strided_slice %579 {offsets = [0, 0], sizes = [8, 128], strides = [1, 1]} : vector<8x512xf32> to vector<8x128xf32>
    %581 = arith.negf %580 : vector<8x128xf32>
    %582 = math.exp %581 : vector<8x128xf32>
    %cst_172 = arith.constant 1.000000e+00 : f32
    %583 = vector.broadcast %cst_172 : f32 to vector<8x128xf32>
    %584 = arith.addf %583, %582 : vector<8x128xf32>
    %585 = arith.divf %583, %584 : vector<8x128xf32>
    %586 = vector.extract_strided_slice %579 {offsets = [0, 128], sizes = [8, 128], strides = [1, 1]} : vector<8x512xf32> to vector<8x128xf32>
    %587 = arith.negf %586 : vector<8x128xf32>
    %588 = math.exp %587 : vector<8x128xf32>
    %cst_173 = arith.constant 1.000000e+00 : f32
    %589 = vector.broadcast %cst_173 : f32 to vector<8x128xf32>
    %590 = arith.addf %589, %588 : vector<8x128xf32>
    %591 = arith.divf %589, %590 : vector<8x128xf32>
    %592 = vector.extract_strided_slice %579 {offsets = [0, 256], sizes = [8, 128], strides = [1, 1]} : vector<8x512xf32> to vector<8x128xf32>
    %593 = math.tanh %592 : vector<8x128xf32>
    %594 = vector.extract_strided_slice %579 {offsets = [0, 384], sizes = [8, 128], strides = [1, 1]} : vector<8x512xf32> to vector<8x128xf32>
    %595 = arith.negf %594 : vector<8x128xf32>
    %596 = math.exp %595 : vector<8x128xf32>
    %cst_174 = arith.constant 1.000000e+00 : f32
    %597 = vector.broadcast %cst_174 : f32 to vector<8x128xf32>
    %598 = arith.addf %597, %596 : vector<8x128xf32>
    %599 = arith.divf %597, %598 : vector<8x128xf32>
    %600 = arith.mulf %591, %566 : vector<8x128xf32>
    %601 = arith.mulf %585, %593 : vector<8x128xf32>
    %602 = arith.addf %600, %601 : vector<8x128xf32>
    %603 = math.tanh %602 : vector<8x128xf32>
    %604 = arith.mulf %599, %603 : vector<8x128xf32>
    %605 = arith.truncf %604 : vector<8x128xf32> to vector<8x128xbf16>
    %606 = arith.index_cast %c7_i32_168 : i32 to index
    %c0_175 = arith.constant 0 : index
    %c0_176 = arith.constant 0 : index
    %607 = vector.load %arg14[%606, %c0_175, %c0_176] : memref<8x8x128xbf16, #tpu.memory_space<vmem>>, vector<1x8x128xbf16>
    %608 = vector.shape_cast %607 : vector<1x8x128xbf16> to vector<8x128xbf16>
    %609 = vector.shape_cast %605 : vector<8x128xbf16> to vector<1x8x128xbf16>
    tpu.vector_store %arg14[%606, %c0_175, %c0_176], %609 {strides = array<i32>} : memref<8x8x128xbf16, #tpu.memory_space<vmem>>, vector<1x8x128xbf16>,
    %c8_i32_177 = arith.constant 8 : i32
    %c1_178 = arith.constant 1 : index
    %c0_179 = arith.constant 0 : index
    %c0_180 = arith.constant 0 : index
    %610 = vector.load %arg12[%c1_178, %c0_179, %c0_180] : memref<2x8x128xf32, #tpu.memory_space<vmem>>, vector<1x8x128xf32>
    %611 = vector.shape_cast %610 : vector<1x8x128xf32> to vector<8x128xf32>
    %612 = vector.shape_cast %604 : vector<8x128xf32> to vector<1x8x128xf32>
    tpu.vector_store %arg12[%c1_178, %c0_179, %c0_180], %612 {strides = array<i32>} : memref<2x8x128xf32, #tpu.memory_space<vmem>>, vector<1x8x128xf32>,
    %c1_181 = arith.constant 1 : index
    %c0_182 = arith.constant 0 : index
    %c0_183 = arith.constant 0 : index
    %613 = vector.load %arg13[%c1_181, %c0_182, %c0_183] : memref<2x8x128xf32, #tpu.memory_space<vmem>>, vector<1x8x128xf32>
    %614 = vector.shape_cast %613 : vector<1x8x128xf32> to vector<8x128xf32>
    %615 = vector.shape_cast %602 : vector<8x128xf32> to vector<1x8x128xf32>
    tpu.vector_store %arg13[%c1_181, %c0_182, %c0_183], %615 {strides = array<i32>} : memref<2x8x128xf32, #tpu.memory_space<vmem>>, vector<1x8x128xf32>,
    %c0_184 = arith.constant 0 : index
    %c0_185 = arith.constant 0 : index
    %c0_186 = arith.constant 0 : index
    %616 = vector.load %arg14[%c0_184, %c0_185, %c0_186] : memref<8x8x128xbf16, #tpu.memory_space<vmem>>, vector<8x8x128xbf16>
    %617 = vector.shape_cast %616 : vector<8x8x128xbf16> to vector<64x128xbf16>
    %c0_187 = arith.constant 0 : index
    %c0_188 = arith.constant 0 : index
    %618 = vector.load %arg9[%c0_187, %c0_188] : memref<128x128xbf16, #tpu.memory_space<vmem>>, vector<128x128xbf16>
    %cst_189 = arith.constant dense<0.000000e+00> : vector<64x128xf32>
    %619 = tpu.matmul %617, %618, %cst_189 {dimension_numbers = #tpu.dot_dimension_numbers<[1], [0], [0], [1], [0, 0, 1, 1], [], []>} : vector<64x128xbf16>, vector<128x128xbf16>, vector<64x128xf32> -> vector<64x128xf32>
    %c0_190 = arith.constant 0 : index
    %c0_191 = arith.constant 0 : index
    %620 = vector.load %arg10[%c0_190, %c0_191] : memref<1x128xf32, #tpu.memory_space<vmem>>, vector<1x128xf32>
    %621 = vector.broadcast %620 : vector<1x128xf32> to vector<64x128xf32>
    %622 = arith.addf %619, %621 : vector<64x128xf32>
    %623 = vector.shape_cast %622 : vector<64x128xf32> to vector<8x8x128xf32>
    %c0_192 = arith.constant 0 : index
    %c0_193 = arith.constant 0 : index
    %c0_194 = arith.constant 0 : index
    %624 = vector.load %arg11[%c0_192, %c0_193, %c0_194] : memref<8x8x128xf32, #tpu.memory_space<vmem>>, vector<8x8x128xf32>
    tpu.vector_store %arg11[%c0_192, %c0_193, %c0_194], %623 {strides = array<i32>} : memref<8x8x128xf32, #tpu.memory_space<vmem>>, vector<8x8x128xf32>,
    return
  }
}

</mosaic_0001>

<llo_original>
// kernel: rnn_forward.1
$region0: #{rnn_forward.1}
  #allocation0 [shape = 'u32[]', space=smem, size = 0x4, offset = 0x4, fixed_abs, tag = 'smem constant byte address 0x4 - core index']
  #allocation1 [shape = 'u32[144,128]{1,0:T(1,128)}', space=vmem, size = 0x12000, scoped, tag = 'internal scratch']
  #allocation2 [shape = 'bf16[8,8,128]{2,1,0:T(8,128)(2,1)}', space=vmem, size = 0x4000, scoped, tag = 'scratch operand']
  #allocation3 [shape = 'f32[8,8,512]{2,1,0:T(8,128)}', space=vmem, size = 0x20000, scoped, tag = 'scratch operand']
  %s0 = inlined_call_operand.vmem [shape: bf16[8,8,128], index: 0, kind: input, shape index: {}]
  %s1 = inlined_call_operand.vmem [shape: f32[2,8,128], index: 1, kind: input, shape index: {}, may-alias: {1,12}]
  %s2 = inlined_call_operand.vmem [shape: f32[2,8,128], index: 2, kind: input, shape index: {}, may-alias: {2,13}]
  %s3 = inlined_call_operand.vmem [shape: bf16[128,512], index: 3, kind: input, shape index: {}]
  %s4 = inlined_call_operand.vmem [shape: bf16[128,512], index: 4, kind: input, shape index: {}]
  %s5 = inlined_call_operand.vmem [shape: f32[1,512], index: 5, kind: input, shape index: {}]
  %s6 = inlined_call_operand.vmem [shape: bf16[128,512], index: 6, kind: input, shape index: {}]
  %s7 = inlined_call_operand.vmem [shape: bf16[128,512], index: 7, kind: input, shape index: {}]
  %s8 = inlined_call_operand.vmem [shape: f32[1,512], index: 8, kind: input, shape index: {}]
  %s9 = inlined_call_operand.vmem [shape: bf16[128,128], index: 9, kind: input, shape index: {}]
  %s10 = inlined_call_operand.vmem [shape: f32[1,128], index: 10, kind: input, shape index: {}]
  %s11 = inlined_call_operand.vmem [shape: f32[8,8,128], index: 11, kind: output, shape index: {0}]
  %s12 = inlined_call_operand.vmem [shape: f32[2,8,128], index: 12, kind: output, shape index: {1}, may-alias: {1,12}]
  %s13 = inlined_call_operand.vmem [shape: f32[2,8,128], index: 13, kind: output, shape index: {2}, may-alias: {2,13}]
  %14 = xla_tuple %s11, %s12, %s13
  %s15 = sld [smem:[#allocation0]]
  $region70: #{rnn_forward.1} parent=0
    _
  %s17 = ssub.s32 1, %s15
  %s18 = scalar_select 0, %s17, %s15
  // Predicated region
  $region2: #{rnn_forward.1} parent=0 // pred_check
    _
  $region3: #{rnn_forward.1} parent=0 // pred_check_branch
    %20 = sbr.rel (0) target = $region5
  $region4: #{rnn_forward.1} parent=0 // pred_region
    _
  $region5: #{rnn_forward.1} parent=0 // pred_fallthru
    _
  // Predicated region
  $region6: #{rnn_forward.1} parent=0 // pred_check
    _
  $region7: #{rnn_forward.1} parent=0 // pred_check_branch
    %22 = sbr.rel (0) target = $region9
  $region8: #{rnn_forward.1} parent=0 // pred_region
    _
  $region9: #{rnn_forward.1} parent=0 // pred_fallthru
    _
  // Predicated region
  $region10: #{rnn_forward.1} parent=0 // pred_check
    _
  $region11: #{rnn_forward.1} parent=0 // pred_check_branch
    %24 = sbr.rel (0) target = $region13
  $region12: #{rnn_forward.1} parent=0 // pred_region
    _
  $region13: #{rnn_forward.1} parent=0 // pred_fallthru
    _
  // Predicated region
  $region14: #{rnn_forward.1} parent=0 // pred_check
    _
  $region15: #{rnn_forward.1} parent=0 // pred_check_branch
    %26 = sbr.rel (0) target = $region17
  $region16: #{rnn_forward.1} parent=0 // pred_region
    _
  $region17: #{rnn_forward.1} parent=0 // pred_fallthru
    _
  // Predicated region
  $region18: #{rnn_forward.1} parent=0 // pred_check
    _
  $region19: #{rnn_forward.1} parent=0 // pred_check_branch
    %28 = sbr.rel (0) target = $region21
  $region20: #{rnn_forward.1} parent=0 // pred_region
    _
  $region21: #{rnn_forward.1} parent=0 // pred_fallthru
    _
  // Predicated region
  $region22: #{rnn_forward.1} parent=0 // pred_check
    _
  $region23: #{rnn_forward.1} parent=0 // pred_check_branch
    %30 = sbr.rel (0) target = $region25
  $region24: #{rnn_forward.1} parent=0 // pred_region
    _
  $region25: #{rnn_forward.1} parent=0 // pred_fallthru
    _
  // Predicated region
  $region26: #{rnn_forward.1} parent=0 // pred_check
    _
  $region27: #{rnn_forward.1} parent=0 // pred_check_branch
    %32 = sbr.rel (0) target = $region29
  $region28: #{rnn_forward.1} parent=0 // pred_region
    _
  $region29: #{rnn_forward.1} parent=0 // pred_fallthru
    _
  // Predicated region
  $region30: #{rnn_forward.1} parent=0 // pred_check
    _
  $region31: #{rnn_forward.1} parent=0 // pred_check_branch
    %34 = sbr.rel (0) target = $region33
  $region32: #{rnn_forward.1} parent=0 // pred_region
    _
  $region33: #{rnn_forward.1} parent=0 // pred_fallthru
    _
  // Predicated region
  $region34: #{rnn_forward.1} parent=0 // pred_check
    _
  $region35: #{rnn_forward.1} parent=0 // pred_check_branch
    %36 = sbr.rel (0) target = $region37
  $region36: #{rnn_forward.1} parent=0 // pred_region
    _
  $region37: #{rnn_forward.1} parent=0 // pred_fallthru
    _
  // Predicated region
  $region38: #{rnn_forward.1} parent=0 // pred_check
    _
  $region39: #{rnn_forward.1} parent=0 // pred_check_branch
    %38 = sbr.rel (0) target = $region41
  $region40: #{rnn_forward.1} parent=0 // pred_region
    _
  $region41: #{rnn_forward.1} parent=0 // pred_fallthru
    _
  // Predicated region
  $region42: #{rnn_forward.1} parent=0 // pred_check
    _
  $region43: #{rnn_forward.1} parent=0 // pred_check_branch
    %40 = sbr.rel (0) target = $region45
  $region44: #{rnn_forward.1} parent=0 // pred_region
    _
  $region45: #{rnn_forward.1} parent=0 // pred_fallthru
    _
  %v42 = vld [vmem:[%s0] sm:$0xf]
  %v43 = vld [vmem:[%s0 + $0x4] sm:$0xf]
  %v44 = vld [vmem:[%s0 + $0x8] sm:$0xf]
  %v45 = vld [vmem:[%s0 + $0xc] sm:$0xf]
  %v46 = vld [vmem:[%s0 + $0x10] sm:$0xf]
  %v47 = vld [vmem:[%s0 + $0x14] sm:$0xf]
  %v48 = vld [vmem:[%s0 + $0x18] sm:$0xf]
  %v49 = vld [vmem:[%s0 + $0x1c] sm:$0xf]
  %v50 = vld [vmem:[%s3] sm:$0xff]
  %v51 = vld [vmem:[%s3 + $0x8] sm:$0xff]
  %v52 = vld [vmem:[%s3 + $0x10] sm:$0xff]
  %v53 = vld [vmem:[%s3 + $0x18] sm:$0xff]
  %v54 = vld [vmem:[%s3 + $0x20] sm:$0xff]
  %v55 = vld [vmem:[%s3 + $0x28] sm:$0xff]
  %v56 = vld [vmem:[%s3 + $0x30] sm:$0xff]
  %v57 = vld [vmem:[%s3 + $0x38] sm:$0xff]
  %v58 = vld [vmem:[%s3 + $0x40] sm:$0xff]
  %v59 = vld [vmem:[%s3 + $0x48] sm:$0xff]
  %v60 = vld [vmem:[%s3 + $0x50] sm:$0xff]
  %v61 = vld [vmem:[%s3 + $0x58] sm:$0xff]
  %v62 = vld [vmem:[%s3 + $0x60] sm:$0xff]
  %v63 = vld [vmem:[%s3 + $0x68] sm:$0xff]
  %v64 = vld [vmem:[%s3 + $0x70] sm:$0xff]
  %v65 = vld [vmem:[%s3 + $0x78] sm:$0xff]
  %v66 = vld [vmem:[%s3 + $0x80] sm:$0xff]
  %v67 = vld [vmem:[%s3 + $0x88] sm:$0xff]
  %v68 = vld [vmem:[%s3 + $0x90] sm:$0xff]
  %v69 = vld [vmem:[%s3 + $0x98] sm:$0xff]
  %v70 = vld [vmem:[%s3 + $0xa0] sm:$0xff]
  %v71 = vld [vmem:[%s3 + $0xa8] sm:$0xff]
  %v72 = vld [vmem:[%s3 + $0xb0] sm:$0xff]
  %v73 = vld [vmem:[%s3 + $0xb8] sm:$0xff]
  %v74 = vld [vmem:[%s3 + $0xc0] sm:$0xff]
  %v75 = vld [vmem:[%s3 + $0xc8] sm:$0xff]
  %v76 = vld [vmem:[%s3 + $0xd0] sm:$0xff]
  %v77 = vld [vmem:[%s3 + $0xd8] sm:$0xff]
  %v78 = vld [vmem:[%s3 + $0xe0] sm:$0xff]
  %v79 = vld [vmem:[%s3 + $0xe8] sm:$0xff]
  %v80 = vld [vmem:[%s3 + $0xf0] sm:$0xff]
  %v81 = vld [vmem:[%s3 + $0xf8] sm:$0xff]
  %v82 = vld [vmem:[%s5] sm:$0xf]
  %v84 = vlaneseq
  %v85 = vshrl.u32 %v84, 7
  %v86 = vsub.s32 0, %v85
  %v87 = vrot.slane %v82, %v86
  %v88 = vlaneseq
  %v89 = vshrl.u32 %v88, 7
  %v90 = vsub.s32 1, %v89
  %v91 = vrot.slane %v82, %v90
  %v92 = vlaneseq
  %v93 = vshrl.u32 %v92, 7
  %v94 = vsub.s32 2, %v93
  %v95 = vrot.slane %v82, %v94
  %v96 = vlaneseq
  %v97 = vshrl.u32 %v96, 7
  %v98 = vsub.s32 3, %v97
  %v99 = vrot.slane %v82, %v98
  %v112 = vunpack.c.l.b16 %v42
  %v113 = vunpack.c.l.b16 %v43
  %v114 = vunpack.c.l.b16 %v44
  %v115 = vunpack.c.l.b16 %v45
  %v116 = vunpack.c.l.b16 %v46
  %v117 = vunpack.c.l.b16 %v47
  %v118 = vunpack.c.l.b16 %v48
  %v119 = vunpack.c.l.b16 %v49
  %v120 = vpack.c.b16 %v113, %v112
  %v121 = vpack.c.b16 %v115, %v114
  %v122 = vpack.c.b16 %v117, %v116
  %v123 = vpack.c.b16 %v119, %v118
  %v160 = vunpack.c.l.b16 %v50
  %v161 = vunpack.c.h.b16 %v50
  %v162 = vunpack.c.l.b16 %v51
  %v163 = vunpack.c.h.b16 %v51
  %v164 = vunpack.c.l.b16 %v52
  %v165 = vunpack.c.h.b16 %v52
  %v166 = vunpack.c.l.b16 %v53
  %v167 = vunpack.c.h.b16 %v53
  %v168 = vunpack.c.l.b16 %v54
  %v169 = vunpack.c.h.b16 %v54
  %v170 = vunpack.c.l.b16 %v55
  %v171 = vunpack.c.h.b16 %v55
  %v172 = vunpack.c.l.b16 %v56
  %v173 = vunpack.c.h.b16 %v56
  %v174 = vunpack.c.l.b16 %v57
  %v175 = vunpack.c.h.b16 %v57
  %v176 = vunpack.c.l.b16 %v58
  %v177 = vunpack.c.h.b16 %v58
  %v178 = vunpack.c.l.b16 %v59
  %v179 = vunpack.c.h.b16 %v59
  %v180 = vunpack.c.l.b16 %v60
  %v181 = vunpack.c.h.b16 %v60
  %v182 = vunpack.c.l.b16 %v61
  %v183 = vunpack.c.h.b16 %v61
  %v184 = vunpack.c.l.b16 %v62
  %v185 = vunpack.c.h.b16 %v62
  %v186 = vunpack.c.l.b16 %v63
  %v187 = vunpack.c.h.b16 %v63
  %v188 = vunpack.c.l.b16 %v64
  %v189 = vunpack.c.h.b16 %v64
  %v190 = vunpack.c.l.b16 %v65
  %v191 = vunpack.c.h.b16 %v65
  %v192 = vunpack.c.l.b16 %v66
  %v193 = vunpack.c.h.b16 %v66
  %v194 = vunpack.c.l.b16 %v67
  %v195 = vunpack.c.h.b16 %v67
  %v196 = vunpack.c.l.b16 %v68
  %v197 = vunpack.c.h.b16 %v68
  %v198 = vunpack.c.l.b16 %v69
  %v199 = vunpack.c.h.b16 %v69
  %v200 = vunpack.c.l.b16 %v70
  %v201 = vunpack.c.h.b16 %v70
  %v202 = vunpack.c.l.b16 %v71
  %v203 = vunpack.c.h.b16 %v71
  %v204 = vunpack.c.l.b16 %v72
  %v205 = vunpack.c.h.b16 %v72
  %v206 = vunpack.c.l.b16 %v73
  %v207 = vunpack.c.h.b16 %v73
  %v208 = vunpack.c.l.b16 %v74
  %v209 = vunpack.c.h.b16 %v74
  %v210 = vunpack.c.l.b16 %v75
  %v211 = vunpack.c.h.b16 %v75
  %v212 = vunpack.c.l.b16 %v76
  %v213 = vunpack.c.h.b16 %v76
  %v214 = vunpack.c.l.b16 %v77
  %v215 = vunpack.c.h.b16 %v77
  %v216 = vunpack.c.l.b16 %v78
  %v217 = vunpack.c.h.b16 %v78
  %v218 = vunpack.c.l.b16 %v79
  %v219 = vunpack.c.h.b16 %v79
  %v220 = vunpack.c.l.b16 %v80
  %v221 = vunpack.c.h.b16 %v80
  %v222 = vunpack.c.l.b16 %v81
  %v223 = vunpack.c.h.b16 %v81
  %v224 = vpack.c.b16 %v164, %v160
  %v225 = vpack.c.b16 %v165, %v161
  %v226 = vpack.c.b16 %v166, %v162
  %v227 = vpack.c.b16 %v167, %v163
  %v228 = vpack.c.b16 %v172, %v168
  %v229 = vpack.c.b16 %v173, %v169
  %v230 = vpack.c.b16 %v174, %v170
  %v231 = vpack.c.b16 %v175, %v171
  %v232 = vpack.c.b16 %v180, %v176
  %v233 = vpack.c.b16 %v181, %v177
  %v234 = vpack.c.b16 %v182, %v178
  %v235 = vpack.c.b16 %v183, %v179
  %v236 = vpack.c.b16 %v188, %v184
  %v237 = vpack.c.b16 %v189, %v185
  %v238 = vpack.c.b16 %v190, %v186
  %v239 = vpack.c.b16 %v191, %v187
  %v240 = vpack.c.b16 %v196, %v192
  %v241 = vpack.c.b16 %v197, %v193
  %v242 = vpack.c.b16 %v198, %v194
  %v243 = vpack.c.b16 %v199, %v195
  %v244 = vpack.c.b16 %v204, %v200
  %v245 = vpack.c.b16 %v205, %v201
  %v246 = vpack.c.b16 %v206, %v202
  %v247 = vpack.c.b16 %v207, %v203
  %v248 = vpack.c.b16 %v212, %v208
  %v249 = vpack.c.b16 %v213, %v209
  %v250 = vpack.c.b16 %v214, %v210
  %v251 = vpack.c.b16 %v215, %v211
  %v252 = vpack.c.b16 %v220, %v216
  %v253 = vpack.c.b16 %v221, %v217
  %v254 = vpack.c.b16 %v222, %v218
  %v255 = vpack.c.b16 %v223, %v219
  %288 = vmatprep.subr.bf16.mxu0 %v225
  %289 = vmatpush1.bf16.msra.mxu0 %v224
  %290 = vmatprep.subr.bf16.mxu0 %v229
  %291 = vmatpush1.bf16.msra.mxu0 %v228
  %292 = vmatprep.subr.bf16.mxu0 %v233
  %293 = vmatpush1.bf16.msra.mxu0 %v232
  %294 = vmatprep.subr.bf16.mxu0 %v237
  %295 = vmatpush1.bf16.msra.mxu0 %v236
  %296 = vmatprep.subr.bf16.mxu0 %v241
  %297 = vmatpush1.bf16.msra.mxu0 %v240
  %298 = vmatprep.subr.bf16.mxu0 %v245
  %299 = vmatpush1.bf16.msra.mxu0 %v244
  %300 = vmatprep.subr.bf16.mxu0 %v249
  %301 = vmatpush1.bf16.msra.mxu0 %v248
  %302 = vmatprep.subr.bf16.mxu0 %v253
  %303 = vmatpush1.bf16.msra.mxu0 %v252
  %304 = vmatprep.subr.bf16.mxu0 0
  %305 = vmatpush1.bf16.msra.mxu0 0
  %306 = vmatprep.subr.bf16.mxu0 0
  %307 = vmatpush1.bf16.msra.mxu0 0
  %308 = vmatprep.subr.bf16.mxu0 0
  %309 = vmatpush1.bf16.msra.mxu0 0
  %310 = vmatprep.subr.bf16.mxu0 0
  %311 = vmatpush1.bf16.msra.mxu0 0
  %312 = vmatprep.subr.bf16.mxu0 0
  %313 = vmatpush1.bf16.msra.mxu0 0
  %314 = vmatprep.subr.bf16.mxu0 0
  %315 = vmatpush1.bf16.msra.mxu0 0
  %316 = vmatprep.subr.bf16.mxu0 0
  %317 = vmatpush1.bf16.msra.mxu0 0
  %318 = vmatprep.subr.bf16.mxu0 0
  %319 = vmatpush1.bf16.msra.mxu0 0
  %320 = vmatprep.mubr.bf16.mxu0 0
  %321 = vmatmul.mubr.bf16.gmra.mrb[0].mxu0 %v120
  %v322 = vpop.f32.mrb[0].mxu0
  %v323 = vadd.f32 %v87, %v322
  %v324 = vpop.f32.mrb[0].mxu0
  %v325 = vadd.f32 %v91, %v324
  %v326 = vpop.f32.mrb[0].mxu0
  %v327 = vadd.f32 %v87, %v326
  %v328 = vpop.f32.mrb[0].mxu0
  %v329 = vadd.f32 %v91, %v328
  %330 = vmatprep.mubr.bf16.mxu0 0
  %331 = vmatmul.mubr.bf16.gmra.mrb[0].mxu0 %v121
  %v332 = vpop.f32.mrb[0].mxu0
  %v333 = vadd.f32 %v87, %v332
  %v334 = vpop.f32.mrb[0].mxu0
  %v335 = vadd.f32 %v91, %v334
  %v336 = vpop.f32.mrb[0].mxu0
  %v337 = vadd.f32 %v87, %v336
  %v338 = vpop.f32.mrb[0].mxu0
  %v339 = vadd.f32 %v91, %v338
  %340 = vmatprep.mubr.bf16.mxu0 0
  %341 = vmatmul.mubr.bf16.gmra.mrb[0].mxu0 %v122
  %v342 = vpop.f32.mrb[0].mxu0
  %v343 = vadd.f32 %v87, %v342
  %v344 = vpop.f32.mrb[0].mxu0
  %v345 = vadd.f32 %v91, %v344
  %v346 = vpop.f32.mrb[0].mxu0
  %v347 = vadd.f32 %v87, %v346
  %v348 = vpop.f32.mrb[0].mxu0
  %v349 = vadd.f32 %v91, %v348
  %350 = vmatprep.mubr.bf16.mxu0 0
  %351 = vmatmul.mubr.bf16.gmra.mrb[0].mxu0 %v123
  %v352 = vpop.f32.mrb[0].mxu0
  %v353 = vadd.f32 %v87, %v352
  %v354 = vpop.f32.mrb[0].mxu0
  %v355 = vadd.f32 %v91, %v354
  %v356 = vpop.f32.mrb[0].mxu0
  %v357 = vadd.f32 %v87, %v356
  %v358 = vpop.f32.mrb[0].mxu0
  %v359 = vadd.f32 %v91, %v358
  %360 = vdwg.mxu0
  %361 = vmatprep.subr.bf16.mxu0 %v227
  %362 = vmatpush1.bf16.msra.mxu0 %v226
  %363 = vmatprep.subr.bf16.mxu0 %v231
  %364 = vmatpush1.bf16.msra.mxu0 %v230
  %365 = vmatprep.subr.bf16.mxu0 %v235
  %366 = vmatpush1.bf16.msra.mxu0 %v234
  %367 = vmatprep.subr.bf16.mxu0 %v239
  %368 = vmatpush1.bf16.msra.mxu0 %v238
  %369 = vmatprep.subr.bf16.mxu0 %v243
  %370 = vmatpush1.bf16.msra.mxu0 %v242
  %371 = vmatprep.subr.bf16.mxu0 %v247
  %372 = vmatpush1.bf16.msra.mxu0 %v246
  %373 = vmatprep.subr.bf16.mxu0 %v251
  %374 = vmatpush1.bf16.msra.mxu0 %v250
  %375 = vmatprep.subr.bf16.mxu0 %v255
  %376 = vmatpush1.bf16.msra.mxu0 %v254
  %377 = vmatprep.subr.bf16.mxu0 0
  %378 = vmatpush1.bf16.msra.mxu0 0
  %379 = vmatprep.subr.bf16.mxu0 0
  %380 = vmatpush1.bf16.msra.mxu0 0
  %381 = vmatprep.subr.bf16.mxu0 0
  %382 = vmatpush1.bf16.msra.mxu0 0
  %383 = vmatprep.subr.bf16.mxu0 0
  %384 = vmatpush1.bf16.msra.mxu0 0
  %385 = vmatprep.subr.bf16.mxu0 0
  %386 = vmatpush1.bf16.msra.mxu0 0
  %387 = vmatprep.subr.bf16.mxu0 0
  %388 = vmatpush1.bf16.msra.mxu0 0
  %389 = vmatprep.subr.bf16.mxu0 0
  %390 = vmatpush1.bf16.msra.mxu0 0
  %391 = vmatprep.subr.bf16.mxu0 0
  %392 = vmatpush1.bf16.msra.mxu0 0
  %393 = vmatprep.mubr.bf16.mxu0 0
  %394 = vmatmul.mubr.bf16.gmra.mrb[0].mxu0 %v120
  %v395 = vpop.f32.mrb[0].mxu0
  %v396 = vadd.f32 %v95, %v395
  %v397 = vpop.f32.mrb[0].mxu0
  %v398 = vadd.f32 %v99, %v397
  %v399 = vpop.f32.mrb[0].mxu0
  %v400 = vadd.f32 %v95, %v399
  %v401 = vpop.f32.mrb[0].mxu0
  %v402 = vadd.f32 %v99, %v401
  %403 = vmatprep.mubr.bf16.mxu0 0
  %404 = vmatmul.mubr.bf16.gmra.mrb[0].mxu0 %v121
  %v405 = vpop.f32.mrb[0].mxu0
  %v406 = vadd.f32 %v95, %v405
  %v407 = vpop.f32.mrb[0].mxu0
  %v408 = vadd.f32 %v99, %v407
  %v409 = vpop.f32.mrb[0].mxu0
  %v410 = vadd.f32 %v95, %v409
  %v411 = vpop.f32.mrb[0].mxu0
  %v412 = vadd.f32 %v99, %v411
  %413 = vmatprep.mubr.bf16.mxu0 0
  %414 = vmatmul.mubr.bf16.gmra.mrb[0].mxu0 %v122
  %v415 = vpop.f32.mrb[0].mxu0
  %v416 = vadd.f32 %v95, %v415
  %v417 = vpop.f32.mrb[0].mxu0
  %v418 = vadd.f32 %v99, %v417
  %v419 = vpop.f32.mrb[0].mxu0
  %v420 = vadd.f32 %v95, %v419
  %v421 = vpop.f32.mrb[0].mxu0
  %v422 = vadd.f32 %v99, %v421
  %423 = vmatprep.mubr.bf16.mxu0 0
  %424 = vmatmul.mubr.bf16.gmra.mrb[0].mxu0 %v123
  %v425 = vpop.f32.mrb[0].mxu0
  %v426 = vadd.f32 %v95, %v425
  %v427 = vpop.f32.mrb[0].mxu0
  %v428 = vadd.f32 %v99, %v427
  %v429 = vpop.f32.mrb[0].mxu0
  %v430 = vadd.f32 %v95, %v429
  %v431 = vpop.f32.mrb[0].mxu0
  %v432 = vadd.f32 %v99, %v431
  %433 = vdwg.mxu0
  %434 = vst [vmem:[#allocation3] sm:$0xff] %v323
  %435 = vst [vmem:[#allocation3 + $0x8] sm:$0xff] %v325
  %436 = vst [vmem:[#allocation3 + $0x10] sm:$0xff] %v396
  %437 = vst [vmem:[#allocation3 + $0x18] sm:$0xff] %v398
  %438 = vst [vmem:[#allocation3 + $0x20] sm:$0xff] %v327
  %439 = vst [vmem:[#allocation3 + $0x28] sm:$0xff] %v329
  %440 = vst [vmem:[#allocation3 + $0x30] sm:$0xff] %v400
  %441 = vst [vmem:[#allocation3 + $0x38] sm:$0xff] %v402
  %442 = vst [vmem:[#allocation3 + $0x40] sm:$0xff] %v333
  %443 = vst [vmem:[#allocation3 + $0x48] sm:$0xff] %v335
  %444 = vst [vmem:[#allocation3 + $0x50] sm:$0xff] %v406
  %445 = vst [vmem:[#allocation3 + $0x58] sm:$0xff] %v408
  %446 = vst [vmem:[#allocation3 + $0x60] sm:$0xff] %v337
  %447 = vst [vmem:[#allocation3 + $0x68] sm:$0xff] %v339
  %448 = vst [vmem:[#allocation3 + $0x70] sm:$0xff] %v410
  %449 = vst [vmem:[#allocation3 + $0x78] sm:$0xff] %v412
  %450 = vst [vmem:[#allocation3 + $0x80] sm:$0xff] %v343
  %451 = vst [vmem:[#allocation3 + $0x88] sm:$0xff] %v345
  %452 = vst [vmem:[#allocation3 + $0x90] sm:$0xff] %v416
  %453 = vst [vmem:[#allocation3 + $0x98] sm:$0xff] %v418
  %454 = vst [vmem:[#allocation3 + $0xa0] sm:$0xff] %v347
  %455 = vst [vmem:[#allocation3 + $0xa8] sm:$0xff] %v349
  %456 = vst [vmem:[#allocation3 + $0xb0] sm:$0xff] %v420
  %457 = vst [vmem:[#allocation3 + $0xb8] sm:$0xff] %v422
  %458 = vst [vmem:[#allocation3 + $0xc0] sm:$0xff] %v353
  %459 = vst [vmem:[#allocation3 + $0xc8] sm:$0xff] %v355
  %460 = vst [vmem:[#allocation3 + $0xd0] sm:$0xff] %v426
  %461 = vst [vmem:[#allocation3 + $0xd8] sm:$0xff] %v428
  %462 = vst [vmem:[#allocation3 + $0xe0] sm:$0xff] %v357
  %463 = vst [vmem:[#allocation3 + $0xe8] sm:$0xff] %v359
  %464 = vst [vmem:[#allocation3 + $0xf0] sm:$0xff] %v430
  %465 = vst [vmem:[#allocation3 + $0xf8] sm:$0xff] %v432
  %v466 = vld [vmem:[%s4] sm:$0xff]
  %v467 = vld [vmem:[%s4 + $0x8] sm:$0xff]
  %v468 = vld [vmem:[%s4 + $0x10] sm:$0xff]
  %v469 = vld [vmem:[%s4 + $0x18] sm:$0xff]
  %v470 = vld [vmem:[%s4 + $0x20] sm:$0xff]
  %v471 = vld [vmem:[%s4 + $0x28] sm:$0xff]
  %v472 = vld [vmem:[%s4 + $0x30] sm:$0xff]
  %v473 = vld [vmem:[%s4 + $0x38] sm:$0xff]
  %v474 = vld [vmem:[%s4 + $0x40] sm:$0xff]
  %v475 = vld [vmem:[%s4 + $0x48] sm:$0xff]
  %v476 = vld [vmem:[%s4 + $0x50] sm:$0xff]
  %v477 = vld [vmem:[%s4 + $0x58] sm:$0xff]
  %v478 = vld [vmem:[%s4 + $0x60] sm:$0xff]
  %v479 = vld [vmem:[%s4 + $0x68] sm:$0xff]
  %v480 = vld [vmem:[%s4 + $0x70] sm:$0xff]
  %v481 = vld [vmem:[%s4 + $0x78] sm:$0xff]
  %v482 = vld [vmem:[%s4 + $0x80] sm:$0xff]
  %v483 = vld [vmem:[%s4 + $0x88] sm:$0xff]
  %v484 = vld [vmem:[%s4 + $0x90] sm:$0xff]
  %v485 = vld [vmem:[%s4 + $0x98] sm:$0xff]
  %v486 = vld [vmem:[%s4 + $0xa0] sm:$0xff]
  %v487 = vld [vmem:[%s4 + $0xa8] sm:$0xff]
  %v488 = vld [vmem:[%s4 + $0xb0] sm:$0xff]
  %v489 = vld [vmem:[%s4 + $0xb8] sm:$0xff]
  %v490 = vld [vmem:[%s4 + $0xc0] sm:$0xff]
  %v491 = vld [vmem:[%s4 + $0xc8] sm:$0xff]
  %v492 = vld [vmem:[%s4 + $0xd0] sm:$0xff]
  %v493 = vld [vmem:[%s4 + $0xd8] sm:$0xff]
  %v494 = vld [vmem:[%s4 + $0xe0] sm:$0xff]
  %v495 = vld [vmem:[%s4 + $0xe8] sm:$0xff]
  %v496 = vld [vmem:[%s4 + $0xf0] sm:$0xff]
  %v497 = vld [vmem:[%s4 + $0xf8] sm:$0xff]
  %v498 = vld [vmem:[%s1] sm:$0xff]
  %v499 = vld [vmem:[%s2] sm:$0xff]
  %v500 = vld [vmem:[#allocation3] sm:$0xff]
  %v501 = vld [vmem:[#allocation3 + $0x8] sm:$0xff]
  %v502 = vld [vmem:[#allocation3 + $0x10] sm:$0xff]
  %v503 = vld [vmem:[#allocation3 + $0x18] sm:$0xff]
  %v504 = vpack.c.bf16 %v498, %v498
  %v537 = vunpack.c.l.b16 %v466
  %v538 = vunpack.c.h.b16 %v466
  %v539 = vunpack.c.l.b16 %v467
  %v540 = vunpack.c.h.b16 %v467
  %v541 = vunpack.c.l.b16 %v468
  %v542 = vunpack.c.h.b16 %v468
  %v543 = vunpack.c.l.b16 %v469
  %v544 = vunpack.c.h.b16 %v469
  %v545 = vunpack.c.l.b16 %v470
  %v546 = vunpack.c.h.b16 %v470
  %v547 = vunpack.c.l.b16 %v471
  %v548 = vunpack.c.h.b16 %v471
  %v549 = vunpack.c.l.b16 %v472
  %v550 = vunpack.c.h.b16 %v472
  %v551 = vunpack.c.l.b16 %v473
  %v552 = vunpack.c.h.b16 %v473
  %v553 = vunpack.c.l.b16 %v474
  %v554 = vunpack.c.h.b16 %v474
  %v555 = vunpack.c.l.b16 %v475
  %v556 = vunpack.c.h.b16 %v475
  %v557 = vunpack.c.l.b16 %v476
  %v558 = vunpack.c.h.b16 %v476
  %v559 = vunpack.c.l.b16 %v477
  %v560 = vunpack.c.h.b16 %v477
  %v561 = vunpack.c.l.b16 %v478
  %v562 = vunpack.c.h.b16 %v478
  %v563 = vunpack.c.l.b16 %v479
  %v564 = vunpack.c.h.b16 %v479
  %v565 = vunpack.c.l.b16 %v480
  %v566 = vunpack.c.h.b16 %v480
  %v567 = vunpack.c.l.b16 %v481
  %v568 = vunpack.c.h.b16 %v481
  %v569 = vunpack.c.l.b16 %v482
  %v570 = vunpack.c.h.b16 %v482
  %v571 = vunpack.c.l.b16 %v483
  %v572 = vunpack.c.h.b16 %v483
  %v573 = vunpack.c.l.b16 %v484
  %v574 = vunpack.c.h.b16 %v484
  %v575 = vunpack.c.l.b16 %v485
  %v576 = vunpack.c.h.b16 %v485
  %v577 = vunpack.c.l.b16 %v486
  %v578 = vunpack.c.h.b16 %v486
  %v579 = vunpack.c.l.b16 %v487
  %v580 = vunpack.c.h.b16 %v487
  %v581 = vunpack.c.l.b16 %v488
  %v582 = vunpack.c.h.b16 %v488
  %v583 = vunpack.c.l.b16 %v489
  %v584 = vunpack.c.h.b16 %v489
  %v585 = vunpack.c.l.b16 %v490
  %v586 = vunpack.c.h.b16 %v490
  %v587 = vunpack.c.l.b16 %v491
  %v588 = vunpack.c.h.b16 %v491
  %v589 = vunpack.c.l.b16 %v492
  %v590 = vunpack.c.h.b16 %v492
  %v591 = vunpack.c.l.b16 %v493
  %v592 = vunpack.c.h.b16 %v493
  %v593 = vunpack.c.l.b16 %v494
  %v594 = vunpack.c.h.b16 %v494
  %v595 = vunpack.c.l.b16 %v495
  %v596 = vunpack.c.h.b16 %v495
  %v597 = vunpack.c.l.b16 %v496
  %v598 = vunpack.c.h.b16 %v496
  %v599 = vunpack.c.l.b16 %v497
  %v600 = vunpack.c.h.b16 %v497
  %v601 = vpack.c.b16 %v541, %v537
  %v602 = vpack.c.b16 %v542, %v538
  %v603 = vpack.c.b16 %v543, %v539
  %v604 = vpack.c.b16 %v544, %v540
  %v605 = vpack.c.b16 %v549, %v545
  %v606 = vpack.c.b16 %v550, %v546
  %v607 = vpack.c.b16 %v551, %v547
  %v608 = vpack.c.b16 %v552, %v548
  %v609 = vpack.c.b16 %v557, %v553
  %v610 = vpack.c.b16 %v558, %v554
  %v611 = vpack.c.b16 %v559, %v555
  %v612 = vpack.c.b16 %v560, %v556
  %v613 = vpack.c.b16 %v565, %v561
  %v614 = vpack.c.b16 %v566, %v562
  %v615 = vpack.c.b16 %v567, %v563
  %v616 = vpack.c.b16 %v568, %v564
  %v617 = vpack.c.b16 %v573, %v569
  %v618 = vpack.c.b16 %v574, %v570
  %v619 = vpack.c.b16 %v575, %v571
  %v620 = vpack.c.b16 %v576, %v572
  %v621 = vpack.c.b16 %v581, %v577
  %v622 = vpack.c.b16 %v582, %v578
  %v623 = vpack.c.b16 %v583, %v579
  %v624 = vpack.c.b16 %v584, %v580
  %v625 = vpack.c.b16 %v589, %v585
  %v626 = vpack.c.b16 %v590, %v586
  %v627 = vpack.c.b16 %v591, %v587
  %v628 = vpack.c.b16 %v592, %v588
  %v629 = vpack.c.b16 %v597, %v593
  %v630 = vpack.c.b16 %v598, %v594
  %v631 = vpack.c.b16 %v599, %v595
  %v632 = vpack.c.b16 %v600, %v596
  %665 = vmatprep.subr.bf16.mxu0 %v602
  %666 = vmatpush1.bf16.msra.mxu0 %v601
  %667 = vmatprep.subr.bf16.mxu0 %v606
  %668 = vmatpush1.bf16.msra.mxu0 %v605
  %669 = vmatprep.subr.bf16.mxu0 %v610
  %670 = vmatpush1.bf16.msra.mxu0 %v609
  %671 = vmatprep.subr.bf16.mxu0 %v614
  %672 = vmatpush1.bf16.msra.mxu0 %v613
  %673 = vmatprep.subr.bf16.mxu0 %v618
  %674 = vmatpush1.bf16.msra.mxu0 %v617
  %675 = vmatprep.subr.bf16.mxu0 %v622
  %676 = vmatpush1.bf16.msra.mxu0 %v621
  %677 = vmatprep.subr.bf16.mxu0 %v626
  %678 = vmatpush1.bf16.msra.mxu0 %v625
  %679 = vmatprep.subr.bf16.mxu0 %v630
  %680 = vmatpush1.bf16.msra.mxu0 %v629
  %681 = vmatprep.subr.bf16.mxu0 0
  %682 = vmatpush1.bf16.msra.mxu0 0
  %683 = vmatprep.subr.bf16.mxu0 0
  %684 = vmatpush1.bf16.msra.mxu0 0
  %685 = vmatprep.subr.bf16.mxu0 0
  %686 = vmatpush1.bf16.msra.mxu0 0
  %687 = vmatprep.subr.bf16.mxu0 0
  %688 = vmatpush1.bf16.msra.mxu0 0
  %689 = vmatprep.subr.bf16.mxu0 0
  %690 = vmatpush1.bf16.msra.mxu0 0
  %691 = vmatprep.subr.bf16.mxu0 0
  %692 = vmatpush1.bf16.msra.mxu0 0
  %693 = vmatprep.subr.bf16.mxu0 0
  %694 = vmatpush1.bf16.msra.mxu0 0
  %695 = vmatprep.subr.bf16.mxu0 0
  %696 = vmatpush1.bf16.msra.mxu0 0
  %697 = vmatprep.mubr.bf16.mxu0 0
  %698 = vmatmul.mubr.bf16.gmra.mrb[0].mxu0 %v504
  %v699 = vpop.f32.mrb[0].mxu0
  %v700 = vadd.f32 0.0, %v699
  %v701 = vpop.f32.mrb[0].mxu0
  %v702 = vadd.f32 0.0, %v701
  %v703 = vpop.f32.mrb[0].mxu0
  %v704 = vpop.f32.mrb[0].mxu0
  %705 = vdwg.mxu0
  %706 = vmatprep.subr.bf16.mxu0 %v604
  %707 = vmatpush1.bf16.msra.mxu0 %v603
  %708 = vmatprep.subr.bf16.mxu0 %v608
  %709 = vmatpush1.bf16.msra.mxu0 %v607
  %710 = vmatprep.subr.bf16.mxu0 %v612
  %711 = vmatpush1.bf16.msra.mxu0 %v611
  %712 = vmatprep.subr.bf16.mxu0 %v616
  %713 = vmatpush1.bf16.msra.mxu0 %v615
  %714 = vmatprep.subr.bf16.mxu0 %v620
  %715 = vmatpush1.bf16.msra.mxu0 %v619
  %716 = vmatprep.subr.bf16.mxu0 %v624
  %717 = vmatpush1.bf16.msra.mxu0 %v623
  %718 = vmatprep.subr.bf16.mxu0 %v628
  %719 = vmatpush1.bf16.msra.mxu0 %v627
  %720 = vmatprep.subr.bf16.mxu0 %v632
  %721 = vmatpush1.bf16.msra.mxu0 %v631
  %722 = vmatprep.subr.bf16.mxu0 0
  %723 = vmatpush1.bf16.msra.mxu0 0
  %724 = vmatprep.subr.bf16.mxu0 0
  %725 = vmatpush1.bf16.msra.mxu0 0
  %726 = vmatprep.subr.bf16.mxu0 0
  %727 = vmatpush1.bf16.msra.mxu0 0
  %728 = vmatprep.subr.bf16.mxu0 0
  %729 = vmatpush1.bf16.msra.mxu0 0
  %730 = vmatprep.subr.bf16.mxu0 0
  %731 = vmatpush1.bf16.msra.mxu0 0
  %732 = vmatprep.subr.bf16.mxu0 0
  %733 = vmatpush1.bf16.msra.mxu0 0
  %734 = vmatprep.subr.bf16.mxu0 0
  %735 = vmatpush1.bf16.msra.mxu0 0
  %736 = vmatprep.subr.bf16.mxu0 0
  %737 = vmatpush1.bf16.msra.mxu0 0
  %738 = vmatprep.mubr.bf16.mxu0 0
  %739 = vmatmul.mubr.bf16.gmra.mrb[0].mxu0 %v504
  %v740 = vpop.f32.mrb[0].mxu0
  %v741 = vadd.f32 0.0, %v740
  %v742 = vpop.f32.mrb[0].mxu0
  %v743 = vadd.f32 0.0, %v742
  %v744 = vpop.f32.mrb[0].mxu0
  %v745 = vpop.f32.mrb[0].mxu0
  %746 = vdwg.mxu0
  %v747 = vadd.f32 %v500, %v700
  %v748 = vadd.f32 %v501, %v702
  %v749 = vadd.f32 %v502, %v741
  %v750 = vadd.f32 %v503, %v743
  %v751 = vxor.u32 %v747, 2147483648
  %v752 = vmul.f32 %v751, 1.442695
  %v753 = vpow.pop %v752
  %v754 = vadd.f32 %v753, 1.0
  %v755 = vrcp.pop %v754
  %v756 = vmul.f32 1.0, %v755
  %v757 = vxor.u32 %v748, 2147483648
  %v758 = vmul.f32 %v757, 1.442695
  %v759 = vpow.pop %v758
  %v760 = vadd.f32 %v759, 1.0
  %v761 = vrcp.pop %v760
  %v762 = vmul.f32 1.0, %v761
  %v763 = vtanh.pop %v749
  %v764 = vxor.u32 %v750, 2147483648
  %v765 = vmul.f32 %v764, 1.442695
  %v766 = vpow.pop %v765
  %v767 = vadd.f32 %v766, 1.0
  %v768 = vrcp.pop %v767
  %v769 = vmul.f32 1.0, %v768
  %v770 = vmul.f32 %v762, %v499
  %v771 = vmul.f32 %v756, %v763
  %v772 = vadd.f32 %v770, %v771
  %v773 = vtanh.pop %v772
  %v774 = vmul.f32 %v769, %v773
  %v775 = vpack.c.bf16 %v774, %v774
  %776 = vst [vmem:[#allocation2] sm:$0xf] %v775
  %s777 = scalar_lea.vmem [#allocation3], 32
  %v778 = vld [vmem:[%s777] sm:$0xff]
  %v779 = vld [vmem:[%s777 + $0x8] sm:$0xff]
  %v780 = vld [vmem:[%s777 + $0x10] sm:$0xff]
  %v781 = vld [vmem:[%s777 + $0x18] sm:$0xff]
  %782 = vmatprep.subr.bf16.mxu0 %v602
  %783 = vmatpush1.bf16.msra.mxu0 %v601
  %784 = vmatprep.subr.bf16.mxu0 %v606
  %785 = vmatpush1.bf16.msra.mxu0 %v605
  %786 = vmatprep.subr.bf16.mxu0 %v610
  %787 = vmatpush1.bf16.msra.mxu0 %v609
  %788 = vmatprep.subr.bf16.mxu0 %v614
  %789 = vmatpush1.bf16.msra.mxu0 %v613
  %790 = vmatprep.subr.bf16.mxu0 %v618
  %791 = vmatpush1.bf16.msra.mxu0 %v617
  %792 = vmatprep.subr.bf16.mxu0 %v622
  %793 = vmatpush1.bf16.msra.mxu0 %v621
  %794 = vmatprep.subr.bf16.mxu0 %v626
  %795 = vmatpush1.bf16.msra.mxu0 %v625
  %796 = vmatprep.subr.bf16.mxu0 %v630
  %797 = vmatpush1.bf16.msra.mxu0 %v629
  %798 = vmatprep.subr.bf16.mxu0 0
  %799 = vmatpush1.bf16.msra.mxu0 0
  %800 = vmatprep.subr.bf16.mxu0 0
  %801 = vmatpush1.bf16.msra.mxu0 0
  %802 = vmatprep.subr.bf16.mxu0 0
  %803 = vmatpush1.bf16.msra.mxu0 0
  %804 = vmatprep.subr.bf16.mxu0 0
  %805 = vmatpush1.bf16.msra.mxu0 0
  %806 = vmatprep.subr.bf16.mxu0 0
  %807 = vmatpush1.bf16.msra.mxu0 0
  %808 = vmatprep.subr.bf16.mxu0 0
  %809 = vmatpush1.bf16.msra.mxu0 0
  %810 = vmatprep.subr.bf16.mxu0 0
  %811 = vmatpush1.bf16.msra.mxu0 0
  %812 = vmatprep.subr.bf16.mxu0 0
  %813 = vmatpush1.bf16.msra.mxu0 0
  %814 = vmatprep.mubr.bf16.mxu0 0
  %815 = vmatmul.mubr.bf16.gmra.mrb[0].mxu0 %v775
  %v816 = vpop.f32.mrb[0].mxu0
  %v817 = vadd.f32 0.0, %v816
  %v818 = vpop.f32.mrb[0].mxu0
  %v819 = vadd.f32 0.0, %v818
  %v820 = vpop.f32.mrb[0].mxu0
  %v821 = vpop.f32.mrb[0].mxu0
  %822 = vdwg.mxu0
  %823 = vmatprep.subr.bf16.mxu0 %v604
  %824 = vmatpush1.bf16.msra.mxu0 %v603
  %825 = vmatprep.subr.bf16.mxu0 %v608
  %826 = vmatpush1.bf16.msra.mxu0 %v607
  %827 = vmatprep.subr.bf16.mxu0 %v612
  %828 = vmatpush1.bf16.msra.mxu0 %v611
  %829 = vmatprep.subr.bf16.mxu0 %v616
  %830 = vmatpush1.bf16.msra.mxu0 %v615
  %831 = vmatprep.subr.bf16.mxu0 %v620
  %832 = vmatpush1.bf16.msra.mxu0 %v619
  %833 = vmatprep.subr.bf16.mxu0 %v624
  %834 = vmatpush1.bf16.msra.mxu0 %v623
  %835 = vmatprep.subr.bf16.mxu0 %v628
  %836 = vmatpush1.bf16.msra.mxu0 %v627
  %837 = vmatprep.subr.bf16.mxu0 %v632
  %838 = vmatpush1.bf16.msra.mxu0 %v631
  %839 = vmatprep.subr.bf16.mxu0 0
  %840 = vmatpush1.bf16.msra.mxu0 0
  %841 = vmatprep.subr.bf16.mxu0 0
  %842 = vmatpush1.bf16.msra.mxu0 0
  %843 = vmatprep.subr.bf16.mxu0 0
  %844 = vmatpush1.bf16.msra.mxu0 0
  %845 = vmatprep.subr.bf16.mxu0 0
  %846 = vmatpush1.bf16.msra.mxu0 0
  %847 = vmatprep.subr.bf16.mxu0 0
  %848 = vmatpush1.bf16.msra.mxu0 0
  %849 = vmatprep.subr.bf16.mxu0 0
  %850 = vmatpush1.bf16.msra.mxu0 0
  %851 = vmatprep.subr.bf16.mxu0 0
  %852 = vmatpush1.bf16.msra.mxu0 0
  %853 = vmatprep.subr.bf16.mxu0 0
  %854 = vmatpush1.bf16.msra.mxu0 0
  %855 = vmatprep.mubr.bf16.mxu0 0
  %856 = vmatmul.mubr.bf16.gmra.mrb[0].mxu0 %v775
  %v857 = vpop.f32.mrb[0].mxu0
  %v858 = vadd.f32 0.0, %v857
  %v859 = vpop.f32.mrb[0].mxu0
  %v860 = vadd.f32 0.0, %v859
  %v861 = vpop.f32.mrb[0].mxu0
  %v862 = vpop.f32.mrb[0].mxu0
  %863 = vdwg.mxu0
  %v864 = vadd.f32 %v778, %v817
  %v865 = vadd.f32 %v779, %v819
  %v866 = vadd.f32 %v780, %v858
  %v867 = vadd.f32 %v781, %v860
  %v868 = vxor.u32 %v864, 2147483648
  %v869 = vmul.f32 %v868, 1.442695
  %v870 = vpow.pop %v869
  %v871 = vadd.f32 %v870, 1.0
  %v872 = vrcp.pop %v871
  %v873 = vmul.f32 1.0, %v872
  %v874 = vxor.u32 %v865, 2147483648
  %v875 = vmul.f32 %v874, 1.442695
  %v876 = vpow.pop %v875
  %v877 = vadd.f32 %v876, 1.0
  %v878 = vrcp.pop %v877
  %v879 = vmul.f32 1.0, %v878
  %v880 = vtanh.pop %v866
  %v881 = vxor.u32 %v867, 2147483648
  %v882 = vmul.f32 %v881, 1.442695
  %v883 = vpow.pop %v882
  %v884 = vadd.f32 %v883, 1.0
  %v885 = vrcp.pop %v884
  %v886 = vmul.f32 1.0, %v885
  %v887 = vmul.f32 %v879, %v772
  %v888 = vmul.f32 %v873, %v880
  %v889 = vadd.f32 %v887, %v888
  %v890 = vtanh.pop %v889
  %v891 = vmul.f32 %v886, %v890
  %v892 = vpack.c.bf16 %v891, %v891
  %s893 = scalar_lea.vmem [#allocation2], 4
  %894 = vst [vmem:[%s893] sm:$0xf] %v892
  %s895 = scalar_lea.vmem [#allocation3], 64
  %v896 = vld [vmem:[%s895] sm:$0xff]
  %v897 = vld [vmem:[%s895 + $0x8] sm:$0xff]
  %v898 = vld [vmem:[%s895 + $0x10] sm:$0xff]
  %v899 = vld [vmem:[%s895 + $0x18] sm:$0xff]
  %900 = vmatprep.subr.bf16.mxu0 %v602
  %901 = vmatpush1.bf16.msra.mxu0 %v601
  %902 = vmatprep.subr.bf16.mxu0 %v606
  %903 = vmatpush1.bf16.msra.mxu0 %v605
  %904 = vmatprep.subr.bf16.mxu0 %v610
  %905 = vmatpush1.bf16.msra.mxu0 %v609
  %906 = vmatprep.subr.bf16.mxu0 %v614
  %907 = vmatpush1.bf16.msra.mxu0 %v613
  %908 = vmatprep.subr.bf16.mxu0 %v618
  %909 = vmatpush1.bf16.msra.mxu0 %v617
  %910 = vmatprep.subr.bf16.mxu0 %v622
  %911 = vmatpush1.bf16.msra.mxu0 %v621
  %912 = vmatprep.subr.bf16.mxu0 %v626
  %913 = vmatpush1.bf16.msra.mxu0 %v625
  %914 = vmatprep.subr.bf16.mxu0 %v630
  %915 = vmatpush1.bf16.msra.mxu0 %v629
  %916 = vmatprep.subr.bf16.mxu0 0
  %917 = vmatpush1.bf16.msra.mxu0 0
  %918 = vmatprep.subr.bf16.mxu0 0
  %919 = vmatpush1.bf16.msra.mxu0 0
  %920 = vmatprep.subr.bf16.mxu0 0
  %921 = vmatpush1.bf16.msra.mxu0 0
  %922 = vmatprep.subr.bf16.mxu0 0
  %923 = vmatpush1.bf16.msra.mxu0 0
  %924 = vmatprep.subr.bf16.mxu0 0
  %925 = vmatpush1.bf16.msra.mxu0 0
  %926 = vmatprep.subr.bf16.mxu0 0
  %927 = vmatpush1.bf16.msra.mxu0 0
  %928 = vmatprep.subr.bf16.mxu0 0
  %929 = vmatpush1.bf16.msra.mxu0 0
  %930 = vmatprep.subr.bf16.mxu0 0
  %931 = vmatpush1.bf16.msra.mxu0 0
  %932 = vmatprep.mubr.bf16.mxu0 0
  %933 = vmatmul.mubr.bf16.gmra.mrb[0].mxu0 %v892
  %v934 = vpop.f32.mrb[0].mxu0
  %v935 = vadd.f32 0.0, %v934
  %v936 = vpop.f32.mrb[0].mxu0
  %v937 = vadd.f32 0.0, %v936
  %v938 = vpop.f32.mrb[0].mxu0
  %v939 = vpop.f32.mrb[0].mxu0
  %940 = vdwg.mxu0
  %941 = vmatprep.subr.bf16.mxu0 %v604
  %942 = vmatpush1.bf16.msra.mxu0 %v603
  %943 = vmatprep.subr.bf16.mxu0 %v608
  %944 = vmatpush1.bf16.msra.mxu0 %v607
  %945 = vmatprep.subr.bf16.mxu0 %v612
  %946 = vmatpush1.bf16.msra.mxu0 %v611
  %947 = vmatprep.subr.bf16.mxu0 %v616
  %948 = vmatpush1.bf16.msra.mxu0 %v615
  %949 = vmatprep.subr.bf16.mxu0 %v620
  %950 = vmatpush1.bf16.msra.mxu0 %v619
  %951 = vmatprep.subr.bf16.mxu0 %v624
  %952 = vmatpush1.bf16.msra.mxu0 %v623
  %953 = vmatprep.subr.bf16.mxu0 %v628
  %954 = vmatpush1.bf16.msra.mxu0 %v627
  %955 = vmatprep.subr.bf16.mxu0 %v632
  %956 = vmatpush1.bf16.msra.mxu0 %v631
  %957 = vmatprep.subr.bf16.mxu0 0
  %958 = vmatpush1.bf16.msra.mxu0 0
  %959 = vmatprep.subr.bf16.mxu0 0
  %960 = vmatpush1.bf16.msra.mxu0 0
  %961 = vmatprep.subr.bf16.mxu0 0
  %962 = vmatpush1.bf16.msra.mxu0 0
  %963 = vmatprep.subr.bf16.mxu0 0
  %964 = vmatpush1.bf16.msra.mxu0 0
  %965 = vmatprep.subr.bf16.mxu0 0
  %966 = vmatpush1.bf16.msra.mxu0 0
  %967 = vmatprep.subr.bf16.mxu0 0
  %968 = vmatpush1.bf16.msra.mxu0 0
  %969 = vmatprep.subr.bf16.mxu0 0
  %970 = vmatpush1.bf16.msra.mxu0 0
  %971 = vmatprep.subr.bf16.mxu0 0
  %972 = vmatpush1.bf16.msra.mxu0 0
  %973 = vmatprep.mubr.bf16.mxu0 0
  %974 = vmatmul.mubr.bf16.gmra.mrb[0].mxu0 %v892
  %v975 = vpop.f32.mrb[0].mxu0
  %v976 = vadd.f32 0.0, %v975
  %v977 = vpop.f32.mrb[0].mxu0
  %v978 = vadd.f32 0.0, %v977
  %v979 = vpop.f32.mrb[0].mxu0
  %v980 = vpop.f32.mrb[0].mxu0
  %981 = vdwg.mxu0
  %v982 = vadd.f32 %v896, %v935
  %v983 = vadd.f32 %v897, %v937
  %v984 = vadd.f32 %v898, %v976
  %v985 = vadd.f32 %v899, %v978
  %v986 = vxor.u32 %v982, 2147483648
  %v987 = vmul.f32 %v986, 1.442695
  %v988 = vpow.pop %v987
  %v989 = vadd.f32 %v988, 1.0
  %v990 = vrcp.pop %v989
  %v991 = vmul.f32 1.0, %v990
  %v992 = vxor.u32 %v983, 2147483648
  %v993 = vmul.f32 %v992, 1.442695
  %v994 = vpow.pop %v993
  %v995 = vadd.f32 %v994, 1.0
  %v996 = vrcp.pop %v995
  %v997 = vmul.f32 1.0, %v996
  %v998 = vtanh.pop %v984
  %v999 = vxor.u32 %v985, 2147483648
  %v1000 = vmul.f32 %v999, 1.442695
  %v1001 = vpow.pop %v1000
  %v1002 = vadd.f32 %v1001, 1.0
  %v1003 = vrcp.pop %v1002
  %v1004 = vmul.f32 1.0, %v1003
  %v1005 = vmul.f32 %v997, %v889
  %v1006 = vmul.f32 %v991, %v998
  %v1007 = vadd.f32 %v1005, %v1006
  %v1008 = vtanh.pop %v1007
  %v1009 = vmul.f32 %v1004, %v1008
  %v1010 = vpack.c.bf16 %v1009, %v1009
  %s1011 = scalar_lea.vmem [#allocation2], 8
  %1012 = vst [vmem:[%s1011] sm:$0xf] %v1010
  %s1013 = scalar_lea.vmem [#allocation3], 96
  %v1014 = vld [vmem:[%s1013] sm:$0xff]
  %v1015 = vld [vmem:[%s1013 + $0x8] sm:$0xff]
  %v1016 = vld [vmem:[%s1013 + $0x10] sm:$0xff]
  %v1017 = vld [vmem:[%s1013 + $0x18] sm:$0xff]
  %1018 = vmatprep.subr.bf16.mxu0 %v602
  %1019 = vmatpush1.bf16.msra.mxu0 %v601
  %1020 = vmatprep.subr.bf16.mxu0 %v606
  %1021 = vmatpush1.bf16.msra.mxu0 %v605
  %1022 = vmatprep.subr.bf16.mxu0 %v610
  %1023 = vmatpush1.bf16.msra.mxu0 %v609
  %1024 = vmatprep.subr.bf16.mxu0 %v614
  %1025 = vmatpush1.bf16.msra.mxu0 %v613
  %1026 = vmatprep.subr.bf16.mxu0 %v618
  %1027 = vmatpush1.bf16.msra.mxu0 %v617
  %1028 = vmatprep.subr.bf16.mxu0 %v622
  %1029 = vmatpush1.bf16.msra.mxu0 %v621
  %1030 = vmatprep.subr.bf16.mxu0 %v626
  %1031 = vmatpush1.bf16.msra.mxu0 %v625
  %1032 = vmatprep.subr.bf16.mxu0 %v630
  %1033 = vmatpush1.bf16.msra.mxu0 %v629
  %1034 = vmatprep.subr.bf16.mxu0 0
  %1035 = vmatpush1.bf16.msra.mxu0 0
  %1036 = vmatprep.subr.bf16.mxu0 0
  %1037 = vmatpush1.bf16.msra.mxu0 0
  %1038 = vmatprep.subr.bf16.mxu0 0
  %1039 = vmatpush1.bf16.msra.mxu0 0
  %1040 = vmatprep.subr.bf16.mxu0 0
  %1041 = vmatpush1.bf16.msra.mxu0 0
  %1042 = vmatprep.subr.bf16.mxu0 0
  %1043 = vmatpush1.bf16.msra.mxu0 0
  %1044 = vmatprep.subr.bf16.mxu0 0
  %1045 = vmatpush1.bf16.msra.mxu0 0
  %1046 = vmatprep.subr.bf16.mxu0 0
  %1047 = vmatpush1.bf16.msra.mxu0 0
  %1048 = vmatprep.subr.bf16.mxu0 0
  %1049 = vmatpush1.bf16.msra.mxu0 0
  %1050 = vmatprep.mubr.bf16.mxu0 0
  %1051 = vmatmul.mubr.bf16.gmra.mrb[0].mxu0 %v1010
  %v1052 = vpop.f32.mrb[0].mxu0
  %v1053 = vadd.f32 0.0, %v1052
  %v1054 = vpop.f32.mrb[0].mxu0
  %v1055 = vadd.f32 0.0, %v1054
  %v1056 = vpop.f32.mrb[0].mxu0
  %v1057 = vpop.f32.mrb[0].mxu0
  %1058 = vdwg.mxu0
  %1059 = vmatprep.subr.bf16.mxu0 %v604
  %1060 = vmatpush1.bf16.msra.mxu0 %v603
  %1061 = vmatprep.subr.bf16.mxu0 %v608
  %1062 = vmatpush1.bf16.msra.mxu0 %v607
  %1063 = vmatprep.subr.bf16.mxu0 %v612
  %1064 = vmatpush1.bf16.msra.mxu0 %v611
  %1065 = vmatprep.subr.bf16.mxu0 %v616
  %1066 = vmatpush1.bf16.msra.mxu0 %v615
  %1067 = vmatprep.subr.bf16.mxu0 %v620
  %1068 = vmatpush1.bf16.msra.mxu0 %v619
  %1069 = vmatprep.subr.bf16.mxu0 %v624
  %1070 = vmatpush1.bf16.msra.mxu0 %v623
  %1071 = vmatprep.subr.bf16.mxu0 %v628
  %1072 = vmatpush1.bf16.msra.mxu0 %v627
  %1073 = vmatprep.subr.bf16.mxu0 %v632
  %1074 = vmatpush1.bf16.msra.mxu0 %v631
  %1075 = vmatprep.subr.bf16.mxu0 0
  %1076 = vmatpush1.bf16.msra.mxu0 0
  %1077 = vmatprep.subr.bf16.mxu0 0
  %1078 = vmatpush1.bf16.msra.mxu0 0
  %1079 = vmatprep.subr.bf16.mxu0 0
  %1080 = vmatpush1.bf16.msra.mxu0 0
  %1081 = vmatprep.subr.bf16.mxu0 0
  %1082 = vmatpush1.bf16.msra.mxu0 0
  %1083 = vmatprep.subr.bf16.mxu0 0
  %1084 = vmatpush1.bf16.msra.mxu0 0
  %1085 = vmatprep.subr.bf16.mxu0 0
  %1086 = vmatpush1.bf16.msra.mxu0 0
  %1087 = vmatprep.subr.bf16.mxu0 0
  %1088 = vmatpush1.bf16.msra.mxu0 0
  %1089 = vmatprep.subr.bf16.mxu0 0
  %1090 = vmatpush1.bf16.msra.mxu0 0
  %1091 = vmatprep.mubr.bf16.mxu0 0
  %1092 = vmatmul.mubr.bf16.gmra.mrb[0].mxu0 %v1010
  %v1093 = vpop.f32.mrb[0].mxu0
  %v1094 = vadd.f32 0.0, %v1093
  %v1095 = vpop.f32.mrb[0].mxu0
  %v1096 = vadd.f32 0.0, %v1095
  %v1097 = vpop.f32.mrb[0].mxu0
  %v1098 = vpop.f32.mrb[0].mxu0
  %1099 = vdwg.mxu0
  %v1100 = vadd.f32 %v1014, %v1053
  %v1101 = vadd.f32 %v1015, %v1055
  %v1102 = vadd.f32 %v1016, %v1094
  %v1103 = vadd.f32 %v1017, %v1096
  %v1104 = vxor.u32 %v1100, 2147483648
  %v1105 = vmul.f32 %v1104, 1.442695
  %v1106 = vpow.pop %v1105
  %v1107 = vadd.f32 %v1106, 1.0
  %v1108 = vrcp.pop %v1107
  %v1109 = vmul.f32 1.0, %v1108
  %v1110 = vxor.u32 %v1101, 2147483648
  %v1111 = vmul.f32 %v1110, 1.442695
  %v1112 = vpow.pop %v1111
  %v1113 = vadd.f32 %v1112, 1.0
  %v1114 = vrcp.pop %v1113
  %v1115 = vmul.f32 1.0, %v1114
  %v1116 = vtanh.pop %v1102
  %v1117 = vxor.u32 %v1103, 2147483648
  %v1118 = vmul.f32 %v1117, 1.442695
  %v1119 = vpow.pop %v1118
  %v1120 = vadd.f32 %v1119, 1.0
  %v1121 = vrcp.pop %v1120
  %v1122 = vmul.f32 1.0, %v1121
  %v1123 = vmul.f32 %v1115, %v1007
  %v1124 = vmul.f32 %v1109, %v1116
  %v1125 = vadd.f32 %v1123, %v1124
  %v1126 = vtanh.pop %v1125
  %v1127 = vmul.f32 %v1122, %v1126
  %v1128 = vpack.c.bf16 %v1127, %v1127
  %s1129 = scalar_lea.vmem [#allocation2], 12
  %1130 = vst [vmem:[%s1129] sm:$0xf] %v1128
  %s1131 = scalar_lea.vmem [#allocation3], 128
  %v1132 = vld [vmem:[%s1131] sm:$0xff]
  %v1133 = vld [vmem:[%s1131 + $0x8] sm:$0xff]
  %v1134 = vld [vmem:[%s1131 + $0x10] sm:$0xff]
  %v1135 = vld [vmem:[%s1131 + $0x18] sm:$0xff]
  %1136 = vmatprep.subr.bf16.mxu0 %v602
  %1137 = vmatpush1.bf16.msra.mxu0 %v601
  %1138 = vmatprep.subr.bf16.mxu0 %v606
  %1139 = vmatpush1.bf16.msra.mxu0 %v605
  %1140 = vmatprep.subr.bf16.mxu0 %v610
  %1141 = vmatpush1.bf16.msra.mxu0 %v609
  %1142 = vmatprep.subr.bf16.mxu0 %v614
  %1143 = vmatpush1.bf16.msra.mxu0 %v613
  %1144 = vmatprep.subr.bf16.mxu0 %v618
  %1145 = vmatpush1.bf16.msra.mxu0 %v617
  %1146 = vmatprep.subr.bf16.mxu0 %v622
  %1147 = vmatpush1.bf16.msra.mxu0 %v621
  %1148 = vmatprep.subr.bf16.mxu0 %v626
  %1149 = vmatpush1.bf16.msra.mxu0 %v625
  %1150 = vmatprep.subr.bf16.mxu0 %v630
  %1151 = vmatpush1.bf16.msra.mxu0 %v629
  %1152 = vmatprep.subr.bf16.mxu0 0
  %1153 = vmatpush1.bf16.msra.mxu0 0
  %1154 = vmatprep.subr.bf16.mxu0 0
  %1155 = vmatpush1.bf16.msra.mxu0 0
  %1156 = vmatprep.subr.bf16.mxu0 0
  %1157 = vmatpush1.bf16.msra.mxu0 0
  %1158 = vmatprep.subr.bf16.mxu0 0
  %1159 = vmatpush1.bf16.msra.mxu0 0
  %1160 = vmatprep.subr.bf16.mxu0 0
  %1161 = vmatpush1.bf16.msra.mxu0 0
  %1162 = vmatprep.subr.bf16.mxu0 0
  %1163 = vmatpush1.bf16.msra.mxu0 0
  %1164 = vmatprep.subr.bf16.mxu0 0
  %1165 = vmatpush1.bf16.msra.mxu0 0
  %1166 = vmatprep.subr.bf16.mxu0 0
  %1167 = vmatpush1.bf16.msra.mxu0 0
  %1168 = vmatprep.mubr.bf16.mxu0 0
  %1169 = vmatmul.mubr.bf16.gmra.mrb[0].mxu0 %v1128
  %v1170 = vpop.f32.mrb[0].mxu0
  %v1171 = vadd.f32 0.0, %v1170
  %v1172 = vpop.f32.mrb[0].mxu0
  %v1173 = vadd.f32 0.0, %v1172
  %v1174 = vpop.f32.mrb[0].mxu0
  %v1175 = vpop.f32.mrb[0].mxu0
  %1176 = vdwg.mxu0
  %1177 = vmatprep.subr.bf16.mxu0 %v604
  %1178 = vmatpush1.bf16.msra.mxu0 %v603
  %1179 = vmatprep.subr.bf16.mxu0 %v608
  %1180 = vmatpush1.bf16.msra.mxu0 %v607
  %1181 = vmatprep.subr.bf16.mxu0 %v612
  %1182 = vmatpush1.bf16.msra.mxu0 %v611
  %1183 = vmatprep.subr.bf16.mxu0 %v616
  %1184 = vmatpush1.bf16.msra.mxu0 %v615
  %1185 = vmatprep.subr.bf16.mxu0 %v620
  %1186 = vmatpush1.bf16.msra.mxu0 %v619
  %1187 = vmatprep.subr.bf16.mxu0 %v624
  %1188 = vmatpush1.bf16.msra.mxu0 %v623
  %1189 = vmatprep.subr.bf16.mxu0 %v628
  %1190 = vmatpush1.bf16.msra.mxu0 %v627
  %1191 = vmatprep.subr.bf16.mxu0 %v632
  %1192 = vmatpush1.bf16.msra.mxu0 %v631
  %1193 = vmatprep.subr.bf16.mxu0 0
  %1194 = vmatpush1.bf16.msra.mxu0 0
  %1195 = vmatprep.subr.bf16.mxu0 0
  %1196 = vmatpush1.bf16.msra.mxu0 0
  %1197 = vmatprep.subr.bf16.mxu0 0
  %1198 = vmatpush1.bf16.msra.mxu0 0
  %1199 = vmatprep.subr.bf16.mxu0 0
  %1200 = vmatpush1.bf16.msra.mxu0 0
  %1201 = vmatprep.subr.bf16.mxu0 0
  %1202 = vmatpush1.bf16.msra.mxu0 0
  %1203 = vmatprep.subr.bf16.mxu0 0
  %1204 = vmatpush1.bf16.msra.mxu0 0
  %1205 = vmatprep.subr.bf16.mxu0 0
  %1206 = vmatpush1.bf16.msra.mxu0 0
  %1207 = vmatprep.subr.bf16.mxu0 0
  %1208 = vmatpush1.bf16.msra.mxu0 0
  %1209 = vmatprep.mubr.bf16.mxu0 0
  %1210 = vmatmul.mubr.bf16.gmra.mrb[0].mxu0 %v1128
  %v1211 = vpop.f32.mrb[0].mxu0
  %v1212 = vadd.f32 0.0, %v1211
  %v1213 = vpop.f32.mrb[0].mxu0
  %v1214 = vadd.f32 0.0, %v1213
  %v1215 = vpop.f32.mrb[0].mxu0
  %v1216 = vpop.f32.mrb[0].mxu0
  %1217 = vdwg.mxu0
  %v1218 = vadd.f32 %v1132, %v1171
  %v1219 = vadd.f32 %v1133, %v1173
  %v1220 = vadd.f32 %v1134, %v1212
  %v1221 = vadd.f32 %v1135, %v1214
  %v1222 = vxor.u32 %v1218, 2147483648
  %v1223 = vmul.f32 %v1222, 1.442695
  %v1224 = vpow.pop %v1223
  %v1225 = vadd.f32 %v1224, 1.0
  %v1226 = vrcp.pop %v1225
  %v1227 = vmul.f32 1.0, %v1226
  %v1228 = vxor.u32 %v1219, 2147483648
  %v1229 = vmul.f32 %v1228, 1.442695
  %v1230 = vpow.pop %v1229
  %v1231 = vadd.f32 %v1230, 1.0
  %v1232 = vrcp.pop %v1231
  %v1233 = vmul.f32 1.0, %v1232
  %v1234 = vtanh.pop %v1220
  %v1235 = vxor.u32 %v1221, 2147483648
  %v1236 = vmul.f32 %v1235, 1.442695
  %v1237 = vpow.pop %v1236
  %v1238 = vadd.f32 %v1237, 1.0
  %v1239 = vrcp.pop %v1238
  %v1240 = vmul.f32 1.0, %v1239
  %v1241 = vmul.f32 %v1233, %v1125
  %v1242 = vmul.f32 %v1227, %v1234
  %v1243 = vadd.f32 %v1241, %v1242
  %v1244 = vtanh.pop %v1243
  %v1245 = vmul.f32 %v1240, %v1244
  %v1246 = vpack.c.bf16 %v1245, %v1245
  %s1247 = scalar_lea.vmem [#allocation2], 16
  %1248 = vst [vmem:[%s1247] sm:$0xf] %v1246
  %s1249 = scalar_lea.vmem [#allocation3], 160
  %v1250 = vld [vmem:[%s1249] sm:$0xff]
  %v1251 = vld [vmem:[%s1249 + $0x8] sm:$0xff]
  %v1252 = vld [vmem:[%s1249 + $0x10] sm:$0xff]
  %v1253 = vld [vmem:[%s1249 + $0x18] sm:$0xff]
  %1254 = vmatprep.subr.bf16.mxu0 %v602
  %1255 = vmatpush1.bf16.msra.mxu0 %v601
  %1256 = vmatprep.subr.bf16.mxu0 %v606
  %1257 = vmatpush1.bf16.msra.mxu0 %v605
  %1258 = vmatprep.subr.bf16.mxu0 %v610
  %1259 = vmatpush1.bf16.msra.mxu0 %v609
  %1260 = vmatprep.subr.bf16.mxu0 %v614
  %1261 = vmatpush1.bf16.msra.mxu0 %v613
  %1262 = vmatprep.subr.bf16.mxu0 %v618
  %1263 = vmatpush1.bf16.msra.mxu0 %v617
  %1264 = vmatprep.subr.bf16.mxu0 %v622
  %1265 = vmatpush1.bf16.msra.mxu0 %v621
  %1266 = vmatprep.subr.bf16.mxu0 %v626
  %1267 = vmatpush1.bf16.msra.mxu0 %v625
  %1268 = vmatprep.subr.bf16.mxu0 %v630
  %1269 = vmatpush1.bf16.msra.mxu0 %v629
  %1270 = vmatprep.subr.bf16.mxu0 0
  %1271 = vmatpush1.bf16.msra.mxu0 0
  %1272 = vmatprep.subr.bf16.mxu0 0
  %1273 = vmatpush1.bf16.msra.mxu0 0
  %1274 = vmatprep.subr.bf16.mxu0 0
  %1275 = vmatpush1.bf16.msra.mxu0 0
  %1276 = vmatprep.subr.bf16.mxu0 0
  %1277 = vmatpush1.bf16.msra.mxu0 0
  %1278 = vmatprep.subr.bf16.mxu0 0
  %1279 = vmatpush1.bf16.msra.mxu0 0
  %1280 = vmatprep.subr.bf16.mxu0 0
  %1281 = vmatpush1.bf16.msra.mxu0 0
  %1282 = vmatprep.subr.bf16.mxu0 0
  %1283 = vmatpush1.bf16.msra.mxu0 0
  %1284 = vmatprep.subr.bf16.mxu0 0
  %1285 = vmatpush1.bf16.msra.mxu0 0
  %1286 = vmatprep.mubr.bf16.mxu0 0
  %1287 = vmatmul.mubr.bf16.gmra.mrb[0].mxu0 %v1246
  %v1288 = vpop.f32.mrb[0].mxu0
  %v1289 = vadd.f32 0.0, %v1288
  %v1290 = vpop.f32.mrb[0].mxu0
  %v1291 = vadd.f32 0.0, %v1290
  %v1292 = vpop.f32.mrb[0].mxu0
  %v1293 = vpop.f32.mrb[0].mxu0
  %1294 = vdwg.mxu0
  %1295 = vmatprep.subr.bf16.mxu0 %v604
  %1296 = vmatpush1.bf16.msra.mxu0 %v603
  %1297 = vmatprep.subr.bf16.mxu0 %v608
  %1298 = vmatpush1.bf16.msra.mxu0 %v607
  %1299 = vmatprep.subr.bf16.mxu0 %v612
  %1300 = vmatpush1.bf16.msra.mxu0 %v611
  %1301 = vmatprep.subr.bf16.mxu0 %v616
  %1302 = vmatpush1.bf16.msra.mxu0 %v615
  %1303 = vmatprep.subr.bf16.mxu0 %v620
  %1304 = vmatpush1.bf16.msra.mxu0 %v619
  %1305 = vmatprep.subr.bf16.mxu0 %v624
  %1306 = vmatpush1.bf16.msra.mxu0 %v623
  %1307 = vmatprep.subr.bf16.mxu0 %v628
  %1308 = vmatpush1.bf16.msra.mxu0 %v627
  %1309 = vmatprep.subr.bf16.mxu0 %v632
  %1310 = vmatpush1.bf16.msra.mxu0 %v631
  %1311 = vmatprep.subr.bf16.mxu0 0
  %1312 = vmatpush1.bf16.msra.mxu0 0
  %1313 = vmatprep.subr.bf16.mxu0 0
  %1314 = vmatpush1.bf16.msra.mxu0 0
  %1315 = vmatprep.subr.bf16.mxu0 0
  %1316 = vmatpush1.bf16.msra.mxu0 0
  %1317 = vmatprep.subr.bf16.mxu0 0
  %1318 = vmatpush1.bf16.msra.mxu0 0
  %1319 = vmatprep.subr.bf16.mxu0 0
  %1320 = vmatpush1.bf16.msra.mxu0 0
  %1321 = vmatprep.subr.bf16.mxu0 0
  %1322 = vmatpush1.bf16.msra.mxu0 0
  %1323 = vmatprep.subr.bf16.mxu0 0
  %1324 = vmatpush1.bf16.msra.mxu0 0
  %1325 = vmatprep.subr.bf16.mxu0 0
  %1326 = vmatpush1.bf16.msra.mxu0 0
  %1327 = vmatprep.mubr.bf16.mxu0 0
  %1328 = vmatmul.mubr.bf16.gmra.mrb[0].mxu0 %v1246
  %v1329 = vpop.f32.mrb[0].mxu0
  %v1330 = vadd.f32 0.0, %v1329
  %v1331 = vpop.f32.mrb[0].mxu0
  %v1332 = vadd.f32 0.0, %v1331
  %v1333 = vpop.f32.mrb[0].mxu0
  %v1334 = vpop.f32.mrb[0].mxu0
  %1335 = vdwg.mxu0
  %v1336 = vadd.f32 %v1250, %v1289
  %v1337 = vadd.f32 %v1251, %v1291
  %v1338 = vadd.f32 %v1252, %v1330
  %v1339 = vadd.f32 %v1253, %v1332
  %v1340 = vxor.u32 %v1336, 2147483648
  %v1341 = vmul.f32 %v1340, 1.442695
  %v1342 = vpow.pop %v1341
  %v1343 = vadd.f32 %v1342, 1.0
  %v1344 = vrcp.pop %v1343
  %v1345 = vmul.f32 1.0, %v1344
  %v1346 = vxor.u32 %v1337, 2147483648
  %v1347 = vmul.f32 %v1346, 1.442695
  %v1348 = vpow.pop %v1347
  %v1349 = vadd.f32 %v1348, 1.0
  %v1350 = vrcp.pop %v1349
  %v1351 = vmul.f32 1.0, %v1350
  %v1352 = vtanh.pop %v1338
  %v1353 = vxor.u32 %v1339, 2147483648
  %v1354 = vmul.f32 %v1353, 1.442695
  %v1355 = vpow.pop %v1354
  %v1356 = vadd.f32 %v1355, 1.0
  %v1357 = vrcp.pop %v1356
  %v1358 = vmul.f32 1.0, %v1357
  %v1359 = vmul.f32 %v1351, %v1243
  %v1360 = vmul.f32 %v1345, %v1352
  %v1361 = vadd.f32 %v1359, %v1360
  %v1362 = vtanh.pop %v1361
  %v1363 = vmul.f32 %v1358, %v1362
  %v1364 = vpack.c.bf16 %v1363, %v1363
  %s1365 = scalar_lea.vmem [#allocation2], 20
  %1366 = vst [vmem:[%s1365] sm:$0xf] %v1364
  %s1367 = scalar_lea.vmem [#allocation3], 192
  %v1368 = vld [vmem:[%s1367] sm:$0xff]
  %v1369 = vld [vmem:[%s1367 + $0x8] sm:$0xff]
  %v1370 = vld [vmem:[%s1367 + $0x10] sm:$0xff]
  %v1371 = vld [vmem:[%s1367 + $0x18] sm:$0xff]
  %1372 = vmatprep.subr.bf16.mxu0 %v602
  %1373 = vmatpush1.bf16.msra.mxu0 %v601
  %1374 = vmatprep.subr.bf16.mxu0 %v606
  %1375 = vmatpush1.bf16.msra.mxu0 %v605
  %1376 = vmatprep.subr.bf16.mxu0 %v610
  %1377 = vmatpush1.bf16.msra.mxu0 %v609
  %1378 = vmatprep.subr.bf16.mxu0 %v614
  %1379 = vmatpush1.bf16.msra.mxu0 %v613
  %1380 = vmatprep.subr.bf16.mxu0 %v618
  %1381 = vmatpush1.bf16.msra.mxu0 %v617
  %1382 = vmatprep.subr.bf16.mxu0 %v622
  %1383 = vmatpush1.bf16.msra.mxu0 %v621
  %1384 = vmatprep.subr.bf16.mxu0 %v626
  %1385 = vmatpush1.bf16.msra.mxu0 %v625
  %1386 = vmatprep.subr.bf16.mxu0 %v630
  %1387 = vmatpush1.bf16.msra.mxu0 %v629
  %1388 = vmatprep.subr.bf16.mxu0 0
  %1389 = vmatpush1.bf16.msra.mxu0 0
  %1390 = vmatprep.subr.bf16.mxu0 0
  %1391 = vmatpush1.bf16.msra.mxu0 0
  %1392 = vmatprep.subr.bf16.mxu0 0
  %1393 = vmatpush1.bf16.msra.mxu0 0
  %1394 = vmatprep.subr.bf16.mxu0 0
  %1395 = vmatpush1.bf16.msra.mxu0 0
  %1396 = vmatprep.subr.bf16.mxu0 0
  %1397 = vmatpush1.bf16.msra.mxu0 0
  %1398 = vmatprep.subr.bf16.mxu0 0
  %1399 = vmatpush1.bf16.msra.mxu0 0
  %1400 = vmatprep.subr.bf16.mxu0 0
  %1401 = vmatpush1.bf16.msra.mxu0 0
  %1402 = vmatprep.subr.bf16.mxu0 0
  %1403 = vmatpush1.bf16.msra.mxu0 0
  %1404 = vmatprep.mubr.bf16.mxu0 0
  %1405 = vmatmul.mubr.bf16.gmra.mrb[0].mxu0 %v1364
  %v1406 = vpop.f32.mrb[0].mxu0
  %v1407 = vadd.f32 0.0, %v1406
  %v1408 = vpop.f32.mrb[0].mxu0
  %v1409 = vadd.f32 0.0, %v1408
  %v1410 = vpop.f32.mrb[0].mxu0
  %v1411 = vpop.f32.mrb[0].mxu0
  %1412 = vdwg.mxu0
  %1413 = vmatprep.subr.bf16.mxu0 %v604
  %1414 = vmatpush1.bf16.msra.mxu0 %v603
  %1415 = vmatprep.subr.bf16.mxu0 %v608
  %1416 = vmatpush1.bf16.msra.mxu0 %v607
  %1417 = vmatprep.subr.bf16.mxu0 %v612
  %1418 = vmatpush1.bf16.msra.mxu0 %v611
  %1419 = vmatprep.subr.bf16.mxu0 %v616
  %1420 = vmatpush1.bf16.msra.mxu0 %v615
  %1421 = vmatprep.subr.bf16.mxu0 %v620
  %1422 = vmatpush1.bf16.msra.mxu0 %v619
  %1423 = vmatprep.subr.bf16.mxu0 %v624
  %1424 = vmatpush1.bf16.msra.mxu0 %v623
  %1425 = vmatprep.subr.bf16.mxu0 %v628
  %1426 = vmatpush1.bf16.msra.mxu0 %v627
  %1427 = vmatprep.subr.bf16.mxu0 %v632
  %1428 = vmatpush1.bf16.msra.mxu0 %v631
  %1429 = vmatprep.subr.bf16.mxu0 0
  %1430 = vmatpush1.bf16.msra.mxu0 0
  %1431 = vmatprep.subr.bf16.mxu0 0
  %1432 = vmatpush1.bf16.msra.mxu0 0
  %1433 = vmatprep.subr.bf16.mxu0 0
  %1434 = vmatpush1.bf16.msra.mxu0 0
  %1435 = vmatprep.subr.bf16.mxu0 0
  %1436 = vmatpush1.bf16.msra.mxu0 0
  %1437 = vmatprep.subr.bf16.mxu0 0
  %1438 = vmatpush1.bf16.msra.mxu0 0
  %1439 = vmatprep.subr.bf16.mxu0 0
  %1440 = vmatpush1.bf16.msra.mxu0 0
  %1441 = vmatprep.subr.bf16.mxu0 0
  %1442 = vmatpush1.bf16.msra.mxu0 0
  %1443 = vmatprep.subr.bf16.mxu0 0
  %1444 = vmatpush1.bf16.msra.mxu0 0
  %1445 = vmatprep.mubr.bf16.mxu0 0
  %1446 = vmatmul.mubr.bf16.gmra.mrb[0].mxu0 %v1364
  %v1447 = vpop.f32.mrb[0].mxu0
  %v1448 = vadd.f32 0.0, %v1447
  %v1449 = vpop.f32.mrb[0].mxu0
  %v1450 = vadd.f32 0.0, %v1449
  %v1451 = vpop.f32.mrb[0].mxu0
  %v1452 = vpop.f32.mrb[0].mxu0
  %1453 = vdwg.mxu0
  %v1454 = vadd.f32 %v1368, %v1407
  %v1455 = vadd.f32 %v1369, %v1409
  %v1456 = vadd.f32 %v1370, %v1448
  %v1457 = vadd.f32 %v1371, %v1450
  %v1458 = vxor.u32 %v1454, 2147483648
  %v1459 = vmul.f32 %v1458, 1.442695
  %v1460 = vpow.pop %v1459
  %v1461 = vadd.f32 %v1460, 1.0
  %v1462 = vrcp.pop %v1461
  %v1463 = vmul.f32 1.0, %v1462
  %v1464 = vxor.u32 %v1455, 2147483648
  %v1465 = vmul.f32 %v1464, 1.442695
  %v1466 = vpow.pop %v1465
  %v1467 = vadd.f32 %v1466, 1.0
  %v1468 = vrcp.pop %v1467
  %v1469 = vmul.f32 1.0, %v1468
  %v1470 = vtanh.pop %v1456
  %v1471 = vxor.u32 %v1457, 2147483648
  %v1472 = vmul.f32 %v1471, 1.442695
  %v1473 = vpow.pop %v1472
  %v1474 = vadd.f32 %v1473, 1.0
  %v1475 = vrcp.pop %v1474
  %v1476 = vmul.f32 1.0, %v1475
  %v1477 = vmul.f32 %v1469, %v1361
  %v1478 = vmul.f32 %v1463, %v1470
  %v1479 = vadd.f32 %v1477, %v1478
  %v1480 = vtanh.pop %v1479
  %v1481 = vmul.f32 %v1476, %v1480
  %v1482 = vpack.c.bf16 %v1481, %v1481
  %s1483 = scalar_lea.vmem [#allocation2], 24
  %1484 = vst [vmem:[%s1483] sm:$0xf] %v1482
  %s1485 = scalar_lea.vmem [#allocation3], 224
  %v1486 = vld [vmem:[%s1485] sm:$0xff]
  %v1487 = vld [vmem:[%s1485 + $0x8] sm:$0xff]
  %v1488 = vld [vmem:[%s1485 + $0x10] sm:$0xff]
  %v1489 = vld [vmem:[%s1485 + $0x18] sm:$0xff]
  %1490 = vmatprep.subr.bf16.mxu0 %v602
  %1491 = vmatpush1.bf16.msra.mxu0 %v601
  %1492 = vmatprep.subr.bf16.mxu0 %v606
  %1493 = vmatpush1.bf16.msra.mxu0 %v605
  %1494 = vmatprep.subr.bf16.mxu0 %v610
  %1495 = vmatpush1.bf16.msra.mxu0 %v609
  %1496 = vmatprep.subr.bf16.mxu0 %v614
  %1497 = vmatpush1.bf16.msra.mxu0 %v613
  %1498 = vmatprep.subr.bf16.mxu0 %v618
  %1499 = vmatpush1.bf16.msra.mxu0 %v617
  %1500 = vmatprep.subr.bf16.mxu0 %v622
  %1501 = vmatpush1.bf16.msra.mxu0 %v621
  %1502 = vmatprep.subr.bf16.mxu0 %v626
  %1503 = vmatpush1.bf16.msra.mxu0 %v625
  %1504 = vmatprep.subr.bf16.mxu0 %v630
  %1505 = vmatpush1.bf16.msra.mxu0 %v629
  %1506 = vmatprep.subr.bf16.mxu0 0
  %1507 = vmatpush1.bf16.msra.mxu0 0
  %1508 = vmatprep.subr.bf16.mxu0 0
  %1509 = vmatpush1.bf16.msra.mxu0 0
  %1510 = vmatprep.subr.bf16.mxu0 0
  %1511 = vmatpush1.bf16.msra.mxu0 0
  %1512 = vmatprep.subr.bf16.mxu0 0
  %1513 = vmatpush1.bf16.msra.mxu0 0
  %1514 = vmatprep.subr.bf16.mxu0 0
  %1515 = vmatpush1.bf16.msra.mxu0 0
  %1516 = vmatprep.subr.bf16.mxu0 0
  %1517 = vmatpush1.bf16.msra.mxu0 0
  %1518 = vmatprep.subr.bf16.mxu0 0
  %1519 = vmatpush1.bf16.msra.mxu0 0
  %1520 = vmatprep.subr.bf16.mxu0 0
  %1521 = vmatpush1.bf16.msra.mxu0 0
  %1522 = vmatprep.mubr.bf16.mxu0 0
  %1523 = vmatmul.mubr.bf16.gmra.mrb[0].mxu0 %v1482
  %v1524 = vpop.f32.mrb[0].mxu0
  %v1525 = vadd.f32 0.0, %v1524
  %v1526 = vpop.f32.mrb[0].mxu0
  %v1527 = vadd.f32 0.0, %v1526
  %v1528 = vpop.f32.mrb[0].mxu0
  %v1529 = vpop.f32.mrb[0].mxu0
  %1530 = vdwg.mxu0
  %1531 = vmatprep.subr.bf16.mxu0 %v604
  %1532 = vmatpush1.bf16.msra.mxu0 %v603
  %1533 = vmatprep.subr.bf16.mxu0 %v608
  %1534 = vmatpush1.bf16.msra.mxu0 %v607
  %1535 = vmatprep.subr.bf16.mxu0 %v612
  %1536 = vmatpush1.bf16.msra.mxu0 %v611
  %1537 = vmatprep.subr.bf16.mxu0 %v616
  %1538 = vmatpush1.bf16.msra.mxu0 %v615
  %1539 = vmatprep.subr.bf16.mxu0 %v620
  %1540 = vmatpush1.bf16.msra.mxu0 %v619
  %1541 = vmatprep.subr.bf16.mxu0 %v624
  %1542 = vmatpush1.bf16.msra.mxu0 %v623
  %1543 = vmatprep.subr.bf16.mxu0 %v628
  %1544 = vmatpush1.bf16.msra.mxu0 %v627
  %1545 = vmatprep.subr.bf16.mxu0 %v632
  %1546 = vmatpush1.bf16.msra.mxu0 %v631
  %1547 = vmatprep.subr.bf16.mxu0 0
  %1548 = vmatpush1.bf16.msra.mxu0 0
  %1549 = vmatprep.subr.bf16.mxu0 0
  %1550 = vmatpush1.bf16.msra.mxu0 0
  %1551 = vmatprep.subr.bf16.mxu0 0
  %1552 = vmatpush1.bf16.msra.mxu0 0
  %1553 = vmatprep.subr.bf16.mxu0 0
  %1554 = vmatpush1.bf16.msra.mxu0 0
  %1555 = vmatprep.subr.bf16.mxu0 0
  %1556 = vmatpush1.bf16.msra.mxu0 0
  %1557 = vmatprep.subr.bf16.mxu0 0
  %1558 = vmatpush1.bf16.msra.mxu0 0
  %1559 = vmatprep.subr.bf16.mxu0 0
  %1560 = vmatpush1.bf16.msra.mxu0 0
  %1561 = vmatprep.subr.bf16.mxu0 0
  %1562 = vmatpush1.bf16.msra.mxu0 0
  %1563 = vmatprep.mubr.bf16.mxu0 0
  %1564 = vmatmul.mubr.bf16.gmra.mrb[0].mxu0 %v1482
  %v1565 = vpop.f32.mrb[0].mxu0
  %v1566 = vadd.f32 0.0, %v1565
  %v1567 = vpop.f32.mrb[0].mxu0
  %v1568 = vadd.f32 0.0, %v1567
  %v1569 = vpop.f32.mrb[0].mxu0
  %v1570 = vpop.f32.mrb[0].mxu0
  %1571 = vdwg.mxu0
  %v1572 = vadd.f32 %v1486, %v1525
  %v1573 = vadd.f32 %v1487, %v1527
  %v1574 = vadd.f32 %v1488, %v1566
  %v1575 = vadd.f32 %v1489, %v1568
  %v1576 = vxor.u32 %v1572, 2147483648
  %v1577 = vmul.f32 %v1576, 1.442695
  %v1578 = vpow.pop %v1577
  %v1579 = vadd.f32 %v1578, 1.0
  %v1580 = vrcp.pop %v1579
  %v1581 = vmul.f32 1.0, %v1580
  %v1582 = vxor.u32 %v1573, 2147483648
  %v1583 = vmul.f32 %v1582, 1.442695
  %v1584 = vpow.pop %v1583
  %v1585 = vadd.f32 %v1584, 1.0
  %v1586 = vrcp.pop %v1585
  %v1587 = vmul.f32 1.0, %v1586
  %v1588 = vtanh.pop %v1574
  %v1589 = vxor.u32 %v1575, 2147483648
  %v1590 = vmul.f32 %v1589, 1.442695
  %v1591 = vpow.pop %v1590
  %v1592 = vadd.f32 %v1591, 1.0
  %v1593 = vrcp.pop %v1592
  %v1594 = vmul.f32 1.0, %v1593
  %v1595 = vmul.f32 %v1587, %v1479
  %v1596 = vmul.f32 %v1581, %v1588
  %v1597 = vadd.f32 %v1595, %v1596
  %v1598 = vtanh.pop %v1597
  %v1599 = vmul.f32 %v1594, %v1598
  %v1600 = vpack.c.bf16 %v1599, %v1599
  %s1601 = scalar_lea.vmem [#allocation2], 28
  %1602 = vst [vmem:[%s1601] sm:$0xf] %v1600
  %1603 = vst [vmem:[%s12] sm:$0xff] %v1599
  %1604 = vst [vmem:[%s13] sm:$0xff] %v1597
  %v1605 = vld [vmem:[#allocation2] sm:$0xf]
  %v1606 = vld [vmem:[#allocation2 + $0x4] sm:$0xf]
  %v1607 = vld [vmem:[#allocation2 + $0x8] sm:$0xf]
  %v1608 = vld [vmem:[#allocation2 + $0xc] sm:$0xf]
  %v1609 = vld [vmem:[#allocation2 + $0x10] sm:$0xf]
  %v1610 = vld [vmem:[#allocation2 + $0x14] sm:$0xf]
  %v1611 = vld [vmem:[#allocation2 + $0x18] sm:$0xf]
  %v1612 = vld [vmem:[#allocation2 + $0x1c] sm:$0xf]
  %v1613 = vld [vmem:[%s6] sm:$0xff]
  %v1614 = vld [vmem:[%s6 + $0x8] sm:$0xff]
  %v1615 = vld [vmem:[%s6 + $0x10] sm:$0xff]
  %v1616 = vld [vmem:[%s6 + $0x18] sm:$0xff]
  %v1617 = vld [vmem:[%s6 + $0x20] sm:$0xff]
  %v1618 = vld [vmem:[%s6 + $0x28] sm:$0xff]
  %v1619 = vld [vmem:[%s6 + $0x30] sm:$0xff]
  %v1620 = vld [vmem:[%s6 + $0x38] sm:$0xff]
  %v1621 = vld [vmem:[%s6 + $0x40] sm:$0xff]
  %v1622 = vld [vmem:[%s6 + $0x48] sm:$0xff]
  %v1623 = vld [vmem:[%s6 + $0x50] sm:$0xff]
  %v1624 = vld [vmem:[%s6 + $0x58] sm:$0xff]
  %v1625 = vld [vmem:[%s6 + $0x60] sm:$0xff]
  %v1626 = vld [vmem:[%s6 + $0x68] sm:$0xff]
  %v1627 = vld [vmem:[%s6 + $0x70] sm:$0xff]
  %v1628 = vld [vmem:[%s6 + $0x78] sm:$0xff]
  %v1629 = vld [vmem:[%s6 + $0x80] sm:$0xff]
  %v1630 = vld [vmem:[%s6 + $0x88] sm:$0xff]
  %v1631 = vld [vmem:[%s6 + $0x90] sm:$0xff]
  %v1632 = vld [vmem:[%s6 + $0x98] sm:$0xff]
  %v1633 = vld [vmem:[%s6 + $0xa0] sm:$0xff]
  %v1634 = vld [vmem:[%s6 + $0xa8] sm:$0xff]
  %v1635 = vld [vmem:[%s6 + $0xb0] sm:$0xff]
  %v1636 = vld [vmem:[%s6 + $0xb8] sm:$0xff]
  %v1637 = vld [vmem:[%s6 + $0xc0] sm:$0xff]
  %v1638 = vld [vmem:[%s6 + $0xc8] sm:$0xff]
  %v1639 = vld [vmem:[%s6 + $0xd0] sm:$0xff]
  %v1640 = vld [vmem:[%s6 + $0xd8] sm:$0xff]
  %v1641 = vld [vmem:[%s6 + $0xe0] sm:$0xff]
  %v1642 = vld [vmem:[%s6 + $0xe8] sm:$0xff]
  %v1643 = vld [vmem:[%s6 + $0xf0] sm:$0xff]
  %v1644 = vld [vmem:[%s6 + $0xf8] sm:$0xff]
  %v1645 = vld [vmem:[%s8] sm:$0xf]
  %v1647 = vlaneseq
  %v1648 = vshrl.u32 %v1647, 7
  %v1649 = vsub.s32 0, %v1648
  %v1650 = vrot.slane %v1645, %v1649
  %v1651 = vlaneseq
  %v1652 = vshrl.u32 %v1651, 7
  %v1653 = vsub.s32 1, %v1652
  %v1654 = vrot.slane %v1645, %v1653
  %v1655 = vlaneseq
  %v1656 = vshrl.u32 %v1655, 7
  %v1657 = vsub.s32 2, %v1656
  %v1658 = vrot.slane %v1645, %v1657
  %v1659 = vlaneseq
  %v1660 = vshrl.u32 %v1659, 7
  %v1661 = vsub.s32 3, %v1660
  %v1662 = vrot.slane %v1645, %v1661
  %v1675 = vunpack.c.l.b16 %v1605
  %v1676 = vunpack.c.l.b16 %v1606
  %v1677 = vunpack.c.l.b16 %v1607
  %v1678 = vunpack.c.l.b16 %v1608
  %v1679 = vunpack.c.l.b16 %v1609
  %v1680 = vunpack.c.l.b16 %v1610
  %v1681 = vunpack.c.l.b16 %v1611
  %v1682 = vunpack.c.l.b16 %v1612
  %v1683 = vpack.c.b16 %v1676, %v1675
  %v1684 = vpack.c.b16 %v1678, %v1677
  %v1685 = vpack.c.b16 %v1680, %v1679
  %v1686 = vpack.c.b16 %v1682, %v1681
  %v1723 = vunpack.c.l.b16 %v1613
  %v1724 = vunpack.c.h.b16 %v1613
  %v1725 = vunpack.c.l.b16 %v1614
  %v1726 = vunpack.c.h.b16 %v1614
  %v1727 = vunpack.c.l.b16 %v1615
  %v1728 = vunpack.c.h.b16 %v1615
  %v1729 = vunpack.c.l.b16 %v1616
  %v1730 = vunpack.c.h.b16 %v1616
  %v1731 = vunpack.c.l.b16 %v1617
  %v1732 = vunpack.c.h.b16 %v1617
  %v1733 = vunpack.c.l.b16 %v1618
  %v1734 = vunpack.c.h.b16 %v1618
  %v1735 = vunpack.c.l.b16 %v1619
  %v1736 = vunpack.c.h.b16 %v1619
  %v1737 = vunpack.c.l.b16 %v1620
  %v1738 = vunpack.c.h.b16 %v1620
  %v1739 = vunpack.c.l.b16 %v1621
  %v1740 = vunpack.c.h.b16 %v1621
  %v1741 = vunpack.c.l.b16 %v1622
  %v1742 = vunpack.c.h.b16 %v1622
  %v1743 = vunpack.c.l.b16 %v1623
  %v1744 = vunpack.c.h.b16 %v1623
  %v1745 = vunpack.c.l.b16 %v1624
  %v1746 = vunpack.c.h.b16 %v1624
  %v1747 = vunpack.c.l.b16 %v1625
  %v1748 = vunpack.c.h.b16 %v1625
  %v1749 = vunpack.c.l.b16 %v1626
  %v1750 = vunpack.c.h.b16 %v1626
  %v1751 = vunpack.c.l.b16 %v1627
  %v1752 = vunpack.c.h.b16 %v1627
  %v1753 = vunpack.c.l.b16 %v1628
  %v1754 = vunpack.c.h.b16 %v1628
  %v1755 = vunpack.c.l.b16 %v1629
  %v1756 = vunpack.c.h.b16 %v1629
  %v1757 = vunpack.c.l.b16 %v1630
  %v1758 = vunpack.c.h.b16 %v1630
  %v1759 = vunpack.c.l.b16 %v1631
  %v1760 = vunpack.c.h.b16 %v1631
  %v1761 = vunpack.c.l.b16 %v1632
  %v1762 = vunpack.c.h.b16 %v1632
  %v1763 = vunpack.c.l.b16 %v1633
  %v1764 = vunpack.c.h.b16 %v1633
  %v1765 = vunpack.c.l.b16 %v1634
  %v1766 = vunpack.c.h.b16 %v1634
  %v1767 = vunpack.c.l.b16 %v1635
  %v1768 = vunpack.c.h.b16 %v1635
  %v1769 = vunpack.c.l.b16 %v1636
  %v1770 = vunpack.c.h.b16 %v1636
  %v1771 = vunpack.c.l.b16 %v1637
  %v1772 = vunpack.c.h.b16 %v1637
  %v1773 = vunpack.c.l.b16 %v1638
  %v1774 = vunpack.c.h.b16 %v1638
  %v1775 = vunpack.c.l.b16 %v1639
  %v1776 = vunpack.c.h.b16 %v1639
  %v1777 = vunpack.c.l.b16 %v1640
  %v1778 = vunpack.c.h.b16 %v1640
  %v1779 = vunpack.c.l.b16 %v1641
  %v1780 = vunpack.c.h.b16 %v1641
  %v1781 = vunpack.c.l.b16 %v1642
  %v1782 = vunpack.c.h.b16 %v1642
  %v1783 = vunpack.c.l.b16 %v1643
  %v1784 = vunpack.c.h.b16 %v1643
  %v1785 = vunpack.c.l.b16 %v1644
  %v1786 = vunpack.c.h.b16 %v1644
  %v1787 = vpack.c.b16 %v1727, %v1723
  %v1788 = vpack.c.b16 %v1728, %v1724
  %v1789 = vpack.c.b16 %v1729, %v1725
  %v1790 = vpack.c.b16 %v1730, %v1726
  %v1791 = vpack.c.b16 %v1735, %v1731
  %v1792 = vpack.c.b16 %v1736, %v1732
  %v1793 = vpack.c.b16 %v1737, %v1733
  %v1794 = vpack.c.b16 %v1738, %v1734
  %v1795 = vpack.c.b16 %v1743, %v1739
  %v1796 = vpack.c.b16 %v1744, %v1740
  %v1797 = vpack.c.b16 %v1745, %v1741
  %v1798 = vpack.c.b16 %v1746, %v1742
  %v1799 = vpack.c.b16 %v1751, %v1747
  %v1800 = vpack.c.b16 %v1752, %v1748
  %v1801 = vpack.c.b16 %v1753, %v1749
  %v1802 = vpack.c.b16 %v1754, %v1750
  %v1803 = vpack.c.b16 %v1759, %v1755
  %v1804 = vpack.c.b16 %v1760, %v1756
  %v1805 = vpack.c.b16 %v1761, %v1757
  %v1806 = vpack.c.b16 %v1762, %v1758
  %v1807 = vpack.c.b16 %v1767, %v1763
  %v1808 = vpack.c.b16 %v1768, %v1764
  %v1809 = vpack.c.b16 %v1769, %v1765
  %v1810 = vpack.c.b16 %v1770, %v1766
  %v1811 = vpack.c.b16 %v1775, %v1771
  %v1812 = vpack.c.b16 %v1776, %v1772
  %v1813 = vpack.c.b16 %v1777, %v1773
  %v1814 = vpack.c.b16 %v1778, %v1774
  %v1815 = vpack.c.b16 %v1783, %v1779
  %v1816 = vpack.c.b16 %v1784, %v1780
  %v1817 = vpack.c.b16 %v1785, %v1781
  %v1818 = vpack.c.b16 %v1786, %v1782
  %1851 = vmatprep.subr.bf16.mxu0 %v1788
  %1852 = vmatpush1.bf16.msra.mxu0 %v1787
  %1853 = vmatprep.subr.bf16.mxu0 %v1792
  %1854 = vmatpush1.bf16.msra.mxu0 %v1791
  %1855 = vmatprep.subr.bf16.mxu0 %v1796
  %1856 = vmatpush1.bf16.msra.mxu0 %v1795
  %1857 = vmatprep.subr.bf16.mxu0 %v1800
  %1858 = vmatpush1.bf16.msra.mxu0 %v1799
  %1859 = vmatprep.subr.bf16.mxu0 %v1804
  %1860 = vmatpush1.bf16.msra.mxu0 %v1803
  %1861 = vmatprep.subr.bf16.mxu0 %v1808
  %1862 = vmatpush1.bf16.msra.mxu0 %v1807
  %1863 = vmatprep.subr.bf16.mxu0 %v1812
  %1864 = vmatpush1.bf16.msra.mxu0 %v1811
  %1865 = vmatprep.subr.bf16.mxu0 %v1816
  %1866 = vmatpush1.bf16.msra.mxu0 %v1815
  %1867 = vmatprep.subr.bf16.mxu0 0
  %1868 = vmatpush1.bf16.msra.mxu0 0
  %1869 = vmatprep.subr.bf16.mxu0 0
  %1870 = vmatpush1.bf16.msra.mxu0 0
  %1871 = vmatprep.subr.bf16.mxu0 0
  %1872 = vmatpush1.bf16.msra.mxu0 0
  %1873 = vmatprep.subr.bf16.mxu0 0
  %1874 = vmatpush1.bf16.msra.mxu0 0
  %1875 = vmatprep.subr.bf16.mxu0 0
  %1876 = vmatpush1.bf16.msra.mxu0 0
  %1877 = vmatprep.subr.bf16.mxu0 0
  %1878 = vmatpush1.bf16.msra.mxu0 0
  %1879 = vmatprep.subr.bf16.mxu0 0
  %1880 = vmatpush1.bf16.msra.mxu0 0
  %1881 = vmatprep.subr.bf16.mxu0 0
  %1882 = vmatpush1.bf16.msra.mxu0 0
  %1883 = vmatprep.mubr.bf16.mxu0 0
  %1884 = vmatmul.mubr.bf16.gmra.mrb[0].mxu0 %v1683
  %v1885 = vpop.f32.mrb[0].mxu0
  %v1886 = vadd.f32 %v1650, %v1885
  %v1887 = vpop.f32.mrb[0].mxu0
  %v1888 = vadd.f32 %v1654, %v1887
  %v1889 = vpop.f32.mrb[0].mxu0
  %v1890 = vadd.f32 %v1650, %v1889
  %v1891 = vpop.f32.mrb[0].mxu0
  %v1892 = vadd.f32 %v1654, %v1891
  %1893 = vmatprep.mubr.bf16.mxu0 0
  %1894 = vmatmul.mubr.bf16.gmra.mrb[0].mxu0 %v1684
  %v1895 = vpop.f32.mrb[0].mxu0
  %v1896 = vadd.f32 %v1650, %v1895
  %v1897 = vpop.f32.mrb[0].mxu0
  %v1898 = vadd.f32 %v1654, %v1897
  %v1899 = vpop.f32.mrb[0].mxu0
  %v1900 = vadd.f32 %v1650, %v1899
  %v1901 = vpop.f32.mrb[0].mxu0
  %v1902 = vadd.f32 %v1654, %v1901
  %1903 = vmatprep.mubr.bf16.mxu0 0
  %1904 = vmatmul.mubr.bf16.gmra.mrb[0].mxu0 %v1685
  %v1905 = vpop.f32.mrb[0].mxu0
  %v1906 = vadd.f32 %v1650, %v1905
  %v1907 = vpop.f32.mrb[0].mxu0
  %v1908 = vadd.f32 %v1654, %v1907
  %v1909 = vpop.f32.mrb[0].mxu0
  %v1910 = vadd.f32 %v1650, %v1909
  %v1911 = vpop.f32.mrb[0].mxu0
  %v1912 = vadd.f32 %v1654, %v1911
  %1913 = vmatprep.mubr.bf16.mxu0 0
  %1914 = vmatmul.mubr.bf16.gmra.mrb[0].mxu0 %v1686
  %v1915 = vpop.f32.mrb[0].mxu0
  %v1916 = vadd.f32 %v1650, %v1915
  %v1917 = vpop.f32.mrb[0].mxu0
  %v1918 = vadd.f32 %v1654, %v1917
  %v1919 = vpop.f32.mrb[0].mxu0
  %v1920 = vadd.f32 %v1650, %v1919
  %v1921 = vpop.f32.mrb[0].mxu0
  %v1922 = vadd.f32 %v1654, %v1921
  %1923 = vdwg.mxu0
  %1924 = vmatprep.subr.bf16.mxu0 %v1790
  %1925 = vmatpush1.bf16.msra.mxu0 %v1789
  %1926 = vmatprep.subr.bf16.mxu0 %v1794
  %1927 = vmatpush1.bf16.msra.mxu0 %v1793
  %1928 = vmatprep.subr.bf16.mxu0 %v1798
  %1929 = vmatpush1.bf16.msra.mxu0 %v1797
  %1930 = vmatprep.subr.bf16.mxu0 %v1802
  %1931 = vmatpush1.bf16.msra.mxu0 %v1801
  %1932 = vmatprep.subr.bf16.mxu0 %v1806
  %1933 = vmatpush1.bf16.msra.mxu0 %v1805
  %1934 = vmatprep.subr.bf16.mxu0 %v1810
  %1935 = vmatpush1.bf16.msra.mxu0 %v1809
  %1936 = vmatprep.subr.bf16.mxu0 %v1814
  %1937 = vmatpush1.bf16.msra.mxu0 %v1813
  %1938 = vmatprep.subr.bf16.mxu0 %v1818
  %1939 = vmatpush1.bf16.msra.mxu0 %v1817
  %1940 = vmatprep.subr.bf16.mxu0 0
  %1941 = vmatpush1.bf16.msra.mxu0 0
  %1942 = vmatprep.subr.bf16.mxu0 0
  %1943 = vmatpush1.bf16.msra.mxu0 0
  %1944 = vmatprep.subr.bf16.mxu0 0
  %1945 = vmatpush1.bf16.msra.mxu0 0
  %1946 = vmatprep.subr.bf16.mxu0 0
  %1947 = vmatpush1.bf16.msra.mxu0 0
  %1948 = vmatprep.subr.bf16.mxu0 0
  %1949 = vmatpush1.bf16.msra.mxu0 0
  %1950 = vmatprep.subr.bf16.mxu0 0
  %1951 = vmatpush1.bf16.msra.mxu0 0
  %1952 = vmatprep.subr.bf16.mxu0 0
  %1953 = vmatpush1.bf16.msra.mxu0 0
  %1954 = vmatprep.subr.bf16.mxu0 0
  %1955 = vmatpush1.bf16.msra.mxu0 0
  %1956 = vmatprep.mubr.bf16.mxu0 0
  %1957 = vmatmul.mubr.bf16.gmra.mrb[0].mxu0 %v1683
  %v1958 = vpop.f32.mrb[0].mxu0
  %v1959 = vadd.f32 %v1658, %v1958
  %v1960 = vpop.f32.mrb[0].mxu0
  %v1961 = vadd.f32 %v1662, %v1960
  %v1962 = vpop.f32.mrb[0].mxu0
  %v1963 = vadd.f32 %v1658, %v1962
  %v1964 = vpop.f32.mrb[0].mxu0
  %v1965 = vadd.f32 %v1662, %v1964
  %1966 = vmatprep.mubr.bf16.mxu0 0
  %1967 = vmatmul.mubr.bf16.gmra.mrb[0].mxu0 %v1684
  %v1968 = vpop.f32.mrb[0].mxu0
  %v1969 = vadd.f32 %v1658, %v1968
  %v1970 = vpop.f32.mrb[0].mxu0
  %v1971 = vadd.f32 %v1662, %v1970
  %v1972 = vpop.f32.mrb[0].mxu0
  %v1973 = vadd.f32 %v1658, %v1972
  %v1974 = vpop.f32.mrb[0].mxu0
  %v1975 = vadd.f32 %v1662, %v1974
  %1976 = vmatprep.mubr.bf16.mxu0 0
  %1977 = vmatmul.mubr.bf16.gmra.mrb[0].mxu0 %v1685
  %v1978 = vpop.f32.mrb[0].mxu0
  %v1979 = vadd.f32 %v1658, %v1978
  %v1980 = vpop.f32.mrb[0].mxu0
  %v1981 = vadd.f32 %v1662, %v1980
  %v1982 = vpop.f32.mrb[0].mxu0
  %v1983 = vadd.f32 %v1658, %v1982
  %v1984 = vpop.f32.mrb[0].mxu0
  %v1985 = vadd.f32 %v1662, %v1984
  %1986 = vmatprep.mubr.bf16.mxu0 0
  %1987 = vmatmul.mubr.bf16.gmra.mrb[0].mxu0 %v1686
  %v1988 = vpop.f32.mrb[0].mxu0
  %v1989 = vadd.f32 %v1658, %v1988
  %v1990 = vpop.f32.mrb[0].mxu0
  %v1991 = vadd.f32 %v1662, %v1990
  %v1992 = vpop.f32.mrb[0].mxu0
  %v1993 = vadd.f32 %v1658, %v1992
  %v1994 = vpop.f32.mrb[0].mxu0
  %v1995 = vadd.f32 %v1662, %v1994
  %1996 = vdwg.mxu0
  %1997 = vst [vmem:[#allocation3] sm:$0xff] %v1886
  %1998 = vst [vmem:[#allocation3 + $0x8] sm:$0xff] %v1888
  %1999 = vst [vmem:[#allocation3 + $0x10] sm:$0xff] %v1959
  %2000 = vst [vmem:[#allocation3 + $0x18] sm:$0xff] %v1961
  %2001 = vst [vmem:[#allocation3 + $0x20] sm:$0xff] %v1890
  %2002 = vst [vmem:[#allocation3 + $0x28] sm:$0xff] %v1892
  %2003 = vst [vmem:[#allocation3 + $0x30] sm:$0xff] %v1963
  %2004 = vst [vmem:[#allocation3 + $0x38] sm:$0xff] %v1965
  %2005 = vst [vmem:[#allocation3 + $0x40] sm:$0xff] %v1896
  %2006 = vst [vmem:[#allocation3 + $0x48] sm:$0xff] %v1898
  %2007 = vst [vmem:[#allocation3 + $0x50] sm:$0xff] %v1969
  %2008 = vst [vmem:[#allocation3 + $0x58] sm:$0xff] %v1971
  %2009 = vst [vmem:[#allocation3 + $0x60] sm:$0xff] %v1900
  %2010 = vst [vmem:[#allocation3 + $0x68] sm:$0xff] %v1902
  %2011 = vst [vmem:[#allocation3 + $0x70] sm:$0xff] %v1973
  %2012 = vst [vmem:[#allocation3 + $0x78] sm:$0xff] %v1975
  %2013 = vst [vmem:[#allocation3 + $0x80] sm:$0xff] %v1906
  %2014 = vst [vmem:[#allocation3 + $0x88] sm:$0xff] %v1908
  %2015 = vst [vmem:[#allocation3 + $0x90] sm:$0xff] %v1979
  %2016 = vst [vmem:[#allocation3 + $0x98] sm:$0xff] %v1981
  %2017 = vst [vmem:[#allocation3 + $0xa0] sm:$0xff] %v1910
  %2018 = vst [vmem:[#allocation3 + $0xa8] sm:$0xff] %v1912
  %2019 = vst [vmem:[#allocation3 + $0xb0] sm:$0xff] %v1983
  %2020 = vst [vmem:[#allocation3 + $0xb8] sm:$0xff] %v1985
  %2021 = vst [vmem:[#allocation3 + $0xc0] sm:$0xff] %v1916
  %2022 = vst [vmem:[#allocation3 + $0xc8] sm:$0xff] %v1918
  %2023 = vst [vmem:[#allocation3 + $0xd0] sm:$0xff] %v1989
  %2024 = vst [vmem:[#allocation3 + $0xd8] sm:$0xff] %v1991
  %2025 = vst [vmem:[#allocation3 + $0xe0] sm:$0xff] %v1920
  %2026 = vst [vmem:[#allocation3 + $0xe8] sm:$0xff] %v1922
  %2027 = vst [vmem:[#allocation3 + $0xf0] sm:$0xff] %v1993
  %2028 = vst [vmem:[#allocation3 + $0xf8] sm:$0xff] %v1995
  %v2029 = vld [vmem:[%s7] sm:$0xff]
  %v2030 = vld [vmem:[%s7 + $0x8] sm:$0xff]
  %v2031 = vld [vmem:[%s7 + $0x10] sm:$0xff]
  %v2032 = vld [vmem:[%s7 + $0x18] sm:$0xff]
  %v2033 = vld [vmem:[%s7 + $0x20] sm:$0xff]
  %v2034 = vld [vmem:[%s7 + $0x28] sm:$0xff]
  %v2035 = vld [vmem:[%s7 + $0x30] sm:$0xff]
  %v2036 = vld [vmem:[%s7 + $0x38] sm:$0xff]
  %v2037 = vld [vmem:[%s7 + $0x40] sm:$0xff]
  %v2038 = vld [vmem:[%s7 + $0x48] sm:$0xff]
  %v2039 = vld [vmem:[%s7 + $0x50] sm:$0xff]
  %v2040 = vld [vmem:[%s7 + $0x58] sm:$0xff]
  %v2041 = vld [vmem:[%s7 + $0x60] sm:$0xff]
  %v2042 = vld [vmem:[%s7 + $0x68] sm:$0xff]
  %v2043 = vld [vmem:[%s7 + $0x70] sm:$0xff]
  %v2044 = vld [vmem:[%s7 + $0x78] sm:$0xff]
  %v2045 = vld [vmem:[%s7 + $0x80] sm:$0xff]
  %v2046 = vld [vmem:[%s7 + $0x88] sm:$0xff]
  %v2047 = vld [vmem:[%s7 + $0x90] sm:$0xff]
  %v2048 = vld [vmem:[%s7 + $0x98] sm:$0xff]
  %v2049 = vld [vmem:[%s7 + $0xa0] sm:$0xff]
  %v2050 = vld [vmem:[%s7 + $0xa8] sm:$0xff]
  %v2051 = vld [vmem:[%s7 + $0xb0] sm:$0xff]
  %v2052 = vld [vmem:[%s7 + $0xb8] sm:$0xff]
  %v2053 = vld [vmem:[%s7 + $0xc0] sm:$0xff]
  %v2054 = vld [vmem:[%s7 + $0xc8] sm:$0xff]
  %v2055 = vld [vmem:[%s7 + $0xd0] sm:$0xff]
  %v2056 = vld [vmem:[%s7 + $0xd8] sm:$0xff]
  %v2057 = vld [vmem:[%s7 + $0xe0] sm:$0xff]
  %v2058 = vld [vmem:[%s7 + $0xe8] sm:$0xff]
  %v2059 = vld [vmem:[%s7 + $0xf0] sm:$0xff]
  %v2060 = vld [vmem:[%s7 + $0xf8] sm:$0xff]
  %s2061 = scalar_lea.vmem %s1, 8
  %v2062 = vld [vmem:[%s2061] sm:$0xff]
  %s2063 = scalar_lea.vmem %s2, 8
  %v2064 = vld [vmem:[%s2063] sm:$0xff]
  %v2065 = vld [vmem:[#allocation3] sm:$0xff]
  %v2066 = vld [vmem:[#allocation3 + $0x8] sm:$0xff]
  %v2067 = vld [vmem:[#allocation3 + $0x10] sm:$0xff]
  %v2068 = vld [vmem:[#allocation3 + $0x18] sm:$0xff]
  %v2069 = vpack.c.bf16 %v2062, %v2062
  %v2102 = vunpack.c.l.b16 %v2029
  %v2103 = vunpack.c.h.b16 %v2029
  %v2104 = vunpack.c.l.b16 %v2030
  %v2105 = vunpack.c.h.b16 %v2030
  %v2106 = vunpack.c.l.b16 %v2031
  %v2107 = vunpack.c.h.b16 %v2031
  %v2108 = vunpack.c.l.b16 %v2032
  %v2109 = vunpack.c.h.b16 %v2032
  %v2110 = vunpack.c.l.b16 %v2033
  %v2111 = vunpack.c.h.b16 %v2033
  %v2112 = vunpack.c.l.b16 %v2034
  %v2113 = vunpack.c.h.b16 %v2034
  %v2114 = vunpack.c.l.b16 %v2035
  %v2115 = vunpack.c.h.b16 %v2035
  %v2116 = vunpack.c.l.b16 %v2036
  %v2117 = vunpack.c.h.b16 %v2036
  %v2118 = vunpack.c.l.b16 %v2037
  %v2119 = vunpack.c.h.b16 %v2037
  %v2120 = vunpack.c.l.b16 %v2038
  %v2121 = vunpack.c.h.b16 %v2038
  %v2122 = vunpack.c.l.b16 %v2039
  %v2123 = vunpack.c.h.b16 %v2039
  %v2124 = vunpack.c.l.b16 %v2040
  %v2125 = vunpack.c.h.b16 %v2040
  %v2126 = vunpack.c.l.b16 %v2041
  %v2127 = vunpack.c.h.b16 %v2041
  %v2128 = vunpack.c.l.b16 %v2042
  %v2129 = vunpack.c.h.b16 %v2042
  %v2130 = vunpack.c.l.b16 %v2043
  %v2131 = vunpack.c.h.b16 %v2043
  %v2132 = vunpack.c.l.b16 %v2044
  %v2133 = vunpack.c.h.b16 %v2044
  %v2134 = vunpack.c.l.b16 %v2045
  %v2135 = vunpack.c.h.b16 %v2045
  %v2136 = vunpack.c.l.b16 %v2046
  %v2137 = vunpack.c.h.b16 %v2046
  %v2138 = vunpack.c.l.b16 %v2047
  %v2139 = vunpack.c.h.b16 %v2047
  %v2140 = vunpack.c.l.b16 %v2048
  %v2141 = vunpack.c.h.b16 %v2048
  %v2142 = vunpack.c.l.b16 %v2049
  %v2143 = vunpack.c.h.b16 %v2049
  %v2144 = vunpack.c.l.b16 %v2050
  %v2145 = vunpack.c.h.b16 %v2050
  %v2146 = vunpack.c.l.b16 %v2051
  %v2147 = vunpack.c.h.b16 %v2051
  %v2148 = vunpack.c.l.b16 %v2052
  %v2149 = vunpack.c.h.b16 %v2052
  %v2150 = vunpack.c.l.b16 %v2053
  %v2151 = vunpack.c.h.b16 %v2053
  %v2152 = vunpack.c.l.b16 %v2054
  %v2153 = vunpack.c.h.b16 %v2054
  %v2154 = vunpack.c.l.b16 %v2055
  %v2155 = vunpack.c.h.b16 %v2055
  %v2156 = vunpack.c.l.b16 %v2056
  %v2157 = vunpack.c.h.b16 %v2056
  %v2158 = vunpack.c.l.b16 %v2057
  %v2159 = vunpack.c.h.b16 %v2057
  %v2160 = vunpack.c.l.b16 %v2058
  %v2161 = vunpack.c.h.b16 %v2058
  %v2162 = vunpack.c.l.b16 %v2059
  %v2163 = vunpack.c.h.b16 %v2059
  %v2164 = vunpack.c.l.b16 %v2060
  %v2165 = vunpack.c.h.b16 %v2060
  %v2166 = vpack.c.b16 %v2106, %v2102
  %v2167 = vpack.c.b16 %v2107, %v2103
  %v2168 = vpack.c.b16 %v2108, %v2104
  %v2169 = vpack.c.b16 %v2109, %v2105
  %v2170 = vpack.c.b16 %v2114, %v2110
  %v2171 = vpack.c.b16 %v2115, %v2111
  %v2172 = vpack.c.b16 %v2116, %v2112
  %v2173 = vpack.c.b16 %v2117, %v2113
  %v2174 = vpack.c.b16 %v2122, %v2118
  %v2175 = vpack.c.b16 %v2123, %v2119
  %v2176 = vpack.c.b16 %v2124, %v2120
  %v2177 = vpack.c.b16 %v2125, %v2121
  %v2178 = vpack.c.b16 %v2130, %v2126
  %v2179 = vpack.c.b16 %v2131, %v2127
  %v2180 = vpack.c.b16 %v2132, %v2128
  %v2181 = vpack.c.b16 %v2133, %v2129
  %v2182 = vpack.c.b16 %v2138, %v2134
  %v2183 = vpack.c.b16 %v2139, %v2135
  %v2184 = vpack.c.b16 %v2140, %v2136
  %v2185 = vpack.c.b16 %v2141, %v2137
  %v2186 = vpack.c.b16 %v2146, %v2142
  %v2187 = vpack.c.b16 %v2147, %v2143
  %v2188 = vpack.c.b16 %v2148, %v2144
  %v2189 = vpack.c.b16 %v2149, %v2145
  %v2190 = vpack.c.b16 %v2154, %v2150
  %v2191 = vpack.c.b16 %v2155, %v2151
  %v2192 = vpack.c.b16 %v2156, %v2152
  %v2193 = vpack.c.b16 %v2157, %v2153
  %v2194 = vpack.c.b16 %v2162, %v2158
  %v2195 = vpack.c.b16 %v2163, %v2159
  %v2196 = vpack.c.b16 %v2164, %v2160
  %v2197 = vpack.c.b16 %v2165, %v2161
  %2230 = vmatprep.subr.bf16.mxu0 %v2167
  %2231 = vmatpush1.bf16.msra.mxu0 %v2166
  %2232 = vmatprep.subr.bf16.mxu0 %v2171
  %2233 = vmatpush1.bf16.msra.mxu0 %v2170
  %2234 = vmatprep.subr.bf16.mxu0 %v2175
  %2235 = vmatpush1.bf16.msra.mxu0 %v2174
  %2236 = vmatprep.subr.bf16.mxu0 %v2179
  %2237 = vmatpush1.bf16.msra.mxu0 %v2178
  %2238 = vmatprep.subr.bf16.mxu0 %v2183
  %2239 = vmatpush1.bf16.msra.mxu0 %v2182
  %2240 = vmatprep.subr.bf16.mxu0 %v2187
  %2241 = vmatpush1.bf16.msra.mxu0 %v2186
  %2242 = vmatprep.subr.bf16.mxu0 %v2191
  %2243 = vmatpush1.bf16.msra.mxu0 %v2190
  %2244 = vmatprep.subr.bf16.mxu0 %v2195
  %2245 = vmatpush1.bf16.msra.mxu0 %v2194
  %2246 = vmatprep.subr.bf16.mxu0 0
  %2247 = vmatpush1.bf16.msra.mxu0 0
  %2248 = vmatprep.subr.bf16.mxu0 0
  %2249 = vmatpush1.bf16.msra.mxu0 0
  %2250 = vmatprep.subr.bf16.mxu0 0
  %2251 = vmatpush1.bf16.msra.mxu0 0
  %2252 = vmatprep.subr.bf16.mxu0 0
  %2253 = vmatpush1.bf16.msra.mxu0 0
  %2254 = vmatprep.subr.bf16.mxu0 0
  %2255 = vmatpush1.bf16.msra.mxu0 0
  %2256 = vmatprep.subr.bf16.mxu0 0
  %2257 = vmatpush1.bf16.msra.mxu0 0
  %2258 = vmatprep.subr.bf16.mxu0 0
  %2259 = vmatpush1.bf16.msra.mxu0 0
  %2260 = vmatprep.subr.bf16.mxu0 0
  %2261 = vmatpush1.bf16.msra.mxu0 0
  %2262 = vmatprep.mubr.bf16.mxu0 0
  %2263 = vmatmul.mubr.bf16.gmra.mrb[0].mxu0 %v2069
  %v2264 = vpop.f32.mrb[0].mxu0
  %v2265 = vadd.f32 0.0, %v2264
  %v2266 = vpop.f32.mrb[0].mxu0
  %v2267 = vadd.f32 0.0, %v2266
  %v2268 = vpop.f32.mrb[0].mxu0
  %v2269 = vpop.f32.mrb[0].mxu0
  %2270 = vdwg.mxu0
  %2271 = vmatprep.subr.bf16.mxu0 %v2169
  %2272 = vmatpush1.bf16.msra.mxu0 %v2168
  %2273 = vmatprep.subr.bf16.mxu0 %v2173
  %2274 = vmatpush1.bf16.msra.mxu0 %v2172
  %2275 = vmatprep.subr.bf16.mxu0 %v2177
  %2276 = vmatpush1.bf16.msra.mxu0 %v2176
  %2277 = vmatprep.subr.bf16.mxu0 %v2181
  %2278 = vmatpush1.bf16.msra.mxu0 %v2180
  %2279 = vmatprep.subr.bf16.mxu0 %v2185
  %2280 = vmatpush1.bf16.msra.mxu0 %v2184
  %2281 = vmatprep.subr.bf16.mxu0 %v2189
  %2282 = vmatpush1.bf16.msra.mxu0 %v2188
  %2283 = vmatprep.subr.bf16.mxu0 %v2193
  %2284 = vmatpush1.bf16.msra.mxu0 %v2192
  %2285 = vmatprep.subr.bf16.mxu0 %v2197
  %2286 = vmatpush1.bf16.msra.mxu0 %v2196
  %2287 = vmatprep.subr.bf16.mxu0 0
  %2288 = vmatpush1.bf16.msra.mxu0 0
  %2289 = vmatprep.subr.bf16.mxu0 0
  %2290 = vmatpush1.bf16.msra.mxu0 0
  %2291 = vmatprep.subr.bf16.mxu0 0
  %2292 = vmatpush1.bf16.msra.mxu0 0
  %2293 = vmatprep.subr.bf16.mxu0 0
  %2294 = vmatpush1.bf16.msra.mxu0 0
  %2295 = vmatprep.subr.bf16.mxu0 0
  %2296 = vmatpush1.bf16.msra.mxu0 0
  %2297 = vmatprep.subr.bf16.mxu0 0
  %2298 = vmatpush1.bf16.msra.mxu0 0
  %2299 = vmatprep.subr.bf16.mxu0 0
  %2300 = vmatpush1.bf16.msra.mxu0 0
  %2301 = vmatprep.subr.bf16.mxu0 0
  %2302 = vmatpush1.bf16.msra.mxu0 0
  %2303 = vmatprep.mubr.bf16.mxu0 0
  %2304 = vmatmul.mubr.bf16.gmra.mrb[0].mxu0 %v2069
  %v2305 = vpop.f32.mrb[0].mxu0
  %v2306 = vadd.f32 0.0, %v2305
  %v2307 = vpop.f32.mrb[0].mxu0
  %v2308 = vadd.f32 0.0, %v2307
  %v2309 = vpop.f32.mrb[0].mxu0
  %v2310 = vpop.f32.mrb[0].mxu0
  %2311 = vdwg.mxu0
  %v2312 = vadd.f32 %v2065, %v2265
  %v2313 = vadd.f32 %v2066, %v2267
  %v2314 = vadd.f32 %v2067, %v2306
  %v2315 = vadd.f32 %v2068, %v2308
  %v2316 = vxor.u32 %v2312, 2147483648
  %v2317 = vmul.f32 %v2316, 1.442695
  %v2318 = vpow.pop %v2317
  %v2319 = vadd.f32 %v2318, 1.0
  %v2320 = vrcp.pop %v2319
  %v2321 = vmul.f32 1.0, %v2320
  %v2322 = vxor.u32 %v2313, 2147483648
  %v2323 = vmul.f32 %v2322, 1.442695
  %v2324 = vpow.pop %v2323
  %v2325 = vadd.f32 %v2324, 1.0
  %v2326 = vrcp.pop %v2325
  %v2327 = vmul.f32 1.0, %v2326
  %v2328 = vtanh.pop %v2314
  %v2329 = vxor.u32 %v2315, 2147483648
  %v2330 = vmul.f32 %v2329, 1.442695
  %v2331 = vpow.pop %v2330
  %v2332 = vadd.f32 %v2331, 1.0
  %v2333 = vrcp.pop %v2332
  %v2334 = vmul.f32 1.0, %v2333
  %v2335 = vmul.f32 %v2327, %v2064
  %v2336 = vmul.f32 %v2321, %v2328
  %v2337 = vadd.f32 %v2335, %v2336
  %v2338 = vtanh.pop %v2337
  %v2339 = vmul.f32 %v2334, %v2338
  %v2340 = vpack.c.bf16 %v2339, %v2339
  %2341 = vst [vmem:[#allocation2] sm:$0xf] %v2340
  %v2342 = vld [vmem:[%s777] sm:$0xff]
  %v2343 = vld [vmem:[%s777 + $0x8] sm:$0xff]
  %v2344 = vld [vmem:[%s777 + $0x10] sm:$0xff]
  %v2345 = vld [vmem:[%s777 + $0x18] sm:$0xff]
  %2346 = vmatprep.subr.bf16.mxu0 %v2167
  %2347 = vmatpush1.bf16.msra.mxu0 %v2166
  %2348 = vmatprep.subr.bf16.mxu0 %v2171
  %2349 = vmatpush1.bf16.msra.mxu0 %v2170
  %2350 = vmatprep.subr.bf16.mxu0 %v2175
  %2351 = vmatpush1.bf16.msra.mxu0 %v2174
  %2352 = vmatprep.subr.bf16.mxu0 %v2179
  %2353 = vmatpush1.bf16.msra.mxu0 %v2178
  %2354 = vmatprep.subr.bf16.mxu0 %v2183
  %2355 = vmatpush1.bf16.msra.mxu0 %v2182
  %2356 = vmatprep.subr.bf16.mxu0 %v2187
  %2357 = vmatpush1.bf16.msra.mxu0 %v2186
  %2358 = vmatprep.subr.bf16.mxu0 %v2191
  %2359 = vmatpush1.bf16.msra.mxu0 %v2190
  %2360 = vmatprep.subr.bf16.mxu0 %v2195
  %2361 = vmatpush1.bf16.msra.mxu0 %v2194
  %2362 = vmatprep.subr.bf16.mxu0 0
  %2363 = vmatpush1.bf16.msra.mxu0 0
  %2364 = vmatprep.subr.bf16.mxu0 0
  %2365 = vmatpush1.bf16.msra.mxu0 0
  %2366 = vmatprep.subr.bf16.mxu0 0
  %2367 = vmatpush1.bf16.msra.mxu0 0
  %2368 = vmatprep.subr.bf16.mxu0 0
  %2369 = vmatpush1.bf16.msra.mxu0 0
  %2370 = vmatprep.subr.bf16.mxu0 0
  %2371 = vmatpush1.bf16.msra.mxu0 0
  %2372 = vmatprep.subr.bf16.mxu0 0
  %2373 = vmatpush1.bf16.msra.mxu0 0
  %2374 = vmatprep.subr.bf16.mxu0 0
  %2375 = vmatpush1.bf16.msra.mxu0 0
  %2376 = vmatprep.subr.bf16.mxu0 0
  %2377 = vmatpush1.bf16.msra.mxu0 0
  %2378 = vmatprep.mubr.bf16.mxu0 0
  %2379 = vmatmul.mubr.bf16.gmra.mrb[0].mxu0 %v2340
  %v2380 = vpop.f32.mrb[0].mxu0
  %v2381 = vadd.f32 0.0, %v2380
  %v2382 = vpop.f32.mrb[0].mxu0
  %v2383 = vadd.f32 0.0, %v2382
  %v2384 = vpop.f32.mrb[0].mxu0
  %v2385 = vpop.f32.mrb[0].mxu0
  %2386 = vdwg.mxu0
  %2387 = vmatprep.subr.bf16.mxu0 %v2169
  %2388 = vmatpush1.bf16.msra.mxu0 %v2168
  %2389 = vmatprep.subr.bf16.mxu0 %v2173
  %2390 = vmatpush1.bf16.msra.mxu0 %v2172
  %2391 = vmatprep.subr.bf16.mxu0 %v2177
  %2392 = vmatpush1.bf16.msra.mxu0 %v2176
  %2393 = vmatprep.subr.bf16.mxu0 %v2181
  %2394 = vmatpush1.bf16.msra.mxu0 %v2180
  %2395 = vmatprep.subr.bf16.mxu0 %v2185
  %2396 = vmatpush1.bf16.msra.mxu0 %v2184
  %2397 = vmatprep.subr.bf16.mxu0 %v2189
  %2398 = vmatpush1.bf16.msra.mxu0 %v2188
  %2399 = vmatprep.subr.bf16.mxu0 %v2193
  %2400 = vmatpush1.bf16.msra.mxu0 %v2192
  %2401 = vmatprep.subr.bf16.mxu0 %v2197
  %2402 = vmatpush1.bf16.msra.mxu0 %v2196
  %2403 = vmatprep.subr.bf16.mxu0 0
  %2404 = vmatpush1.bf16.msra.mxu0 0
  %2405 = vmatprep.subr.bf16.mxu0 0
  %2406 = vmatpush1.bf16.msra.mxu0 0
  %2407 = vmatprep.subr.bf16.mxu0 0
  %2408 = vmatpush1.bf16.msra.mxu0 0
  %2409 = vmatprep.subr.bf16.mxu0 0
  %2410 = vmatpush1.bf16.msra.mxu0 0
  %2411 = vmatprep.subr.bf16.mxu0 0
  %2412 = vmatpush1.bf16.msra.mxu0 0
  %2413 = vmatprep.subr.bf16.mxu0 0
  %2414 = vmatpush1.bf16.msra.mxu0 0
  %2415 = vmatprep.subr.bf16.mxu0 0
  %2416 = vmatpush1.bf16.msra.mxu0 0
  %2417 = vmatprep.subr.bf16.mxu0 0
  %2418 = vmatpush1.bf16.msra.mxu0 0
  %2419 = vmatprep.mubr.bf16.mxu0 0
  %2420 = vmatmul.mubr.bf16.gmra.mrb[0].mxu0 %v2340
  %v2421 = vpop.f32.mrb[0].mxu0
  %v2422 = vadd.f32 0.0, %v2421
  %v2423 = vpop.f32.mrb[0].mxu0
  %v2424 = vadd.f32 0.0, %v2423
  %v2425 = vpop.f32.mrb[0].mxu0
  %v2426 = vpop.f32.mrb[0].mxu0
  %2427 = vdwg.mxu0
  %v2428 = vadd.f32 %v2342, %v2381
  %v2429 = vadd.f32 %v2343, %v2383
  %v2430 = vadd.f32 %v2344, %v2422
  %v2431 = vadd.f32 %v2345, %v2424
  %v2432 = vxor.u32 %v2428, 2147483648
  %v2433 = vmul.f32 %v2432, 1.442695
  %v2434 = vpow.pop %v2433
  %v2435 = vadd.f32 %v2434, 1.0
  %v2436 = vrcp.pop %v2435
  %v2437 = vmul.f32 1.0, %v2436
  %v2438 = vxor.u32 %v2429, 2147483648
  %v2439 = vmul.f32 %v2438, 1.442695
  %v2440 = vpow.pop %v2439
  %v2441 = vadd.f32 %v2440, 1.0
  %v2442 = vrcp.pop %v2441
  %v2443 = vmul.f32 1.0, %v2442
  %v2444 = vtanh.pop %v2430
  %v2445 = vxor.u32 %v2431, 2147483648
  %v2446 = vmul.f32 %v2445, 1.442695
  %v2447 = vpow.pop %v2446
  %v2448 = vadd.f32 %v2447, 1.0
  %v2449 = vrcp.pop %v2448
  %v2450 = vmul.f32 1.0, %v2449
  %v2451 = vmul.f32 %v2443, %v2337
  %v2452 = vmul.f32 %v2437, %v2444
  %v2453 = vadd.f32 %v2451, %v2452
  %v2454 = vtanh.pop %v2453
  %v2455 = vmul.f32 %v2450, %v2454
  %v2456 = vpack.c.bf16 %v2455, %v2455
  %2457 = vst [vmem:[%s893] sm:$0xf] %v2456
  %v2458 = vld [vmem:[%s895] sm:$0xff]
  %v2459 = vld [vmem:[%s895 + $0x8] sm:$0xff]
  %v2460 = vld [vmem:[%s895 + $0x10] sm:$0xff]
  %v2461 = vld [vmem:[%s895 + $0x18] sm:$0xff]
  %2462 = vmatprep.subr.bf16.mxu0 %v2167
  %2463 = vmatpush1.bf16.msra.mxu0 %v2166
  %2464 = vmatprep.subr.bf16.mxu0 %v2171
  %2465 = vmatpush1.bf16.msra.mxu0 %v2170
  %2466 = vmatprep.subr.bf16.mxu0 %v2175
  %2467 = vmatpush1.bf16.msra.mxu0 %v2174
  %2468 = vmatprep.subr.bf16.mxu0 %v2179
  %2469 = vmatpush1.bf16.msra.mxu0 %v2178
  %2470 = vmatprep.subr.bf16.mxu0 %v2183
  %2471 = vmatpush1.bf16.msra.mxu0 %v2182
  %2472 = vmatprep.subr.bf16.mxu0 %v2187
  %2473 = vmatpush1.bf16.msra.mxu0 %v2186
  %2474 = vmatprep.subr.bf16.mxu0 %v2191
  %2475 = vmatpush1.bf16.msra.mxu0 %v2190
  %2476 = vmatprep.subr.bf16.mxu0 %v2195
  %2477 = vmatpush1.bf16.msra.mxu0 %v2194
  %2478 = vmatprep.subr.bf16.mxu0 0
  %2479 = vmatpush1.bf16.msra.mxu0 0
  %2480 = vmatprep.subr.bf16.mxu0 0
  %2481 = vmatpush1.bf16.msra.mxu0 0
  %2482 = vmatprep.subr.bf16.mxu0 0
  %2483 = vmatpush1.bf16.msra.mxu0 0
  %2484 = vmatprep.subr.bf16.mxu0 0
  %2485 = vmatpush1.bf16.msra.mxu0 0
  %2486 = vmatprep.subr.bf16.mxu0 0
  %2487 = vmatpush1.bf16.msra.mxu0 0
  %2488 = vmatprep.subr.bf16.mxu0 0
  %2489 = vmatpush1.bf16.msra.mxu0 0
  %2490 = vmatprep.subr.bf16.mxu0 0
  %2491 = vmatpush1.bf16.msra.mxu0 0
  %2492 = vmatprep.subr.bf16.mxu0 0
  %2493 = vmatpush1.bf16.msra.mxu0 0
  %2494 = vmatprep.mubr.bf16.mxu0 0
  %2495 = vmatmul.mubr.bf16.gmra.mrb[0].mxu0 %v2456
  %v2496 = vpop.f32.mrb[0].mxu0
  %v2497 = vadd.f32 0.0, %v2496
  %v2498 = vpop.f32.mrb[0].mxu0
  %v2499 = vadd.f32 0.0, %v2498
  %v2500 = vpop.f32.mrb[0].mxu0
  %v2501 = vpop.f32.mrb[0].mxu0
  %2502 = vdwg.mxu0
  %2503 = vmatprep.subr.bf16.mxu0 %v2169
  %2504 = vmatpush1.bf16.msra.mxu0 %v2168
  %2505 = vmatprep.subr.bf16.mxu0 %v2173
  %2506 = vmatpush1.bf16.msra.mxu0 %v2172
  %2507 = vmatprep.subr.bf16.mxu0 %v2177
  %2508 = vmatpush1.bf16.msra.mxu0 %v2176
  %2509 = vmatprep.subr.bf16.mxu0 %v2181
  %2510 = vmatpush1.bf16.msra.mxu0 %v2180
  %2511 = vmatprep.subr.bf16.mxu0 %v2185
  %2512 = vmatpush1.bf16.msra.mxu0 %v2184
  %2513 = vmatprep.subr.bf16.mxu0 %v2189
  %2514 = vmatpush1.bf16.msra.mxu0 %v2188
  %2515 = vmatprep.subr.bf16.mxu0 %v2193
  %2516 = vmatpush1.bf16.msra.mxu0 %v2192
  %2517 = vmatprep.subr.bf16.mxu0 %v2197
  %2518 = vmatpush1.bf16.msra.mxu0 %v2196
  %2519 = vmatprep.subr.bf16.mxu0 0
  %2520 = vmatpush1.bf16.msra.mxu0 0
  %2521 = vmatprep.subr.bf16.mxu0 0
  %2522 = vmatpush1.bf16.msra.mxu0 0
  %2523 = vmatprep.subr.bf16.mxu0 0
  %2524 = vmatpush1.bf16.msra.mxu0 0
  %2525 = vmatprep.subr.bf16.mxu0 0
  %2526 = vmatpush1.bf16.msra.mxu0 0
  %2527 = vmatprep.subr.bf16.mxu0 0
  %2528 = vmatpush1.bf16.msra.mxu0 0
  %2529 = vmatprep.subr.bf16.mxu0 0
  %2530 = vmatpush1.bf16.msra.mxu0 0
  %2531 = vmatprep.subr.bf16.mxu0 0
  %2532 = vmatpush1.bf16.msra.mxu0 0
  %2533 = vmatprep.subr.bf16.mxu0 0
  %2534 = vmatpush1.bf16.msra.mxu0 0
  %2535 = vmatprep.mubr.bf16.mxu0 0
  %2536 = vmatmul.mubr.bf16.gmra.mrb[0].mxu0 %v2456
  %v2537 = vpop.f32.mrb[0].mxu0
  %v2538 = vadd.f32 0.0, %v2537
  %v2539 = vpop.f32.mrb[0].mxu0
  %v2540 = vadd.f32 0.0, %v2539
  %v2541 = vpop.f32.mrb[0].mxu0
  %v2542 = vpop.f32.mrb[0].mxu0
  %2543 = vdwg.mxu0
  %v2544 = vadd.f32 %v2458, %v2497
  %v2545 = vadd.f32 %v2459, %v2499
  %v2546 = vadd.f32 %v2460, %v2538
  %v2547 = vadd.f32 %v2461, %v2540
  %v2548 = vxor.u32 %v2544, 2147483648
  %v2549 = vmul.f32 %v2548, 1.442695
  %v2550 = vpow.pop %v2549
  %v2551 = vadd.f32 %v2550, 1.0
  %v2552 = vrcp.pop %v2551
  %v2553 = vmul.f32 1.0, %v2552
  %v2554 = vxor.u32 %v2545, 2147483648
  %v2555 = vmul.f32 %v2554, 1.442695
  %v2556 = vpow.pop %v2555
  %v2557 = vadd.f32 %v2556, 1.0
  %v2558 = vrcp.pop %v2557
  %v2559 = vmul.f32 1.0, %v2558
  %v2560 = vtanh.pop %v2546
  %v2561 = vxor.u32 %v2547, 2147483648
  %v2562 = vmul.f32 %v2561, 1.442695
  %v2563 = vpow.pop %v2562
  %v2564 = vadd.f32 %v2563, 1.0
  %v2565 = vrcp.pop %v2564
  %v2566 = vmul.f32 1.0, %v2565
  %v2567 = vmul.f32 %v2559, %v2453
  %v2568 = vmul.f32 %v2553, %v2560
  %v2569 = vadd.f32 %v2567, %v2568
  %v2570 = vtanh.pop %v2569
  %v2571 = vmul.f32 %v2566, %v2570
  %v2572 = vpack.c.bf16 %v2571, %v2571
  %2573 = vst [vmem:[%s1011] sm:$0xf] %v2572
  %v2574 = vld [vmem:[%s1013] sm:$0xff]
  %v2575 = vld [vmem:[%s1013 + $0x8] sm:$0xff]
  %v2576 = vld [vmem:[%s1013 + $0x10] sm:$0xff]
  %v2577 = vld [vmem:[%s1013 + $0x18] sm:$0xff]
  %2578 = vmatprep.subr.bf16.mxu0 %v2167
  %2579 = vmatpush1.bf16.msra.mxu0 %v2166
  %2580 = vmatprep.subr.bf16.mxu0 %v2171
  %2581 = vmatpush1.bf16.msra.mxu0 %v2170
  %2582 = vmatprep.subr.bf16.mxu0 %v2175
  %2583 = vmatpush1.bf16.msra.mxu0 %v2174
  %2584 = vmatprep.subr.bf16.mxu0 %v2179
  %2585 = vmatpush1.bf16.msra.mxu0 %v2178
  %2586 = vmatprep.subr.bf16.mxu0 %v2183
  %2587 = vmatpush1.bf16.msra.mxu0 %v2182
  %2588 = vmatprep.subr.bf16.mxu0 %v2187
  %2589 = vmatpush1.bf16.msra.mxu0 %v2186
  %2590 = vmatprep.subr.bf16.mxu0 %v2191
  %2591 = vmatpush1.bf16.msra.mxu0 %v2190
  %2592 = vmatprep.subr.bf16.mxu0 %v2195
  %2593 = vmatpush1.bf16.msra.mxu0 %v2194
  %2594 = vmatprep.subr.bf16.mxu0 0
  %2595 = vmatpush1.bf16.msra.mxu0 0
  %2596 = vmatprep.subr.bf16.mxu0 0
  %2597 = vmatpush1.bf16.msra.mxu0 0
  %2598 = vmatprep.subr.bf16.mxu0 0
  %2599 = vmatpush1.bf16.msra.mxu0 0
  %2600 = vmatprep.subr.bf16.mxu0 0
  %2601 = vmatpush1.bf16.msra.mxu0 0
  %2602 = vmatprep.subr.bf16.mxu0 0
  %2603 = vmatpush1.bf16.msra.mxu0 0
  %2604 = vmatprep.subr.bf16.mxu0 0
  %2605 = vmatpush1.bf16.msra.mxu0 0
  %2606 = vmatprep.subr.bf16.mxu0 0
  %2607 = vmatpush1.bf16.msra.mxu0 0
  %2608 = vmatprep.subr.bf16.mxu0 0
  %2609 = vmatpush1.bf16.msra.mxu0 0
  %2610 = vmatprep.mubr.bf16.mxu0 0
  %2611 = vmatmul.mubr.bf16.gmra.mrb[0].mxu0 %v2572
  %v2612 = vpop.f32.mrb[0].mxu0
  %v2613 = vadd.f32 0.0, %v2612
  %v2614 = vpop.f32.mrb[0].mxu0
  %v2615 = vadd.f32 0.0, %v2614
  %v2616 = vpop.f32.mrb[0].mxu0
  %v2617 = vpop.f32.mrb[0].mxu0
  %2618 = vdwg.mxu0
  %2619 = vmatprep.subr.bf16.mxu0 %v2169
  %2620 = vmatpush1.bf16.msra.mxu0 %v2168
  %2621 = vmatprep.subr.bf16.mxu0 %v2173
  %2622 = vmatpush1.bf16.msra.mxu0 %v2172
  %2623 = vmatprep.subr.bf16.mxu0 %v2177
  %2624 = vmatpush1.bf16.msra.mxu0 %v2176
  %2625 = vmatprep.subr.bf16.mxu0 %v2181
  %2626 = vmatpush1.bf16.msra.mxu0 %v2180
  %2627 = vmatprep.subr.bf16.mxu0 %v2185
  %2628 = vmatpush1.bf16.msra.mxu0 %v2184
  %2629 = vmatprep.subr.bf16.mxu0 %v2189
  %2630 = vmatpush1.bf16.msra.mxu0 %v2188
  %2631 = vmatprep.subr.bf16.mxu0 %v2193
  %2632 = vmatpush1.bf16.msra.mxu0 %v2192
  %2633 = vmatprep.subr.bf16.mxu0 %v2197
  %2634 = vmatpush1.bf16.msra.mxu0 %v2196
  %2635 = vmatprep.subr.bf16.mxu0 0
  %2636 = vmatpush1.bf16.msra.mxu0 0
  %2637 = vmatprep.subr.bf16.mxu0 0
  %2638 = vmatpush1.bf16.msra.mxu0 0
  %2639 = vmatprep.subr.bf16.mxu0 0
  %2640 = vmatpush1.bf16.msra.mxu0 0
  %2641 = vmatprep.subr.bf16.mxu0 0
  %2642 = vmatpush1.bf16.msra.mxu0 0
  %2643 = vmatprep.subr.bf16.mxu0 0
  %2644 = vmatpush1.bf16.msra.mxu0 0
  %2645 = vmatprep.subr.bf16.mxu0 0
  %2646 = vmatpush1.bf16.msra.mxu0 0
  %2647 = vmatprep.subr.bf16.mxu0 0
  %2648 = vmatpush1.bf16.msra.mxu0 0
  %2649 = vmatprep.subr.bf16.mxu0 0
  %2650 = vmatpush1.bf16.msra.mxu0 0
  %2651 = vmatprep.mubr.bf16.mxu0 0
  %2652 = vmatmul.mubr.bf16.gmra.mrb[0].mxu0 %v2572
  %v2653 = vpop.f32.mrb[0].mxu0
  %v2654 = vadd.f32 0.0, %v2653
  %v2655 = vpop.f32.mrb[0].mxu0
  %v2656 = vadd.f32 0.0, %v2655
  %v2657 = vpop.f32.mrb[0].mxu0
  %v2658 = vpop.f32.mrb[0].mxu0
  %2659 = vdwg.mxu0
  %v2660 = vadd.f32 %v2574, %v2613
  %v2661 = vadd.f32 %v2575, %v2615
  %v2662 = vadd.f32 %v2576, %v2654
  %v2663 = vadd.f32 %v2577, %v2656
  %v2664 = vxor.u32 %v2660, 2147483648
  %v2665 = vmul.f32 %v2664, 1.442695
  %v2666 = vpow.pop %v2665
  %v2667 = vadd.f32 %v2666, 1.0
  %v2668 = vrcp.pop %v2667
  %v2669 = vmul.f32 1.0, %v2668
  %v2670 = vxor.u32 %v2661, 2147483648
  %v2671 = vmul.f32 %v2670, 1.442695
  %v2672 = vpow.pop %v2671
  %v2673 = vadd.f32 %v2672, 1.0
  %v2674 = vrcp.pop %v2673
  %v2675 = vmul.f32 1.0, %v2674
  %v2676 = vtanh.pop %v2662
  %v2677 = vxor.u32 %v2663, 2147483648
  %v2678 = vmul.f32 %v2677, 1.442695
  %v2679 = vpow.pop %v2678
  %v2680 = vadd.f32 %v2679, 1.0
  %v2681 = vrcp.pop %v2680
  %v2682 = vmul.f32 1.0, %v2681
  %v2683 = vmul.f32 %v2675, %v2569
  %v2684 = vmul.f32 %v2669, %v2676
  %v2685 = vadd.f32 %v2683, %v2684
  %v2686 = vtanh.pop %v2685
  %v2687 = vmul.f32 %v2682, %v2686
  %v2688 = vpack.c.bf16 %v2687, %v2687
  %2689 = vst [vmem:[%s1129] sm:$0xf] %v2688
  %v2690 = vld [vmem:[%s1131] sm:$0xff]
  %v2691 = vld [vmem:[%s1131 + $0x8] sm:$0xff]
  %v2692 = vld [vmem:[%s1131 + $0x10] sm:$0xff]
  %v2693 = vld [vmem:[%s1131 + $0x18] sm:$0xff]
  %2694 = vmatprep.subr.bf16.mxu0 %v2167
  %2695 = vmatpush1.bf16.msra.mxu0 %v2166
  %2696 = vmatprep.subr.bf16.mxu0 %v2171
  %2697 = vmatpush1.bf16.msra.mxu0 %v2170
  %2698 = vmatprep.subr.bf16.mxu0 %v2175
  %2699 = vmatpush1.bf16.msra.mxu0 %v2174
  %2700 = vmatprep.subr.bf16.mxu0 %v2179
  %2701 = vmatpush1.bf16.msra.mxu0 %v2178
  %2702 = vmatprep.subr.bf16.mxu0 %v2183
  %2703 = vmatpush1.bf16.msra.mxu0 %v2182
  %2704 = vmatprep.subr.bf16.mxu0 %v2187
  %2705 = vmatpush1.bf16.msra.mxu0 %v2186
  %2706 = vmatprep.subr.bf16.mxu0 %v2191
  %2707 = vmatpush1.bf16.msra.mxu0 %v2190
  %2708 = vmatprep.subr.bf16.mxu0 %v2195
  %2709 = vmatpush1.bf16.msra.mxu0 %v2194
  %2710 = vmatprep.subr.bf16.mxu0 0
  %2711 = vmatpush1.bf16.msra.mxu0 0
  %2712 = vmatprep.subr.bf16.mxu0 0
  %2713 = vmatpush1.bf16.msra.mxu0 0
  %2714 = vmatprep.subr.bf16.mxu0 0
  %2715 = vmatpush1.bf16.msra.mxu0 0
  %2716 = vmatprep.subr.bf16.mxu0 0
  %2717 = vmatpush1.bf16.msra.mxu0 0
  %2718 = vmatprep.subr.bf16.mxu0 0
  %2719 = vmatpush1.bf16.msra.mxu0 0
  %2720 = vmatprep.subr.bf16.mxu0 0
  %2721 = vmatpush1.bf16.msra.mxu0 0
  %2722 = vmatprep.subr.bf16.mxu0 0
  %2723 = vmatpush1.bf16.msra.mxu0 0
  %2724 = vmatprep.subr.bf16.mxu0 0
  %2725 = vmatpush1.bf16.msra.mxu0 0
  %2726 = vmatprep.mubr.bf16.mxu0 0
  %2727 = vmatmul.mubr.bf16.gmra.mrb[0].mxu0 %v2688
  %v2728 = vpop.f32.mrb[0].mxu0
  %v2729 = vadd.f32 0.0, %v2728
  %v2730 = vpop.f32.mrb[0].mxu0
  %v2731 = vadd.f32 0.0, %v2730
  %v2732 = vpop.f32.mrb[0].mxu0
  %v2733 = vpop.f32.mrb[0].mxu0
  %2734 = vdwg.mxu0
  %2735 = vmatprep.subr.bf16.mxu0 %v2169
  %2736 = vmatpush1.bf16.msra.mxu0 %v2168
  %2737 = vmatprep.subr.bf16.mxu0 %v2173
  %2738 = vmatpush1.bf16.msra.mxu0 %v2172
  %2739 = vmatprep.subr.bf16.mxu0 %v2177
  %2740 = vmatpush1.bf16.msra.mxu0 %v2176
  %2741 = vmatprep.subr.bf16.mxu0 %v2181
  %2742 = vmatpush1.bf16.msra.mxu0 %v2180
  %2743 = vmatprep.subr.bf16.mxu0 %v2185
  %2744 = vmatpush1.bf16.msra.mxu0 %v2184
  %2745 = vmatprep.subr.bf16.mxu0 %v2189
  %2746 = vmatpush1.bf16.msra.mxu0 %v2188
  %2747 = vmatprep.subr.bf16.mxu0 %v2193
  %2748 = vmatpush1.bf16.msra.mxu0 %v2192
  %2749 = vmatprep.subr.bf16.mxu0 %v2197
  %2750 = vmatpush1.bf16.msra.mxu0 %v2196
  %2751 = vmatprep.subr.bf16.mxu0 0
  %2752 = vmatpush1.bf16.msra.mxu0 0
  %2753 = vmatprep.subr.bf16.mxu0 0
  %2754 = vmatpush1.bf16.msra.mxu0 0
  %2755 = vmatprep.subr.bf16.mxu0 0
  %2756 = vmatpush1.bf16.msra.mxu0 0
  %2757 = vmatprep.subr.bf16.mxu0 0
  %2758 = vmatpush1.bf16.msra.mxu0 0
  %2759 = vmatprep.subr.bf16.mxu0 0
  %2760 = vmatpush1.bf16.msra.mxu0 0
  %2761 = vmatprep.subr.bf16.mxu0 0
  %2762 = vmatpush1.bf16.msra.mxu0 0
  %2763 = vmatprep.subr.bf16.mxu0 0
  %2764 = vmatpush1.bf16.msra.mxu0 0
  %2765 = vmatprep.subr.bf16.mxu0 0
  %2766 = vmatpush1.bf16.msra.mxu0 0
  %2767 = vmatprep.mubr.bf16.mxu0 0
  %2768 = vmatmul.mubr.bf16.gmra.mrb[0].mxu0 %v2688
  %v2769 = vpop.f32.mrb[0].mxu0
  %v2770 = vadd.f32 0.0, %v2769
  %v2771 = vpop.f32.mrb[0].mxu0
  %v2772 = vadd.f32 0.0, %v2771
  %v2773 = vpop.f32.mrb[0].mxu0
  %v2774 = vpop.f32.mrb[0].mxu0
  %2775 = vdwg.mxu0
  %v2776 = vadd.f32 %v2690, %v2729
  %v2777 = vadd.f32 %v2691, %v2731
  %v2778 = vadd.f32 %v2692, %v2770
  %v2779 = vadd.f32 %v2693, %v2772
  %v2780 = vxor.u32 %v2776, 2147483648
  %v2781 = vmul.f32 %v2780, 1.442695
  %v2782 = vpow.pop %v2781
  %v2783 = vadd.f32 %v2782, 1.0
  %v2784 = vrcp.pop %v2783
  %v2785 = vmul.f32 1.0, %v2784
  %v2786 = vxor.u32 %v2777, 2147483648
  %v2787 = vmul.f32 %v2786, 1.442695
  %v2788 = vpow.pop %v2787
  %v2789 = vadd.f32 %v2788, 1.0
  %v2790 = vrcp.pop %v2789
  %v2791 = vmul.f32 1.0, %v2790
  %v2792 = vtanh.pop %v2778
  %v2793 = vxor.u32 %v2779, 2147483648
  %v2794 = vmul.f32 %v2793, 1.442695
  %v2795 = vpow.pop %v2794
  %v2796 = vadd.f32 %v2795, 1.0
  %v2797 = vrcp.pop %v2796
  %v2798 = vmul.f32 1.0, %v2797
  %v2799 = vmul.f32 %v2791, %v2685
  %v2800 = vmul.f32 %v2785, %v2792
  %v2801 = vadd.f32 %v2799, %v2800
  %v2802 = vtanh.pop %v2801
  %v2803 = vmul.f32 %v2798, %v2802
  %v2804 = vpack.c.bf16 %v2803, %v2803
  %2805 = vst [vmem:[%s1247] sm:$0xf] %v2804
  %v2806 = vld [vmem:[%s1249] sm:$0xff]
  %v2807 = vld [vmem:[%s1249 + $0x8] sm:$0xff]
  %v2808 = vld [vmem:[%s1249 + $0x10] sm:$0xff]
  %v2809 = vld [vmem:[%s1249 + $0x18] sm:$0xff]
  %2810 = vmatprep.subr.bf16.mxu0 %v2167
  %2811 = vmatpush1.bf16.msra.mxu0 %v2166
  %2812 = vmatprep.subr.bf16.mxu0 %v2171
  %2813 = vmatpush1.bf16.msra.mxu0 %v2170
  %2814 = vmatprep.subr.bf16.mxu0 %v2175
  %2815 = vmatpush1.bf16.msra.mxu0 %v2174
  %2816 = vmatprep.subr.bf16.mxu0 %v2179
  %2817 = vmatpush1.bf16.msra.mxu0 %v2178
  %2818 = vmatprep.subr.bf16.mxu0 %v2183
  %2819 = vmatpush1.bf16.msra.mxu0 %v2182
  %2820 = vmatprep.subr.bf16.mxu0 %v2187
  %2821 = vmatpush1.bf16.msra.mxu0 %v2186
  %2822 = vmatprep.subr.bf16.mxu0 %v2191
  %2823 = vmatpush1.bf16.msra.mxu0 %v2190
  %2824 = vmatprep.subr.bf16.mxu0 %v2195
  %2825 = vmatpush1.bf16.msra.mxu0 %v2194
  %2826 = vmatprep.subr.bf16.mxu0 0
  %2827 = vmatpush1.bf16.msra.mxu0 0
  %2828 = vmatprep.subr.bf16.mxu0 0
  %2829 = vmatpush1.bf16.msra.mxu0 0
  %2830 = vmatprep.subr.bf16.mxu0 0
  %2831 = vmatpush1.bf16.msra.mxu0 0
  %2832 = vmatprep.subr.bf16.mxu0 0
  %2833 = vmatpush1.bf16.msra.mxu0 0
  %2834 = vmatprep.subr.bf16.mxu0 0
  %2835 = vmatpush1.bf16.msra.mxu0 0
  %2836 = vmatprep.subr.bf16.mxu0 0
  %2837 = vmatpush1.bf16.msra.mxu0 0
  %2838 = vmatprep.subr.bf16.mxu0 0
  %2839 = vmatpush1.bf16.msra.mxu0 0
  %2840 = vmatprep.subr.bf16.mxu0 0
  %2841 = vmatpush1.bf16.msra.mxu0 0
  %2842 = vmatprep.mubr.bf16.mxu0 0
  %2843 = vmatmul.mubr.bf16.gmra.mrb[0].mxu0 %v2804
  %v2844 = vpop.f32.mrb[0].mxu0
  %v2845 = vadd.f32 0.0, %v2844
  %v2846 = vpop.f32.mrb[0].mxu0
  %v2847 = vadd.f32 0.0, %v2846
  %v2848 = vpop.f32.mrb[0].mxu0
  %v2849 = vpop.f32.mrb[0].mxu0
  %2850 = vdwg.mxu0
  %2851 = vmatprep.subr.bf16.mxu0 %v2169
  %2852 = vmatpush1.bf16.msra.mxu0 %v2168
  %2853 = vmatprep.subr.bf16.mxu0 %v2173
  %2854 = vmatpush1.bf16.msra.mxu0 %v2172
  %2855 = vmatprep.subr.bf16.mxu0 %v2177
  %2856 = vmatpush1.bf16.msra.mxu0 %v2176
  %2857 = vmatprep.subr.bf16.mxu0 %v2181
  %2858 = vmatpush1.bf16.msra.mxu0 %v2180
  %2859 = vmatprep.subr.bf16.mxu0 %v2185
  %2860 = vmatpush1.bf16.msra.mxu0 %v2184
  %2861 = vmatprep.subr.bf16.mxu0 %v2189
  %2862 = vmatpush1.bf16.msra.mxu0 %v2188
  %2863 = vmatprep.subr.bf16.mxu0 %v2193
  %2864 = vmatpush1.bf16.msra.mxu0 %v2192
  %2865 = vmatprep.subr.bf16.mxu0 %v2197
  %2866 = vmatpush1.bf16.msra.mxu0 %v2196
  %2867 = vmatprep.subr.bf16.mxu0 0
  %2868 = vmatpush1.bf16.msra.mxu0 0
  %2869 = vmatprep.subr.bf16.mxu0 0
  %2870 = vmatpush1.bf16.msra.mxu0 0
  %2871 = vmatprep.subr.bf16.mxu0 0
  %2872 = vmatpush1.bf16.msra.mxu0 0
  %2873 = vmatprep.subr.bf16.mxu0 0
  %2874 = vmatpush1.bf16.msra.mxu0 0
  %2875 = vmatprep.subr.bf16.mxu0 0
  %2876 = vmatpush1.bf16.msra.mxu0 0
  %2877 = vmatprep.subr.bf16.mxu0 0
  %2878 = vmatpush1.bf16.msra.mxu0 0
  %2879 = vmatprep.subr.bf16.mxu0 0
  %2880 = vmatpush1.bf16.msra.mxu0 0
  %2881 = vmatprep.subr.bf16.mxu0 0
  %2882 = vmatpush1.bf16.msra.mxu0 0
  %2883 = vmatprep.mubr.bf16.mxu0 0
  %2884 = vmatmul.mubr.bf16.gmra.mrb[0].mxu0 %v2804
  %v2885 = vpop.f32.mrb[0].mxu0
  %v2886 = vadd.f32 0.0, %v2885
  %v2887 = vpop.f32.mrb[0].mxu0
  %v2888 = vadd.f32 0.0, %v2887
  %v2889 = vpop.f32.mrb[0].mxu0
  %v2890 = vpop.f32.mrb[0].mxu0
  %2891 = vdwg.mxu0
  %v2892 = vadd.f32 %v2806, %v2845
  %v2893 = vadd.f32 %v2807, %v2847
  %v2894 = vadd.f32 %v2808, %v2886
  %v2895 = vadd.f32 %v2809, %v2888
  %v2896 = vxor.u32 %v2892, 2147483648
  %v2897 = vmul.f32 %v2896, 1.442695
  %v2898 = vpow.pop %v2897
  %v2899 = vadd.f32 %v2898, 1.0
  %v2900 = vrcp.pop %v2899
  %v2901 = vmul.f32 1.0, %v2900
  %v2902 = vxor.u32 %v2893, 2147483648
  %v2903 = vmul.f32 %v2902, 1.442695
  %v2904 = vpow.pop %v2903
  %v2905 = vadd.f32 %v2904, 1.0
  %v2906 = vrcp.pop %v2905
  %v2907 = vmul.f32 1.0, %v2906
  %v2908 = vtanh.pop %v2894
  %v2909 = vxor.u32 %v2895, 2147483648
  %v2910 = vmul.f32 %v2909, 1.442695
  %v2911 = vpow.pop %v2910
  %v2912 = vadd.f32 %v2911, 1.0
  %v2913 = vrcp.pop %v2912
  %v2914 = vmul.f32 1.0, %v2913
  %v2915 = vmul.f32 %v2907, %v2801
  %v2916 = vmul.f32 %v2901, %v2908
  %v2917 = vadd.f32 %v2915, %v2916
  %v2918 = vtanh.pop %v2917
  %v2919 = vmul.f32 %v2914, %v2918
  %v2920 = vpack.c.bf16 %v2919, %v2919
  %2921 = vst [vmem:[%s1365] sm:$0xf] %v2920
  %v2922 = vld [vmem:[%s1367] sm:$0xff]
  %v2923 = vld [vmem:[%s1367 + $0x8] sm:$0xff]
  %v2924 = vld [vmem:[%s1367 + $0x10] sm:$0xff]
  %v2925 = vld [vmem:[%s1367 + $0x18] sm:$0xff]
  %2926 = vmatprep.subr.bf16.mxu0 %v2167
  %2927 = vmatpush1.bf16.msra.mxu0 %v2166
  %2928 = vmatprep.subr.bf16.mxu0 %v2171
  %2929 = vmatpush1.bf16.msra.mxu0 %v2170
  %2930 = vmatprep.subr.bf16.mxu0 %v2175
  %2931 = vmatpush1.bf16.msra.mxu0 %v2174
  %2932 = vmatprep.subr.bf16.mxu0 %v2179
  %2933 = vmatpush1.bf16.msra.mxu0 %v2178
  %2934 = vmatprep.subr.bf16.mxu0 %v2183
  %2935 = vmatpush1.bf16.msra.mxu0 %v2182
  %2936 = vmatprep.subr.bf16.mxu0 %v2187
  %2937 = vmatpush1.bf16.msra.mxu0 %v2186
  %2938 = vmatprep.subr.bf16.mxu0 %v2191
  %2939 = vmatpush1.bf16.msra.mxu0 %v2190
  %2940 = vmatprep.subr.bf16.mxu0 %v2195
  %2941 = vmatpush1.bf16.msra.mxu0 %v2194
  %2942 = vmatprep.subr.bf16.mxu0 0
  %2943 = vmatpush1.bf16.msra.mxu0 0
  %2944 = vmatprep.subr.bf16.mxu0 0
  %2945 = vmatpush1.bf16.msra.mxu0 0
  %2946 = vmatprep.subr.bf16.mxu0 0
  %2947 = vmatpush1.bf16.msra.mxu0 0
  %2948 = vmatprep.subr.bf16.mxu0 0
  %2949 = vmatpush1.bf16.msra.mxu0 0
  %2950 = vmatprep.subr.bf16.mxu0 0
  %2951 = vmatpush1.bf16.msra.mxu0 0
  %2952 = vmatprep.subr.bf16.mxu0 0
  %2953 = vmatpush1.bf16.msra.mxu0 0
  %2954 = vmatprep.subr.bf16.mxu0 0
  %2955 = vmatpush1.bf16.msra.mxu0 0
  %2956 = vmatprep.subr.bf16.mxu0 0
  %2957 = vmatpush1.bf16.msra.mxu0 0
  %2958 = vmatprep.mubr.bf16.mxu0 0
  %2959 = vmatmul.mubr.bf16.gmra.mrb[0].mxu0 %v2920
  %v2960 = vpop.f32.mrb[0].mxu0
  %v2961 = vadd.f32 0.0, %v2960
  %v2962 = vpop.f32.mrb[0].mxu0
  %v2963 = vadd.f32 0.0, %v2962
  %v2964 = vpop.f32.mrb[0].mxu0
  %v2965 = vpop.f32.mrb[0].mxu0
  %2966 = vdwg.mxu0
  %2967 = vmatprep.subr.bf16.mxu0 %v2169
  %2968 = vmatpush1.bf16.msra.mxu0 %v2168
  %2969 = vmatprep.subr.bf16.mxu0 %v2173
  %2970 = vmatpush1.bf16.msra.mxu0 %v2172
  %2971 = vmatprep.subr.bf16.mxu0 %v2177
  %2972 = vmatpush1.bf16.msra.mxu0 %v2176
  %2973 = vmatprep.subr.bf16.mxu0 %v2181
  %2974 = vmatpush1.bf16.msra.mxu0 %v2180
  %2975 = vmatprep.subr.bf16.mxu0 %v2185
  %2976 = vmatpush1.bf16.msra.mxu0 %v2184
  %2977 = vmatprep.subr.bf16.mxu0 %v2189
  %2978 = vmatpush1.bf16.msra.mxu0 %v2188
  %2979 = vmatprep.subr.bf16.mxu0 %v2193
  %2980 = vmatpush1.bf16.msra.mxu0 %v2192
  %2981 = vmatprep.subr.bf16.mxu0 %v2197
  %2982 = vmatpush1.bf16.msra.mxu0 %v2196
  %2983 = vmatprep.subr.bf16.mxu0 0
  %2984 = vmatpush1.bf16.msra.mxu0 0
  %2985 = vmatprep.subr.bf16.mxu0 0
  %2986 = vmatpush1.bf16.msra.mxu0 0
  %2987 = vmatprep.subr.bf16.mxu0 0
  %2988 = vmatpush1.bf16.msra.mxu0 0
  %2989 = vmatprep.subr.bf16.mxu0 0
  %2990 = vmatpush1.bf16.msra.mxu0 0
  %2991 = vmatprep.subr.bf16.mxu0 0
  %2992 = vmatpush1.bf16.msra.mxu0 0
  %2993 = vmatprep.subr.bf16.mxu0 0
  %2994 = vmatpush1.bf16.msra.mxu0 0
  %2995 = vmatprep.subr.bf16.mxu0 0
  %2996 = vmatpush1.bf16.msra.mxu0 0
  %2997 = vmatprep.subr.bf16.mxu0 0
  %2998 = vmatpush1.bf16.msra.mxu0 0
  %2999 = vmatprep.mubr.bf16.mxu0 0
  %3000 = vmatmul.mubr.bf16.gmra.mrb[0].mxu0 %v2920
  %v3001 = vpop.f32.mrb[0].mxu0
  %v3002 = vadd.f32 0.0, %v3001
  %v3003 = vpop.f32.mrb[0].mxu0
  %v3004 = vadd.f32 0.0, %v3003
  %v3005 = vpop.f32.mrb[0].mxu0
  %v3006 = vpop.f32.mrb[0].mxu0
  %3007 = vdwg.mxu0
  %v3008 = vadd.f32 %v2922, %v2961
  %v3009 = vadd.f32 %v2923, %v2963
  %v3010 = vadd.f32 %v2924, %v3002
  %v3011 = vadd.f32 %v2925, %v3004
  %v3012 = vxor.u32 %v3008, 2147483648
  %v3013 = vmul.f32 %v3012, 1.442695
  %v3014 = vpow.pop %v3013
  %v3015 = vadd.f32 %v3014, 1.0
  %v3016 = vrcp.pop %v3015
  %v3017 = vmul.f32 1.0, %v3016
  %v3018 = vxor.u32 %v3009, 2147483648
  %v3019 = vmul.f32 %v3018, 1.442695
  %v3020 = vpow.pop %v3019
  %v3021 = vadd.f32 %v3020, 1.0
  %v3022 = vrcp.pop %v3021
  %v3023 = vmul.f32 1.0, %v3022
  %v3024 = vtanh.pop %v3010
  %v3025 = vxor.u32 %v3011, 2147483648
  %v3026 = vmul.f32 %v3025, 1.442695
  %v3027 = vpow.pop %v3026
  %v3028 = vadd.f32 %v3027, 1.0
  %v3029 = vrcp.pop %v3028
  %v3030 = vmul.f32 1.0, %v3029
  %v3031 = vmul.f32 %v3023, %v2917
  %v3032 = vmul.f32 %v3017, %v3024
  %v3033 = vadd.f32 %v3031, %v3032
  %v3034 = vtanh.pop %v3033
  %v3035 = vmul.f32 %v3030, %v3034
  %v3036 = vpack.c.bf16 %v3035, %v3035
  %3037 = vst [vmem:[%s1483] sm:$0xf] %v3036
  %v3038 = vld [vmem:[%s1485] sm:$0xff]
  %v3039 = vld [vmem:[%s1485 + $0x8] sm:$0xff]
  %v3040 = vld [vmem:[%s1485 + $0x10] sm:$0xff]
  %v3041 = vld [vmem:[%s1485 + $0x18] sm:$0xff]
  %3042 = vmatprep.subr.bf16.mxu0 %v2167
  %3043 = vmatpush1.bf16.msra.mxu0 %v2166
  %3044 = vmatprep.subr.bf16.mxu0 %v2171
  %3045 = vmatpush1.bf16.msra.mxu0 %v2170
  %3046 = vmatprep.subr.bf16.mxu0 %v2175
  %3047 = vmatpush1.bf16.msra.mxu0 %v2174
  %3048 = vmatprep.subr.bf16.mxu0 %v2179
  %3049 = vmatpush1.bf16.msra.mxu0 %v2178
  %3050 = vmatprep.subr.bf16.mxu0 %v2183
  %3051 = vmatpush1.bf16.msra.mxu0 %v2182
  %3052 = vmatprep.subr.bf16.mxu0 %v2187
  %3053 = vmatpush1.bf16.msra.mxu0 %v2186
  %3054 = vmatprep.subr.bf16.mxu0 %v2191
  %3055 = vmatpush1.bf16.msra.mxu0 %v2190
  %3056 = vmatprep.subr.bf16.mxu0 %v2195
  %3057 = vmatpush1.bf16.msra.mxu0 %v2194
  %3058 = vmatprep.subr.bf16.mxu0 0
  %3059 = vmatpush1.bf16.msra.mxu0 0
  %3060 = vmatprep.subr.bf16.mxu0 0
  %3061 = vmatpush1.bf16.msra.mxu0 0
  %3062 = vmatprep.subr.bf16.mxu0 0
  %3063 = vmatpush1.bf16.msra.mxu0 0
  %3064 = vmatprep.subr.bf16.mxu0 0
  %3065 = vmatpush1.bf16.msra.mxu0 0
  %3066 = vmatprep.subr.bf16.mxu0 0
  %3067 = vmatpush1.bf16.msra.mxu0 0
  %3068 = vmatprep.subr.bf16.mxu0 0
  %3069 = vmatpush1.bf16.msra.mxu0 0
  %3070 = vmatprep.subr.bf16.mxu0 0
  %3071 = vmatpush1.bf16.msra.mxu0 0
  %3072 = vmatprep.subr.bf16.mxu0 0
  %3073 = vmatpush1.bf16.msra.mxu0 0
  %3074 = vmatprep.mubr.bf16.mxu0 0
  %3075 = vmatmul.mubr.bf16.gmra.mrb[0].mxu0 %v3036
  %v3076 = vpop.f32.mrb[0].mxu0
  %v3077 = vadd.f32 0.0, %v3076
  %v3078 = vpop.f32.mrb[0].mxu0
  %v3079 = vadd.f32 0.0, %v3078
  %v3080 = vpop.f32.mrb[0].mxu0
  %v3081 = vpop.f32.mrb[0].mxu0
  %3082 = vdwg.mxu0
  %3083 = vmatprep.subr.bf16.mxu0 %v2169
  %3084 = vmatpush1.bf16.msra.mxu0 %v2168
  %3085 = vmatprep.subr.bf16.mxu0 %v2173
  %3086 = vmatpush1.bf16.msra.mxu0 %v2172
  %3087 = vmatprep.subr.bf16.mxu0 %v2177
  %3088 = vmatpush1.bf16.msra.mxu0 %v2176
  %3089 = vmatprep.subr.bf16.mxu0 %v2181
  %3090 = vmatpush1.bf16.msra.mxu0 %v2180
  %3091 = vmatprep.subr.bf16.mxu0 %v2185
  %3092 = vmatpush1.bf16.msra.mxu0 %v2184
  %3093 = vmatprep.subr.bf16.mxu0 %v2189
  %3094 = vmatpush1.bf16.msra.mxu0 %v2188
  %3095 = vmatprep.subr.bf16.mxu0 %v2193
  %3096 = vmatpush1.bf16.msra.mxu0 %v2192
  %3097 = vmatprep.subr.bf16.mxu0 %v2197
  %3098 = vmatpush1.bf16.msra.mxu0 %v2196
  %3099 = vmatprep.subr.bf16.mxu0 0
  %3100 = vmatpush1.bf16.msra.mxu0 0
  %3101 = vmatprep.subr.bf16.mxu0 0
  %3102 = vmatpush1.bf16.msra.mxu0 0
  %3103 = vmatprep.subr.bf16.mxu0 0
  %3104 = vmatpush1.bf16.msra.mxu0 0
  %3105 = vmatprep.subr.bf16.mxu0 0
  %3106 = vmatpush1.bf16.msra.mxu0 0
  %3107 = vmatprep.subr.bf16.mxu0 0
  %3108 = vmatpush1.bf16.msra.mxu0 0
  %3109 = vmatprep.subr.bf16.mxu0 0
  %3110 = vmatpush1.bf16.msra.mxu0 0
  %3111 = vmatprep.subr.bf16.mxu0 0
  %3112 = vmatpush1.bf16.msra.mxu0 0
  %3113 = vmatprep.subr.bf16.mxu0 0
  %3114 = vmatpush1.bf16.msra.mxu0 0
  %3115 = vmatprep.mubr.bf16.mxu0 0
  %3116 = vmatmul.mubr.bf16.gmra.mrb[0].mxu0 %v3036
  %v3117 = vpop.f32.mrb[0].mxu0
  %v3118 = vadd.f32 0.0, %v3117
  %v3119 = vpop.f32.mrb[0].mxu0
  %v3120 = vadd.f32 0.0, %v3119
  %v3121 = vpop.f32.mrb[0].mxu0
  %v3122 = vpop.f32.mrb[0].mxu0
  %3123 = vdwg.mxu0
  %v3124 = vadd.f32 %v3038, %v3077
  %v3125 = vadd.f32 %v3039, %v3079
  %v3126 = vadd.f32 %v3040, %v3118
  %v3127 = vadd.f32 %v3041, %v3120
  %v3128 = vxor.u32 %v3124, 2147483648
  %v3129 = vmul.f32 %v3128, 1.442695
  %v3130 = vpow.pop %v3129
  %v3131 = vadd.f32 %v3130, 1.0
  %v3132 = vrcp.pop %v3131
  %v3133 = vmul.f32 1.0, %v3132
  %v3134 = vxor.u32 %v3125, 2147483648
  %v3135 = vmul.f32 %v3134, 1.442695
  %v3136 = vpow.pop %v3135
  %v3137 = vadd.f32 %v3136, 1.0
  %v3138 = vrcp.pop %v3137
  %v3139 = vmul.f32 1.0, %v3138
  %v3140 = vtanh.pop %v3126
  %v3141 = vxor.u32 %v3127, 2147483648
  %v3142 = vmul.f32 %v3141, 1.442695
  %v3143 = vpow.pop %v3142
  %v3144 = vadd.f32 %v3143, 1.0
  %v3145 = vrcp.pop %v3144
  %v3146 = vmul.f32 1.0, %v3145
  %v3147 = vmul.f32 %v3139, %v3033
  %v3148 = vmul.f32 %v3133, %v3140
  %v3149 = vadd.f32 %v3147, %v3148
  %v3150 = vtanh.pop %v3149
  %v3151 = vmul.f32 %v3146, %v3150
  %v3152 = vpack.c.bf16 %v3151, %v3151
  %3153 = vst [vmem:[%s1601] sm:$0xf] %v3152
  %s3154 = scalar_lea.vmem %s12, 8
  %3155 = vst [vmem:[%s3154] sm:$0xff] %v3151
  %s3156 = scalar_lea.vmem %s13, 8
  %3157 = vst [vmem:[%s3156] sm:$0xff] %v3149
  %v3158 = vld [vmem:[#allocation2] sm:$0xf]
  %v3159 = vld [vmem:[#allocation2 + $0x4] sm:$0xf]
  %v3160 = vld [vmem:[#allocation2 + $0x8] sm:$0xf]
  %v3161 = vld [vmem:[#allocation2 + $0xc] sm:$0xf]
  %v3162 = vld [vmem:[#allocation2 + $0x10] sm:$0xf]
  %v3163 = vld [vmem:[#allocation2 + $0x14] sm:$0xf]
  %v3164 = vld [vmem:[#allocation2 + $0x18] sm:$0xf]
  %v3165 = vld [vmem:[#allocation2 + $0x1c] sm:$0xf]
  %v3166 = vld [vmem:[%s9] sm:$0xf]
  %v3167 = vld [vmem:[%s9 + $0x4] sm:$0xf]
  %v3168 = vld [vmem:[%s9 + $0x8] sm:$0xf]
  %v3169 = vld [vmem:[%s9 + $0xc] sm:$0xf]
  %v3170 = vld [vmem:[%s9 + $0x10] sm:$0xf]
  %v3171 = vld [vmem:[%s9 + $0x14] sm:$0xf]
  %v3172 = vld [vmem:[%s9 + $0x18] sm:$0xf]
  %v3173 = vld [vmem:[%s9 + $0x1c] sm:$0xf]
  %v3174 = vld [vmem:[%s9 + $0x20] sm:$0xf]
  %v3175 = vld [vmem:[%s9 + $0x24] sm:$0xf]
  %v3176 = vld [vmem:[%s9 + $0x28] sm:$0xf]
  %v3177 = vld [vmem:[%s9 + $0x2c] sm:$0xf]
  %v3178 = vld [vmem:[%s9 + $0x30] sm:$0xf]
  %v3179 = vld [vmem:[%s9 + $0x34] sm:$0xf]
  %v3180 = vld [vmem:[%s9 + $0x38] sm:$0xf]
  %v3181 = vld [vmem:[%s9 + $0x3c] sm:$0xf]
  %v3182 = vld [vmem:[%s10] sm:$0x1]
  %v3184 = vlaneseq
  %v3185 = vshrl.u32 %v3184, 7
  %v3186 = vsub.s32 0, %v3185
  %v3187 = vrot.slane %v3182, %v3186
  %v3197 = vunpack.c.l.b16 %v3158
  %v3198 = vunpack.c.l.b16 %v3159
  %v3199 = vunpack.c.l.b16 %v3160
  %v3200 = vunpack.c.l.b16 %v3161
  %v3201 = vunpack.c.l.b16 %v3162
  %v3202 = vunpack.c.l.b16 %v3163
  %v3203 = vunpack.c.l.b16 %v3164
  %v3204 = vunpack.c.l.b16 %v3165
  %v3205 = vpack.c.b16 %v3198, %v3197
  %v3206 = vpack.c.b16 %v3200, %v3199
  %v3207 = vpack.c.b16 %v3202, %v3201
  %v3208 = vpack.c.b16 %v3204, %v3203
  %v3229 = vunpack.c.l.b16 %v3166
  %v3230 = vunpack.c.l.b16 %v3167
  %v3231 = vunpack.c.l.b16 %v3168
  %v3232 = vunpack.c.l.b16 %v3169
  %v3233 = vunpack.c.l.b16 %v3170
  %v3234 = vunpack.c.l.b16 %v3171
  %v3235 = vunpack.c.l.b16 %v3172
  %v3236 = vunpack.c.l.b16 %v3173
  %v3237 = vunpack.c.l.b16 %v3174
  %v3238 = vunpack.c.l.b16 %v3175
  %v3239 = vunpack.c.l.b16 %v3176
  %v3240 = vunpack.c.l.b16 %v3177
  %v3241 = vunpack.c.l.b16 %v3178
  %v3242 = vunpack.c.l.b16 %v3179
  %v3243 = vunpack.c.l.b16 %v3180
  %v3244 = vunpack.c.l.b16 %v3181
  %v3245 = vpack.c.b16 %v3230, %v3229
  %v3246 = vpack.c.b16 %v3232, %v3231
  %v3247 = vpack.c.b16 %v3234, %v3233
  %v3248 = vpack.c.b16 %v3236, %v3235
  %v3249 = vpack.c.b16 %v3238, %v3237
  %v3250 = vpack.c.b16 %v3240, %v3239
  %v3251 = vpack.c.b16 %v3242, %v3241
  %v3252 = vpack.c.b16 %v3244, %v3243
  %3261 = vmatprep.subr.bf16.mxu0 0
  %3262 = vmatpush1.bf16.msra.mxu0 %v3245
  %3263 = vmatprep.subr.bf16.mxu0 0
  %3264 = vmatpush1.bf16.msra.mxu0 %v3246
  %3265 = vmatprep.subr.bf16.mxu0 0
  %3266 = vmatpush1.bf16.msra.mxu0 %v3247
  %3267 = vmatprep.subr.bf16.mxu0 0
  %3268 = vmatpush1.bf16.msra.mxu0 %v3248
  %3269 = vmatprep.subr.bf16.mxu0 0
  %3270 = vmatpush1.bf16.msra.mxu0 %v3249
  %3271 = vmatprep.subr.bf16.mxu0 0
  %3272 = vmatpush1.bf16.msra.mxu0 %v3250
  %3273 = vmatprep.subr.bf16.mxu0 0
  %3274 = vmatpush1.bf16.msra.mxu0 %v3251
  %3275 = vmatprep.subr.bf16.mxu0 0
  %3276 = vmatpush1.bf16.msra.mxu0 %v3252
  %3277 = vmatprep.subr.bf16.mxu0 0
  %3278 = vmatpush1.bf16.msra.mxu0 0
  %3279 = vmatprep.subr.bf16.mxu0 0
  %3280 = vmatpush1.bf16.msra.mxu0 0
  %3281 = vmatprep.subr.bf16.mxu0 0
  %3282 = vmatpush1.bf16.msra.mxu0 0
  %3283 = vmatprep.subr.bf16.mxu0 0
  %3284 = vmatpush1.bf16.msra.mxu0 0
  %3285 = vmatprep.subr.bf16.mxu0 0
  %3286 = vmatpush1.bf16.msra.mxu0 0
  %3287 = vmatprep.subr.bf16.mxu0 0
  %3288 = vmatpush1.bf16.msra.mxu0 0
  %3289 = vmatprep.subr.bf16.mxu0 0
  %3290 = vmatpush1.bf16.msra.mxu0 0
  %3291 = vmatprep.subr.bf16.mxu0 0
  %3292 = vmatpush1.bf16.msra.mxu0 0
  %3293 = vmatprep.mubr.bf16.mxu0 0
  %3294 = vmatmul.mubr.bf16.gmra.mrb[0].mxu0 %v3205
  %v3295 = vpop.f32.mrb[0].mxu0
  %v3296 = vadd.f32 %v3187, %v3295
  %v3297 = vpop.f32.mrb[0].mxu0
  %v3298 = vpop.f32.mrb[0].mxu0
  %v3299 = vadd.f32 %v3187, %v3298
  %v3300 = vpop.f32.mrb[0].mxu0
  %3301 = vmatprep.mubr.bf16.mxu0 0
  %3302 = vmatmul.mubr.bf16.gmra.mrb[0].mxu0 %v3206
  %v3303 = vpop.f32.mrb[0].mxu0
  %v3304 = vadd.f32 %v3187, %v3303
  %v3305 = vpop.f32.mrb[0].mxu0
  %v3306 = vpop.f32.mrb[0].mxu0
  %v3307 = vadd.f32 %v3187, %v3306
  %v3308 = vpop.f32.mrb[0].mxu0
  %3309 = vmatprep.mubr.bf16.mxu0 0
  %3310 = vmatmul.mubr.bf16.gmra.mrb[0].mxu0 %v3207
  %v3311 = vpop.f32.mrb[0].mxu0
  %v3312 = vadd.f32 %v3187, %v3311
  %v3313 = vpop.f32.mrb[0].mxu0
  %v3314 = vpop.f32.mrb[0].mxu0
  %v3315 = vadd.f32 %v3187, %v3314
  %v3316 = vpop.f32.mrb[0].mxu0
  %3317 = vmatprep.mubr.bf16.mxu0 0
  %3318 = vmatmul.mubr.bf16.gmra.mrb[0].mxu0 %v3208
  %v3319 = vpop.f32.mrb[0].mxu0
  %v3320 = vadd.f32 %v3187, %v3319
  %v3321 = vpop.f32.mrb[0].mxu0
  %v3322 = vpop.f32.mrb[0].mxu0
  %v3323 = vadd.f32 %v3187, %v3322
  %v3324 = vpop.f32.mrb[0].mxu0
  %3325 = vdwg.mxu0
  %3326 = vst [vmem:[%s11] sm:$0xff] %v3296
  %3327 = vst [vmem:[%s11 + $0x8] sm:$0xff] %v3299
  %3328 = vst [vmem:[%s11 + $0x10] sm:$0xff] %v3304
  %3329 = vst [vmem:[%s11 + $0x18] sm:$0xff] %v3307
  %3330 = vst [vmem:[%s11 + $0x20] sm:$0xff] %v3312
  %3331 = vst [vmem:[%s11 + $0x28] sm:$0xff] %v3315
  %3332 = vst [vmem:[%s11 + $0x30] sm:$0xff] %v3320
  %3333 = vst [vmem:[%s11 + $0x38] sm:$0xff] %v3323
  // Predicated region
  $region46: #{rnn_forward.1} parent=0 // pred_check
    _
  $region47: #{rnn_forward.1} parent=0 // pred_check_branch
    %3335 = sbr.rel (0) target = $region49
  $region48: #{rnn_forward.1} parent=0 // pred_region
    _
  $region49: #{rnn_forward.1} parent=0 // pred_fallthru
    _
  // Predicated region
  $region50: #{rnn_forward.1} parent=0 // pred_check
    _
  $region51: #{rnn_forward.1} parent=0 // pred_check_branch
    %3337 = sbr.rel (0) target = $region53
  $region52: #{rnn_forward.1} parent=0 // pred_region
    _
  $region53: #{rnn_forward.1} parent=0 // pred_fallthru
    _
  // Predicated region
  $region54: #{rnn_forward.1} parent=0 // pred_check
    _
  $region55: #{rnn_forward.1} parent=0 // pred_check_branch
    %3339 = sbr.rel (0) target = $region57
  $region56: #{rnn_forward.1} parent=0 // pred_region
    _
  $region57: #{rnn_forward.1} parent=0 // pred_fallthru
    _
  // Predicated region
  $region58: #{rnn_forward.1} parent=0 // pred_check
    _
  $region59: #{rnn_forward.1} parent=0 // pred_check_branch
    %3341 = sbr.rel (0) target = $region61
  $region60: #{rnn_forward.1} parent=0 // pred_region
    _
  $region61: #{rnn_forward.1} parent=0 // pred_fallthru
    _
  // Predicated region
  $region62: #{rnn_forward.1} parent=0 // pred_check
    _
  $region63: #{rnn_forward.1} parent=0 // pred_check_branch
    %3343 = sbr.rel (0) target = $region65
  $region64: #{rnn_forward.1} parent=0 // pred_region
    _
  $region65: #{rnn_forward.1} parent=0 // pred_fallthru
    _
  // Predicated region
  $region66: #{rnn_forward.1} parent=0 // pred_check
    _
  $region67: #{rnn_forward.1} parent=0 // pred_check_branch
    %3345 = sbr.rel (0) target = $region69
  $region68: #{rnn_forward.1} parent=0 // pred_region
    _
  $region69: #{rnn_forward.1} parent=0 // pred_fallthru
    _

</llo_original>
